<compile_context>
chip_gen: v7x
topology: tpu7x:2x2x1
jax: 0.10.0
libtpu: 0.0.40
codegen_flags: <defaults>
</compile_context>

<pallas_src>
import functools
import math

import jax
import jax.numpy as jnp
from jax.experimental import pallas as pl
from jax.experimental.pallas import tpu as pltpu

LANE = 128


def _rup(x, m):
    return ((x + m - 1) // m) * m


# ---------------------------------------------------------------------------
# The fused kernel.
#   grid = (G, n_layer); G row-groups (batches split G ways), layer axis is the
#   inner "arbitrary" axis; the (Rg, Hp) activation is carried in VMEM scratch.
# ---------------------------------------------------------------------------

def _meta_dt_kernel(states_ref, ctx_ref, act_ref, rtg_ref, time_ref,
                    wpe_ref, mask_ref,
                    w_enc, b_enc, w_st_enc, w_st_ctx, b_st,
                    w_act, b_act, w_ret, b_ret, eln_g, eln_b,
                    ln1g, ln1b, wqk, bqk, wvf, bvp,
                    ln2g, ln2b, wfc, bfc, wout, bout,
                    lnf_g, lnf_b, w_rs, b_rs, w_a, b_a,
                    out_rs, out_a, x_scr,
                    *, H, n_head, hdp, n_layer):
    l = pl.program_id(1)
    Rg, Hp = x_scr.shape
    BgL = Rg // 3

    lane = jax.lax.broadcasted_iota(jnp.int32, (1, Hp), 1)
    hmask = (lane < H).astype(jnp.float32)
    inv_h = 1.0 / H

    def ln(v, g, b):
        # LayerNorm over the true H lanes; padded gamma/beta are zero so padded
        # lanes stay exactly zero through the whole network.
        vm = v * hmask
        mu = jnp.sum(vm, axis=-1, keepdims=True) * inv_h
        d = (vm - mu) * hmask
        var = jnp.sum(d * d, axis=-1, keepdims=True) * inv_h
        return d * jax.lax.rsqrt(var + 1e-5) * g[...] + b[...]

    f32dot = functools.partial(jnp.dot, preferred_element_type=jnp.float32)

    # ---- phase 0: token embeddings (first layer step of each row group) ----
    @pl.when(l == 0)
    def _():
        t = time_ref[...]                                          # (BgL, Hp)
        enc = f32dot(states_ref[...], w_enc[...]) + b_enc[...]     # (BgL, CD)
        st = (f32dot(enc, w_st_enc[...]) + f32dot(ctx_ref[...], w_st_ctx[...])
              + b_st[...] + t)
        ac = f32dot(act_ref[...], w_act[...]) + b_act[...] + t
        rt = rtg_ref[...] * w_ret[...] + b_ret[...] + t
        # embed_ln then +wpe (both per-token), stored grouped-by-stream.
        x_scr[0:BgL, :] = ln(rt, eln_g, eln_b) + wpe_ref[0:BgL, :]
        x_scr[BgL:2 * BgL, :] = ln(st, eln_g, eln_b) + wpe_ref[BgL:2 * BgL, :]
        x_scr[2 * BgL:, :] = ln(ac, eln_g, eln_b) + wpe_ref[2 * BgL:, :]

    # ---- phase 1: one GPT2 block per grid step ------------------------------
    x = x_scr[...]                                        # (Rg, Hp) f32 carry
    h1 = ln(x, ln1g, ln1b).astype(jnp.bfloat16)
    # Q|K only; per-head 128-lane slots; 1/sqrt(hd) folded into Q at pack time.
    qk = (jnp.dot(h1, wqk[...], preferred_element_type=jnp.float32)
          + bqk[...]).astype(jnp.bfloat16)                # (Rg, 2*n_head*hdp)
    # V with c_proj folded in per head at pack time.
    vall = jnp.dot(h1, wvf[...],
                   preferred_element_type=jnp.float32).astype(jnp.bfloat16)
    mbias = mask_ref[...]                                 # 0 / -1e9 additive mask
    attn = jnp.zeros((Rg, Hp), jnp.float32)
    for h in range(n_head):                               # static, 128-aligned slices
        q = qk[:, h * hdp:(h + 1) * hdp]
        k = qk[:, (n_head + h) * hdp:(n_head + h + 1) * hdp]
        s = jax.lax.dot_general(q, k, (((1,), (1,)), ((), ())),
                                preferred_element_type=jnp.float32) + mbias
        # -1e9 (not -inf) is safe: max-subtraction precedes exp and every row
        # keeps at least its own diagonal unmasked.
        s = s - jnp.max(s, axis=-1, keepdims=True)
        p = jnp.exp(s)
        p = (p * pl.reciprocal(jnp.sum(p, axis=-1, keepdims=True),
                               approx=True)).astype(jnp.bfloat16)
        attn = attn + jnp.dot(p, vall[:, h * Hp:(h + 1) * Hp],
                              preferred_element_type=jnp.float32)
    # bvp = b_proj + sum_h b_v_h @ Wproj_h  (softmax rows sum to ~1).
    x = x + attn + bvp[...]

    h2 = ln(x, ln2g, ln2b).astype(jnp.bfloat16)
    f = jnp.dot(h2, wfc[...], preferred_element_type=jnp.float32) + bfc[...]
    f = 0.5 * f * (1.0 + jnp.tanh(0.7978845608028654 * (f + 0.044715 * f * f * f)))
    x = x + jnp.dot(f.astype(jnp.bfloat16), wout[...],
                    preferred_element_type=jnp.float32) + bout[...]
    x_scr[...] = x

    # ---- phase 2: ln_f + prediction heads (last layer step) -----------------
    @pl.when(l == n_layer - 1)
    def _():
        st_tok = x[BgL:2 * BgL, :]      # state-token hiddens  -> action preds
        act_tok = x[2 * BgL:, :]        # action-token hiddens -> return/state preds
        act_h = ln(act_tok, lnf_g, lnf_b)
        st_h = ln(st_tok, lnf_g, lnf_b)
        out_rs[...] = f32dot(act_h, w_rs[...]) + b_rs[...]
        out_a[...] = jnp.tanh(f32dot(st_h, w_a[...]) + b_a[...])


def meta_dt_fused(states_f, ctx_f, act_f, rtg_f, time_f, wpe_grp, mask_bias,
                  embed_w, layer_w, head_w, *, H, n_head, hdp, G, out_width):
    BL = states_f.shape[0]
    BgL = BL // G
    Rg = 3 * BgL
    Hp = time_f.shape[-1]
    n_layer = layer_w[0].shape[0]

    def const_spec(a):
        return pl.BlockSpec(a.shape, lambda g, l, n=a.ndim: (0,) * n)

    def group_spec(a):
        return pl.BlockSpec((BgL,) + a.shape[1:],
                            lambda g, l, n=a.ndim: (g,) + (0,) * (n - 1))

    def layer_spec(a):
        return pl.BlockSpec((None,) + a.shape[1:],
                            lambda g, l, n=a.ndim: (l,) + (0,) * (n - 1))

    in_specs = ([group_spec(a) for a in (states_f, ctx_f, act_f, rtg_f, time_f)]
                + [const_spec(wpe_grp), const_spec(mask_bias)]
                + [const_spec(a) for a in embed_w]
                + [layer_spec(a) for a in layer_w]
                + [const_spec(a) for a in head_w])

    out_specs = [pl.BlockSpec((BgL, out_width), lambda g, l: (g, 0)),
                 pl.BlockSpec((BgL, out_width), lambda g, l: (g, 0))]
    out_shape = [jax.ShapeDtypeStruct((BL, out_width), jnp.float32),
                 jax.ShapeDtypeStruct((BL, out_width), jnp.float32)]

    return pl.pallas_call(
        functools.partial(_meta_dt_kernel, H=H, n_head=n_head, hdp=hdp,
                          n_layer=n_layer),
        grid=(G, n_layer),
        in_specs=in_specs,
        out_specs=out_specs,
        out_shape=out_shape,
        scratch_shapes=[pltpu.VMEM((Rg, Hp), jnp.float32)],
        compiler_params=pltpu.CompilerParams(
            dimension_semantics=("parallel", "arbitrary")),
    )(states_f, ctx_f, act_f, rtg_f, time_f, wpe_grp, mask_bias,
      *embed_w, *layer_w, *head_w)


# ---------------------------------------------------------------------------
# Parameters: module-faithful synthetic init, then padded / folded packing
# ---------------------------------------------------------------------------

def init_params(key, state_dim, act_dim, context_dim, hidden,
                n_layer, max_ep_len, n_positions):
    H = hidden
    keys = iter(jax.random.split(key, 8 * n_layer + 16))

    def w(shape):
        return jax.random.normal(next(keys), shape, jnp.float32) * 0.02

    def zeros(n):
        return jnp.zeros((n,), jnp.float32)

    p = {
        "state_encoder": (w((state_dim, context_dim)), zeros(context_dim)),
        "embed_state": (w((2 * context_dim, H)), zeros(H)),
        "embed_action": (w((act_dim, H)), zeros(H)),
        "embed_return": (w((1, H)), zeros(H)),
        "embed_timestep": w((max_ep_len, H)),
        "wpe": w((n_positions, H)),
        "embed_ln": (jnp.ones((H,), jnp.float32), zeros(H)),
        "ln_f": (jnp.ones((H,), jnp.float32), zeros(H)),
        "predict_state": (w((H, state_dim)), zeros(state_dim)),
        "predict_action": (w((H, act_dim)), zeros(act_dim)),
        "predict_return": (w((H, 1)), zeros(1)),
    }
    blocks = []
    for _ in range(n_layer):
        blocks.append({
            "ln1": (jnp.ones((H,), jnp.float32), zeros(H)),
            "c_attn": (w((H, 3 * H)), zeros(3 * H)),     # [Q | K | V] columns
            "c_proj": (w((H, H)), zeros(H)),
            "ln2": (jnp.ones((H,), jnp.float32), zeros(H)),
            "c_fc": (w((H, 4 * H)), zeros(4 * H)),
            "c_out": (w((4 * H, H)), zeros(H)),
        })
    p["blocks"] = blocks
    return p


def pack_params(p, state_dim, act_dim, context_dim, H, n_head):
    Hp = _rup(H, LANE)
    hd = H // n_head
    hdp = _rup(hd, LANE)
    Fp = _rup(4 * H, LANE)
    scale = 1.0 / math.sqrt(hd)

    def pad_cols(a, cols):
        return jnp.pad(a, ((0, 0), (0, cols - a.shape[1])))

    def pad_rc(a, rows, cols):
        return jnp.pad(a, ((0, rows - a.shape[0]), (0, cols - a.shape[1])))

    def pad_vec(v, cols):
        return jnp.pad(v.reshape(1, -1), ((0, 0), (0, cols - v.shape[-1])))

    w_st, b_st = p["embed_state"]
    embed = [
        p["state_encoder"][0], p["state_encoder"][1].reshape(1, -1),
        pad_cols(w_st[:context_dim], Hp), pad_cols(w_st[context_dim:], Hp),
        pad_vec(b_st, Hp),
        pad_cols(p["embed_action"][0], Hp), pad_vec(p["embed_action"][1], Hp),
        pad_cols(p["embed_return"][0], Hp), pad_vec(p["embed_return"][1], Hp),
        pad_vec(p["embed_ln"][0], Hp), pad_vec(p["embed_ln"][1], Hp),
    ]

    def pack_layer(blk):
        w_attn, b_attn = blk["c_attn"]          # (H, 3H), (3H,)
        w_proj, b_proj = blk["c_proj"]          # (H, H), (H,)
        # Q|K, per-head 128-lane slots; softmax scale folded into Q.
        wqk = jnp.zeros((Hp, 2 * n_head * hdp), jnp.float32)
        bqk = jnp.zeros((1, 2 * n_head * hdp), jnp.float32)
        for part, sc in ((0, scale), (1, 1.0)):          # 0 = Q, 1 = K
            for h in range(n_head):
                c0 = (part * n_head + h) * hdp
                s0 = part * H + h * hd
                wqk = wqk.at[:H, c0:c0 + hd].set(w_attn[:, s0:s0 + hd] * sc)
                bqk = bqk.at[0, c0:c0 + hd].set(b_attn[s0:s0 + hd] * sc)
        # V with c_proj folded in per head; combined V/proj bias.
        wvf = jnp.zeros((Hp, n_head * Hp), jnp.float32)
        bvp = jnp.zeros((1, Hp), jnp.float32).at[0, :H].set(b_proj)
        for h in range(n_head):
            wv_h = w_attn[:, 2 * H + h * hd: 2 * H + (h + 1) * hd]   # (H, hd)
            wp_h = w_proj[h * hd:(h + 1) * hd, :]                    # (hd, H)
            wvf = wvf.at[:H, h * Hp:h * Hp + H].set(wv_h @ wp_h)
            bvp = bvp.at[0, :H].add(b_attn[2 * H + h * hd: 2 * H + (h + 1) * hd] @ wp_h)
        return {
            "ln1g": pad_vec(blk["ln1"][0], Hp), "ln1b": pad_vec(blk["ln1"][1], Hp),
            "wqk": wqk.astype(jnp.bfloat16), "bqk": bqk,
            "wvf": wvf.astype(jnp.bfloat16), "bvp": bvp,
            "ln2g": pad_vec(blk["ln2"][0], Hp), "ln2b": pad_vec(blk["ln2"][1], Hp),
            "wfc": pad_rc(blk["c_fc"][0], Hp, Fp).astype(jnp.bfloat16),
            "bfc": pad_vec(blk["c_fc"][1], Fp),
            "wout": pad_rc(blk["c_out"][0], Fp, Hp).astype(jnp.bfloat16),
            "bout": pad_vec(blk["c_out"][1], Hp),
        }

    keys = ("ln1g", "ln1b", "wqk", "bqk", "wvf", "bvp",
            "ln2g", "ln2b", "wfc", "bfc", "wout", "bout")
    per = [pack_layer(b) for b in p["blocks"]]
    layers = [jnp.stack([lay[k] for lay in per], axis=0) for k in keys]

    # Heads: predict_return + predict_state packed into one lane-dense matrix
    # (both read action-token hiddens); predict_action reads state-token hiddens.
    ow = _rup(max(1 + state_dim, act_dim), LANE)
    w_rs = (jnp.zeros((Hp, ow), jnp.float32)
            .at[:H, 0:1].set(p["predict_return"][0])
            .at[:H, 1:1 + state_dim].set(p["predict_state"][0]))
    b_rs = (jnp.zeros((1, ow), jnp.float32)
            .at[0, 0:1].set(p["predict_return"][1])
            .at[0, 1:1 + state_dim].set(p["predict_state"][1]))
    w_a = jnp.zeros((Hp, ow), jnp.float32).at[:H, :act_dim].set(p["predict_action"][0])
    b_a = jnp.zeros((1, ow), jnp.float32).at[0, :act_dim].set(p["predict_action"][1])
    heads = {"lnf_g": pad_vec(p["ln_f"][0], Hp), "lnf_b": pad_vec(p["ln_f"][1], Hp),
             "w_rs": w_rs, "b_rs": b_rs, "w_a": w_a, "b_a": b_a}

    return {"embed": embed,
            "embed_timestep": pad_cols(p["embed_timestep"], Hp),
            "wpe": pad_cols(p["wpe"], Hp),
            "layers": layers,
            "heads": heads,
            "dims": {"H": H, "Hp": Hp, "hd": hd, "hdp": hdp, "n_head": n_head}}


# ---------------------------------------------------------------------------
# Forward pass (prompt=None path of MetaDecisionTransformer.forward)
# ---------------------------------------------------------------------------

def meta_dt_forward(packed, states, contexts, actions, returns_to_go, timesteps,
                    row_groups=1):
    # row_groups=1 for v5e/v6e (single TensorCore, weights fetched once per
    # layer); set row_groups=2 on v7x to split rows across both TensorCores.
    dims = packed["dims"]
    H, n_head, hdp = dims["H"], dims["n_head"], dims["hdp"]
    B, L, state_dim = states.shape
    act_dim = actions.shape[-1]
    G = row_groups
    assert B % G == 0, "row_groups must divide batch"
    Bg, T = B // G, 3 * L
    BgL, BL = Bg * L, B * L

    states_f = states.reshape(BL, state_dim)
    ctx_f = contexts.reshape(BL, -1)
    act_f = actions.reshape(BL, -1)
    rtg_f = returns_to_go.reshape(BL, 1)
    # timestep-embedding gather kept as a single tiny XLA op.
    time_f = jnp.take(packed["embed_timestep"], timesteps.reshape(-1), axis=0)

    # Trace-time constants: wpe rows and block-causal additive mask, both
    # permuted into the kernel's grouped-by-stream token order.
    wpe_T = packed["wpe"][:T]
    wpe_grp = jnp.concatenate(
        [jnp.tile(wpe_T[s::3], (Bg, 1)) for s in range(3)], axis=0)   # (3*BgL, Hp)
    sidx = jnp.repeat(jnp.arange(3), BgL)
    bl_idx = jnp.tile(jnp.arange(BgL), 3)
    b_idx = bl_idx // L
    pos = 3 * (bl_idx % L) + sidx
    allowed = (b_idx[:, None] == b_idx[None, :]) & (pos[:, None] >= pos[None, :])
    mask_bias = jnp.where(allowed, 0.0, -1e9).astype(jnp.float32)

    hp = packed["heads"]
    head_w = [hp["lnf_g"], hp["lnf_b"], hp["w_rs"], hp["b_rs"], hp["w_a"], hp["b_a"]]
    out_rs, out_a = meta_dt_fused(
        states_f, ctx_f, act_f, rtg_f, time_f, wpe_grp, mask_bias,
        packed["embed"], packed["layers"], head_w,
        H=H, n_head=n_head, hdp=hdp, G=G, out_width=hp["w_rs"].shape[-1])

    return_preds = out_rs[:, 0:1].reshape(B, L, 1)
    state_preds = out_rs[:, 1:1 + state_dim].reshape(B, L, state_dim)
    action_preds = out_a[:, :act_dim].reshape(B, L, act_dim)
    # TODO(synk): prompt-conditioned path (prompt tuple concat) not implemented.
    return state_preds, action_preds, return_preds


# ---------------------------------------------------------------------------
# Driver
# ---------------------------------------------------------------------------

if __name__ == "__main__":
    B, L = 2, 8
    state_dim, act_dim, context_dim, hidden = 11, 3, 8, 32
    n_layer, n_head, max_ep_len, n_positions = 2, 2, 64, 64

    key = jax.random.PRNGKey(0)
    pkey, dkey = jax.random.split(key)
    raw = init_params(pkey, state_dim, act_dim, context_dim, hidden,
                      n_layer, max_ep_len, n_positions)
    packed = pack_params(raw, state_dim, act_dim, context_dim, hidden, n_head)

    ks = jax.random.split(dkey, 5)
    states = jax.random.normal(ks[0], (B, L, state_dim), jnp.float32)
    contexts = jax.random.normal(ks[1], (B, L, context_dim), jnp.float32)
    actions = jax.random.normal(ks[2], (B, L, act_dim), jnp.float32)
    returns_to_go = jax.random.normal(ks[3], (B, L, 1), jnp.float32)
    timesteps = jax.random.randint(ks[4], (B, L), 0, max_ep_len, dtype=jnp.int32)

    fwd = jax.jit(functools.partial(meta_dt_forward, packed))
    state_preds, action_preds, return_preds = fwd(
        states, contexts, actions, returns_to_go, timesteps)

    jax.block_until_ready((state_preds, action_preds, return_preds))
    assert state_preds.shape == (B, L, state_dim)
    assert action_preds.shape == (B, L, act_dim)
    assert return_preds.shape == (B, L, 1)
    assert bool(jnp.all(jnp.isfinite(state_preds)))
    assert bool(jnp.all(jnp.isfinite(action_preds)))
    assert bool(jnp.all(jnp.isfinite(return_preds)))
    print("KERNEL_OK")
</pallas_src>

<mosaic_0001>
module attributes {stable_mosaic.version = 11 : i64} {
  func.func @_meta_dt_kernel(%arg0: i32, %arg1: i32, %arg2: memref<16x11xf32, #tpu.memory_space<vmem>>, %arg3: memref<16x8xf32, #tpu.memory_space<vmem>>, %arg4: memref<16x3xf32, #tpu.memory_space<vmem>>, %arg5: memref<16x1xf32, #tpu.memory_space<vmem>>, %arg6: memref<16x128xf32, #tpu.memory_space<vmem>>, %arg7: memref<48x128xf32, #tpu.memory_space<vmem>>, %arg8: memref<48x48xf32, #tpu.memory_space<vmem>>, %arg9: memref<11x8xf32, #tpu.memory_space<vmem>>, %arg10: memref<1x8xf32, #tpu.memory_space<vmem>>, %arg11: memref<8x128xf32, #tpu.memory_space<vmem>>, %arg12: memref<8x128xf32, #tpu.memory_space<vmem>>, %arg13: memref<1x128xf32, #tpu.memory_space<vmem>>, %arg14: memref<3x128xf32, #tpu.memory_space<vmem>>, %arg15: memref<1x128xf32, #tpu.memory_space<vmem>>, %arg16: memref<1x128xf32, #tpu.memory_space<vmem>>, %arg17: memref<1x128xf32, #tpu.memory_space<vmem>>, %arg18: memref<1x128xf32, #tpu.memory_space<vmem>>, %arg19: memref<1x128xf32, #tpu.memory_space<vmem>>, %arg20: memref<1x1x128xf32, #tpu.memory_space<vmem>>, %arg21: memref<1x1x128xf32, #tpu.memory_space<vmem>>, %arg22: memref<1x128x512xbf16, #tpu.memory_space<vmem>>, %arg23: memref<1x1x512xf32, #tpu.memory_space<vmem>>, %arg24: memref<1x128x256xbf16, #tpu.memory_space<vmem>>, %arg25: memref<1x1x128xf32, #tpu.memory_space<vmem>>, %arg26: memref<1x1x128xf32, #tpu.memory_space<vmem>>, %arg27: memref<1x1x128xf32, #tpu.memory_space<vmem>>, %arg28: memref<1x128x128xbf16, #tpu.memory_space<vmem>>, %arg29: memref<1x1x128xf32, #tpu.memory_space<vmem>>, %arg30: memref<1x128x128xbf16, #tpu.memory_space<vmem>>, %arg31: memref<1x1x128xf32, #tpu.memory_space<vmem>>, %arg32: memref<1x128xf32, #tpu.memory_space<vmem>>, %arg33: memref<1x128xf32, #tpu.memory_space<vmem>>, %arg34: memref<128x128xf32, #tpu.memory_space<vmem>>, %arg35: memref<1x128xf32, #tpu.memory_space<vmem>>, %arg36: memref<128x128xf32, #tpu.memory_space<vmem>>, %arg37: memref<1x128xf32, #tpu.memory_space<vmem>>, %arg38: memref<16x128xf32, #tpu.memory_space<vmem>>, %arg39: memref<16x128xf32, #tpu.memory_space<vmem>>, %arg40: memref<48x128xf32, #tpu.memory_space<vmem>>) attributes {dimension_semantics = [#tpu.dimension_semantics<parallel>, #tpu.dimension_semantics<arbitrary>], iteration_bounds = array<i64: 1, 2>, scalar_prefetch = 0 : i64, scratch_operands = 1 : i64, tpu.core_type = #tpu.core_type<tc>, window_params = [{transform_indices = @transform_0, window_bounds = array<i64: 16, 11>}, {transform_indices = @transform_1, window_bounds = array<i64: 16, 8>}, {transform_indices = @transform_2, window_bounds = array<i64: 16, 3>}, {transform_indices = @transform_3, window_bounds = array<i64: 16, 1>}, {transform_indices = @transform_4, window_bounds = array<i64: 16, 128>}, {pipeline_mode = #tpu.pipeline_mode<synchronous>, transform_indices = @transform_5, window_bounds = array<i64: 48, 128>}, {pipeline_mode = #tpu.pipeline_mode<synchronous>, transform_indices = @transform_6, window_bounds = array<i64: 48, 48>}, {pipeline_mode = #tpu.pipeline_mode<synchronous>, transform_indices = @transform_7, window_bounds = array<i64: 11, 8>}, {pipeline_mode = #tpu.pipeline_mode<synchronous>, transform_indices = @transform_8, window_bounds = array<i64: 1, 8>}, {pipeline_mode = #tpu.pipeline_mode<synchronous>, transform_indices = @transform_9, window_bounds = array<i64: 8, 128>}, {pipeline_mode = #tpu.pipeline_mode<synchronous>, transform_indices = @transform_10, window_bounds = array<i64: 8, 128>}, {pipeline_mode = #tpu.pipeline_mode<synchronous>, transform_indices = @transform_11, window_bounds = array<i64: 1, 128>}, {pipeline_mode = #tpu.pipeline_mode<synchronous>, transform_indices = @transform_12, window_bounds = array<i64: 3, 128>}, {pipeline_mode = #tpu.pipeline_mode<synchronous>, transform_indices = @transform_13, window_bounds = array<i64: 1, 128>}, {pipeline_mode = #tpu.pipeline_mode<synchronous>, transform_indices = @transform_14, window_bounds = array<i64: 1, 128>}, {pipeline_mode = #tpu.pipeline_mode<synchronous>, transform_indices = @transform_15, window_bounds = array<i64: 1, 128>}, {pipeline_mode = #tpu.pipeline_mode<synchronous>, transform_indices = @transform_16, window_bounds = array<i64: 1, 128>}, {pipeline_mode = #tpu.pipeline_mode<synchronous>, transform_indices = @transform_17, window_bounds = array<i64: 1, 128>}, {transform_indices = @transform_18, window_bounds = array<i64: 1, 1, 128>}, {transform_indices = @transform_19, window_bounds = array<i64: 1, 1, 128>}, {transform_indices = @transform_20, window_bounds = array<i64: 1, 128, 512>}, {transform_indices = @transform_21, window_bounds = array<i64: 1, 1, 512>}, {transform_indices = @transform_22, window_bounds = array<i64: 1, 128, 256>}, {transform_indices = @transform_23, window_bounds = array<i64: 1, 1, 128>}, {transform_indices = @transform_24, window_bounds = array<i64: 1, 1, 128>}, {transform_indices = @transform_25, window_bounds = array<i64: 1, 1, 128>}, {transform_indices = @transform_26, window_bounds = array<i64: 1, 128, 128>}, {transform_indices = @transform_27, window_bounds = array<i64: 1, 1, 128>}, {transform_indices = @transform_28, window_bounds = array<i64: 1, 128, 128>}, {transform_indices = @transform_29, window_bounds = array<i64: 1, 1, 128>}, {pipeline_mode = #tpu.pipeline_mode<synchronous>, transform_indices = @transform_30, window_bounds = array<i64: 1, 128>}, {pipeline_mode = #tpu.pipeline_mode<synchronous>, transform_indices = @transform_31, window_bounds = array<i64: 1, 128>}, {pipeline_mode = #tpu.pipeline_mode<synchronous>, transform_indices = @transform_32, window_bounds = array<i64: 128, 128>}, {pipeline_mode = #tpu.pipeline_mode<synchronous>, transform_indices = @transform_33, window_bounds = array<i64: 1, 128>}, {pipeline_mode = #tpu.pipeline_mode<synchronous>, transform_indices = @transform_34, window_bounds = array<i64: 128, 128>}, {pipeline_mode = #tpu.pipeline_mode<synchronous>, transform_indices = @transform_35, window_bounds = array<i64: 1, 128>}, {transform_indices = @transform_36, window_bounds = array<i64: 16, 128>}, {transform_indices = @transform_37, window_bounds = array<i64: 16, 128>}]} {
    %0 = tpu.iota {dimensions = array<i32: 1>} : vector<1x128xi32>
    %c32_i32 = arith.constant 32 : i32
    %1 = vector.broadcast %c32_i32 : i32 to vector<1x128xi32>
    %2 = arith.cmpi slt, %0, %1 : vector<1x128xi32>
    %3 = arith.extui %2 : vector<1x128xi1> to vector<1x128xi32>
    %4 = arith.sitofp %3 : vector<1x128xi32> to vector<1x128xf32>
    %c0_i32 = arith.constant 0 : i32
    %5 = arith.cmpi eq, %arg1, %c0_i32 : i32
    %6 = arith.extui %5 : i1 to i32
    %c0_i32_0 = arith.constant 0 : i32
    %7 = arith.cmpi ne, %6, %c0_i32_0 : i32
    scf.if %7 {
      %c0_69 = arith.constant 0 : index
      %c0_70 = arith.constant 0 : index
      %155 = vector.load %arg6[%c0_69, %c0_70] : memref<16x128xf32, #tpu.memory_space<vmem>>, vector<16x128xf32>
      %c0_71 = arith.constant 0 : index
      %c0_72 = arith.constant 0 : index
      %156 = vector.load %arg2[%c0_71, %c0_72] : memref<16x11xf32, #tpu.memory_space<vmem>>, vector<16x11xf32>
      %c0_73 = arith.constant 0 : index
      %c0_74 = arith.constant 0 : index
      %157 = vector.load %arg9[%c0_73, %c0_74] : memref<11x8xf32, #tpu.memory_space<vmem>>, vector<11x8xf32>
      %cst_75 = arith.constant dense<0.000000e+00> : vector<16x8xf32>
      %158 = tpu.matmul %156, %157, %cst_75 {dimension_numbers = #tpu.dot_dimension_numbers<[1], [0], [0], [1], [0, 0, 1, 1], [], []>} : vector<16x11xf32>, vector<11x8xf32>, vector<16x8xf32> -> vector<16x8xf32>
      %c0_76 = arith.constant 0 : index
      %c0_77 = arith.constant 0 : index
      %159 = vector.load %arg10[%c0_76, %c0_77] : memref<1x8xf32, #tpu.memory_space<vmem>>, vector<1x8xf32>
      %160 = vector.broadcast %159 : vector<1x8xf32> to vector<16x8xf32>
      %161 = arith.addf %158, %160 : vector<16x8xf32>
      %c0_78 = arith.constant 0 : index
      %c0_79 = arith.constant 0 : index
      %162 = vector.load %arg11[%c0_78, %c0_79] : memref<8x128xf32, #tpu.memory_space<vmem>>, vector<8x128xf32>
      %cst_80 = arith.constant dense<0.000000e+00> : vector<16x128xf32>
      %163 = tpu.matmul %161, %162, %cst_80 {dimension_numbers = #tpu.dot_dimension_numbers<[1], [0], [0], [1], [0, 0, 1, 1], [], []>} : vector<16x8xf32>, vector<8x128xf32>, vector<16x128xf32> -> vector<16x128xf32>
      %c0_81 = arith.constant 0 : index
      %c0_82 = arith.constant 0 : index
      %164 = vector.load %arg3[%c0_81, %c0_82] : memref<16x8xf32, #tpu.memory_space<vmem>>, vector<16x8xf32>
      %c0_83 = arith.constant 0 : index
      %c0_84 = arith.constant 0 : index
      %165 = vector.load %arg12[%c0_83, %c0_84] : memref<8x128xf32, #tpu.memory_space<vmem>>, vector<8x128xf32>
      %cst_85 = arith.constant dense<0.000000e+00> : vector<16x128xf32>
      %166 = tpu.matmul %164, %165, %cst_85 {dimension_numbers = #tpu.dot_dimension_numbers<[1], [0], [0], [1], [0, 0, 1, 1], [], []>} : vector<16x8xf32>, vector<8x128xf32>, vector<16x128xf32> -> vector<16x128xf32>
      %167 = arith.addf %163, %166 : vector<16x128xf32>
      %c0_86 = arith.constant 0 : index
      %c0_87 = arith.constant 0 : index
      %168 = vector.load %arg13[%c0_86, %c0_87] : memref<1x128xf32, #tpu.memory_space<vmem>>, vector<1x128xf32>
      %169 = vector.broadcast %168 : vector<1x128xf32> to vector<16x128xf32>
      %170 = arith.addf %167, %169 : vector<16x128xf32>
      %171 = arith.addf %170, %155 : vector<16x128xf32>
      %c0_88 = arith.constant 0 : index
      %c0_89 = arith.constant 0 : index
      %172 = vector.load %arg4[%c0_88, %c0_89] : memref<16x3xf32, #tpu.memory_space<vmem>>, vector<16x3xf32>
      %c0_90 = arith.constant 0 : index
      %c0_91 = arith.constant 0 : index
      %173 = vector.load %arg14[%c0_90, %c0_91] : memref<3x128xf32, #tpu.memory_space<vmem>>, vector<3x128xf32>
      %cst_92 = arith.constant dense<0.000000e+00> : vector<16x128xf32>
      %174 = tpu.matmul %172, %173, %cst_92 {dimension_numbers = #tpu.dot_dimension_numbers<[1], [0], [0], [1], [0, 0, 1, 1], [], []>} : vector<16x3xf32>, vector<3x128xf32>, vector<16x128xf32> -> vector<16x128xf32>
      %c0_93 = arith.constant 0 : index
      %c0_94 = arith.constant 0 : index
      %175 = vector.load %arg15[%c0_93, %c0_94] : memref<1x128xf32, #tpu.memory_space<vmem>>, vector<1x128xf32>
      %176 = vector.broadcast %175 : vector<1x128xf32> to vector<16x128xf32>
      %177 = arith.addf %174, %176 : vector<16x128xf32>
      %178 = arith.addf %177, %155 : vector<16x128xf32>
      %c0_95 = arith.constant 0 : index
      %c0_96 = arith.constant 0 : index
      %179 = vector.load %arg5[%c0_95, %c0_96] : memref<16x1xf32, #tpu.memory_space<vmem>>, vector<16x1xf32>
      %c0_97 = arith.constant 0 : index
      %c0_98 = arith.constant 0 : index
      %180 = vector.load %arg16[%c0_97, %c0_98] : memref<1x128xf32, #tpu.memory_space<vmem>>, vector<1x128xf32>
      %181 = vector.broadcast %179 : vector<16x1xf32> to vector<16x128xf32>
      %182 = vector.broadcast %180 : vector<1x128xf32> to vector<16x128xf32>
      %183 = arith.mulf %181, %182 : vector<16x128xf32>
      %c0_99 = arith.constant 0 : index
      %c0_100 = arith.constant 0 : index
      %184 = vector.load %arg17[%c0_99, %c0_100] : memref<1x128xf32, #tpu.memory_space<vmem>>, vector<1x128xf32>
      %185 = vector.broadcast %184 : vector<1x128xf32> to vector<16x128xf32>
      %186 = arith.addf %183, %185 : vector<16x128xf32>
      %187 = arith.addf %186, %155 : vector<16x128xf32>
      %188 = vector.broadcast %4 : vector<1x128xf32> to vector<16x128xf32>
      %189 = arith.mulf %187, %188 : vector<16x128xf32>
      %cst_101 = arith.constant dense<0.000000e+00> : vector<16xf32>
      %190 = vector.multi_reduction <add>, %189, %cst_101 [1] : vector<16x128xf32> to vector<16xf32>
      %191 = vector.shape_cast %190 : vector<16xf32> to vector<16x1xf32>
      %cst_102 = arith.constant 3.125000e-02 : f32
      %192 = vector.broadcast %cst_102 : f32 to vector<16x1xf32>
      %193 = arith.mulf %191, %192 : vector<16x1xf32>
      %194 = vector.broadcast %193 : vector<16x1xf32> to vector<16x128xf32>
      %195 = arith.subf %189, %194 : vector<16x128xf32>
      %196 = vector.broadcast %4 : vector<1x128xf32> to vector<16x128xf32>
      %197 = arith.mulf %195, %196 : vector<16x128xf32>
      %198 = arith.mulf %197, %197 : vector<16x128xf32>
      %cst_103 = arith.constant dense<0.000000e+00> : vector<16xf32>
      %199 = vector.multi_reduction <add>, %198, %cst_103 [1] : vector<16x128xf32> to vector<16xf32>
      %200 = vector.shape_cast %199 : vector<16xf32> to vector<16x1xf32>
      %cst_104 = arith.constant 3.125000e-02 : f32
      %201 = vector.broadcast %cst_104 : f32 to vector<16x1xf32>
      %202 = arith.mulf %200, %201 : vector<16x1xf32>
      %cst_105 = arith.constant 9.99999974E-6 : f32
      %203 = vector.broadcast %cst_105 : f32 to vector<16x1xf32>
      %204 = arith.addf %202, %203 : vector<16x1xf32>
      %205 = math.rsqrt %204 : vector<16x1xf32>
      %206 = vector.broadcast %205 : vector<16x1xf32> to vector<16x128xf32>
      %207 = arith.mulf %197, %206 : vector<16x128xf32>
      %c0_106 = arith.constant 0 : index
      %c0_107 = arith.constant 0 : index
      %208 = vector.load %arg18[%c0_106, %c0_107] : memref<1x128xf32, #tpu.memory_space<vmem>>, vector<1x128xf32>
      %209 = vector.broadcast %208 : vector<1x128xf32> to vector<16x128xf32>
      %210 = arith.mulf %207, %209 : vector<16x128xf32>
      %c0_108 = arith.constant 0 : index
      %c0_109 = arith.constant 0 : index
      %211 = vector.load %arg19[%c0_108, %c0_109] : memref<1x128xf32, #tpu.memory_space<vmem>>, vector<1x128xf32>
      %212 = vector.broadcast %211 : vector<1x128xf32> to vector<16x128xf32>
      %213 = arith.addf %210, %212 : vector<16x128xf32>
      %c0_110 = arith.constant 0 : index
      %c0_111 = arith.constant 0 : index
      %214 = vector.load %arg7[%c0_110, %c0_111] : memref<48x128xf32, #tpu.memory_space<vmem>>, vector<16x128xf32>
      %215 = arith.addf %213, %214 : vector<16x128xf32>
      %c0_112 = arith.constant 0 : index
      %c0_113 = arith.constant 0 : index
      %216 = vector.load %arg40[%c0_112, %c0_113] : memref<48x128xf32, #tpu.memory_space<vmem>>, vector<16x128xf32>
      tpu.vector_store %arg40[%c0_112, %c0_113], %215 {strides = array<i32>} : memref<48x128xf32, #tpu.memory_space<vmem>>, vector<16x128xf32>,
      %217 = vector.broadcast %4 : vector<1x128xf32> to vector<16x128xf32>
      %218 = arith.mulf %171, %217 : vector<16x128xf32>
      %cst_114 = arith.constant dense<0.000000e+00> : vector<16xf32>
      %219 = vector.multi_reduction <add>, %218, %cst_114 [1] : vector<16x128xf32> to vector<16xf32>
      %220 = vector.shape_cast %219 : vector<16xf32> to vector<16x1xf32>
      %cst_115 = arith.constant 3.125000e-02 : f32
      %221 = vector.broadcast %cst_115 : f32 to vector<16x1xf32>
      %222 = arith.mulf %220, %221 : vector<16x1xf32>
      %223 = vector.broadcast %222 : vector<16x1xf32> to vector<16x128xf32>
      %224 = arith.subf %218, %223 : vector<16x128xf32>
      %225 = vector.broadcast %4 : vector<1x128xf32> to vector<16x128xf32>
      %226 = arith.mulf %224, %225 : vector<16x128xf32>
      %227 = arith.mulf %226, %226 : vector<16x128xf32>
      %cst_116 = arith.constant dense<0.000000e+00> : vector<16xf32>
      %228 = vector.multi_reduction <add>, %227, %cst_116 [1] : vector<16x128xf32> to vector<16xf32>
      %229 = vector.shape_cast %228 : vector<16xf32> to vector<16x1xf32>
      %cst_117 = arith.constant 3.125000e-02 : f32
      %230 = vector.broadcast %cst_117 : f32 to vector<16x1xf32>
      %231 = arith.mulf %229, %230 : vector<16x1xf32>
      %cst_118 = arith.constant 9.99999974E-6 : f32
      %232 = vector.broadcast %cst_118 : f32 to vector<16x1xf32>
      %233 = arith.addf %231, %232 : vector<16x1xf32>
      %234 = math.rsqrt %233 : vector<16x1xf32>
      %235 = vector.broadcast %234 : vector<16x1xf32> to vector<16x128xf32>
      %236 = arith.mulf %226, %235 : vector<16x128xf32>
      %c0_119 = arith.constant 0 : index
      %c0_120 = arith.constant 0 : index
      %237 = vector.load %arg18[%c0_119, %c0_120] : memref<1x128xf32, #tpu.memory_space<vmem>>, vector<1x128xf32>
      %238 = vector.broadcast %237 : vector<1x128xf32> to vector<16x128xf32>
      %239 = arith.mulf %236, %238 : vector<16x128xf32>
      %c0_121 = arith.constant 0 : index
      %c0_122 = arith.constant 0 : index
      %240 = vector.load %arg19[%c0_121, %c0_122] : memref<1x128xf32, #tpu.memory_space<vmem>>, vector<1x128xf32>
      %241 = vector.broadcast %240 : vector<1x128xf32> to vector<16x128xf32>
      %242 = arith.addf %239, %241 : vector<16x128xf32>
      %c16 = arith.constant 16 : index
      %c0_123 = arith.constant 0 : index
      %243 = vector.load %arg7[%c16, %c0_123] : memref<48x128xf32, #tpu.memory_space<vmem>>, vector<16x128xf32>
      %244 = arith.addf %242, %243 : vector<16x128xf32>
      %c16_124 = arith.constant 16 : index
      %c0_125 = arith.constant 0 : index
      %245 = vector.load %arg40[%c16_124, %c0_125] : memref<48x128xf32, #tpu.memory_space<vmem>>, vector<16x128xf32>
      tpu.vector_store %arg40[%c16_124, %c0_125], %244 {strides = array<i32>} : memref<48x128xf32, #tpu.memory_space<vmem>>, vector<16x128xf32>,
      %246 = vector.broadcast %4 : vector<1x128xf32> to vector<16x128xf32>
      %247 = arith.mulf %178, %246 : vector<16x128xf32>
      %cst_126 = arith.constant dense<0.000000e+00> : vector<16xf32>
      %248 = vector.multi_reduction <add>, %247, %cst_126 [1] : vector<16x128xf32> to vector<16xf32>
      %249 = vector.shape_cast %248 : vector<16xf32> to vector<16x1xf32>
      %cst_127 = arith.constant 3.125000e-02 : f32
      %250 = vector.broadcast %cst_127 : f32 to vector<16x1xf32>
      %251 = arith.mulf %249, %250 : vector<16x1xf32>
      %252 = vector.broadcast %251 : vector<16x1xf32> to vector<16x128xf32>
      %253 = arith.subf %247, %252 : vector<16x128xf32>
      %254 = vector.broadcast %4 : vector<1x128xf32> to vector<16x128xf32>
      %255 = arith.mulf %253, %254 : vector<16x128xf32>
      %256 = arith.mulf %255, %255 : vector<16x128xf32>
      %cst_128 = arith.constant dense<0.000000e+00> : vector<16xf32>
      %257 = vector.multi_reduction <add>, %256, %cst_128 [1] : vector<16x128xf32> to vector<16xf32>
      %258 = vector.shape_cast %257 : vector<16xf32> to vector<16x1xf32>
      %cst_129 = arith.constant 3.125000e-02 : f32
      %259 = vector.broadcast %cst_129 : f32 to vector<16x1xf32>
      %260 = arith.mulf %258, %259 : vector<16x1xf32>
      %cst_130 = arith.constant 9.99999974E-6 : f32
      %261 = vector.broadcast %cst_130 : f32 to vector<16x1xf32>
      %262 = arith.addf %260, %261 : vector<16x1xf32>
      %263 = math.rsqrt %262 : vector<16x1xf32>
      %264 = vector.broadcast %263 : vector<16x1xf32> to vector<16x128xf32>
      %265 = arith.mulf %255, %264 : vector<16x128xf32>
      %c0_131 = arith.constant 0 : index
      %c0_132 = arith.constant 0 : index
      %266 = vector.load %arg18[%c0_131, %c0_132] : memref<1x128xf32, #tpu.memory_space<vmem>>, vector<1x128xf32>
      %267 = vector.broadcast %266 : vector<1x128xf32> to vector<16x128xf32>
      %268 = arith.mulf %265, %267 : vector<16x128xf32>
      %c0_133 = arith.constant 0 : index
      %c0_134 = arith.constant 0 : index
      %269 = vector.load %arg19[%c0_133, %c0_134] : memref<1x128xf32, #tpu.memory_space<vmem>>, vector<1x128xf32>
      %270 = vector.broadcast %269 : vector<1x128xf32> to vector<16x128xf32>
      %271 = arith.addf %268, %270 : vector<16x128xf32>
      %c32 = arith.constant 32 : index
      %c0_135 = arith.constant 0 : index
      %272 = vector.load %arg7[%c32, %c0_135] : memref<48x128xf32, #tpu.memory_space<vmem>>, vector<16x128xf32>
      %273 = arith.addf %271, %272 : vector<16x128xf32>
      %c32_136 = arith.constant 32 : index
      %c0_137 = arith.constant 0 : index
      %274 = vector.load %arg40[%c32_136, %c0_137] : memref<48x128xf32, #tpu.memory_space<vmem>>, vector<16x128xf32>
      tpu.vector_store %arg40[%c32_136, %c0_137], %273 {strides = array<i32>} : memref<48x128xf32, #tpu.memory_space<vmem>>, vector<16x128xf32>,
    } else {
    }
    %c0 = arith.constant 0 : index
    %c0_1 = arith.constant 0 : index
    %8 = vector.load %arg40[%c0, %c0_1] : memref<48x128xf32, #tpu.memory_space<vmem>>, vector<48x128xf32>
    %9 = vector.broadcast %4 : vector<1x128xf32> to vector<48x128xf32>
    %10 = arith.mulf %8, %9 : vector<48x128xf32>
    %cst = arith.constant dense<0.000000e+00> : vector<48xf32>
    %11 = vector.multi_reduction <add>, %10, %cst [1] : vector<48x128xf32> to vector<48xf32>
    %12 = vector.shape_cast %11 : vector<48xf32> to vector<48x1xf32>
    %cst_2 = arith.constant 3.125000e-02 : f32
    %13 = vector.broadcast %cst_2 : f32 to vector<48x1xf32>
    %14 = arith.mulf %12, %13 : vector<48x1xf32>
    %15 = vector.broadcast %14 : vector<48x1xf32> to vector<48x128xf32>
    %16 = arith.subf %10, %15 : vector<48x128xf32>
    %17 = vector.broadcast %4 : vector<1x128xf32> to vector<48x128xf32>
    %18 = arith.mulf %16, %17 : vector<48x128xf32>
    %19 = arith.mulf %18, %18 : vector<48x128xf32>
    %cst_3 = arith.constant dense<0.000000e+00> : vector<48xf32>
    %20 = vector.multi_reduction <add>, %19, %cst_3 [1] : vector<48x128xf32> to vector<48xf32>
    %21 = vector.shape_cast %20 : vector<48xf32> to vector<48x1xf32>
    %cst_4 = arith.constant 3.125000e-02 : f32
    %22 = vector.broadcast %cst_4 : f32 to vector<48x1xf32>
    %23 = arith.mulf %21, %22 : vector<48x1xf32>
    %cst_5 = arith.constant 9.99999974E-6 : f32
    %24 = vector.broadcast %cst_5 : f32 to vector<48x1xf32>
    %25 = arith.addf %23, %24 : vector<48x1xf32>
    %26 = math.rsqrt %25 : vector<48x1xf32>
    %27 = vector.broadcast %26 : vector<48x1xf32> to vector<48x128xf32>
    %28 = arith.mulf %18, %27 : vector<48x128xf32>
    %c0_6 = arith.constant 0 : index
    %c0_7 = arith.constant 0 : index
    %c0_8 = arith.constant 0 : index
    %29 = vector.load %arg20[%c0_6, %c0_7, %c0_8] : memref<1x1x128xf32, #tpu.memory_space<vmem>>, vector<1x1x128xf32>
    %30 = vector.shape_cast %29 : vector<1x1x128xf32> to vector<1x128xf32>
    %31 = vector.broadcast %30 : vector<1x128xf32> to vector<48x128xf32>
    %32 = arith.mulf %28, %31 : vector<48x128xf32>
    %c0_9 = arith.constant 0 : index
    %c0_10 = arith.constant 0 : index
    %c0_11 = arith.constant 0 : index
    %33 = vector.load %arg21[%c0_9, %c0_10, %c0_11] : memref<1x1x128xf32, #tpu.memory_space<vmem>>, vector<1x1x128xf32>
    %34 = vector.shape_cast %33 : vector<1x1x128xf32> to vector<1x128xf32>
    %35 = vector.broadcast %34 : vector<1x128xf32> to vector<48x128xf32>
    %36 = arith.addf %32, %35 : vector<48x128xf32>
    %37 = arith.truncf %36 : vector<48x128xf32> to vector<48x128xbf16>
    %c0_12 = arith.constant 0 : index
    %c0_13 = arith.constant 0 : index
    %c0_14 = arith.constant 0 : index
    %38 = vector.load %arg22[%c0_12, %c0_13, %c0_14] : memref<1x128x512xbf16, #tpu.memory_space<vmem>>, vector<1x128x512xbf16>
    %39 = vector.shape_cast %38 : vector<1x128x512xbf16> to vector<128x512xbf16>
    %cst_15 = arith.constant dense<0.000000e+00> : vector<48x512xf32>
    %40 = tpu.matmul %37, %39, %cst_15 {dimension_numbers = #tpu.dot_dimension_numbers<[1], [0], [0], [1], [0, 0, 1, 1], [], []>} : vector<48x128xbf16>, vector<128x512xbf16>, vector<48x512xf32> -> vector<48x512xf32>
    %c0_16 = arith.constant 0 : index
    %c0_17 = arith.constant 0 : index
    %c0_18 = arith.constant 0 : index
    %41 = vector.load %arg23[%c0_16, %c0_17, %c0_18] : memref<1x1x512xf32, #tpu.memory_space<vmem>>, vector<1x1x512xf32>
    %42 = vector.shape_cast %41 : vector<1x1x512xf32> to vector<1x512xf32>
    %43 = vector.broadcast %42 : vector<1x512xf32> to vector<48x512xf32>
    %44 = arith.addf %40, %43 : vector<48x512xf32>
    %45 = arith.truncf %44 : vector<48x512xf32> to vector<48x512xbf16>
    %c0_19 = arith.constant 0 : index
    %c0_20 = arith.constant 0 : index
    %c0_21 = arith.constant 0 : index
    %46 = vector.load %arg24[%c0_19, %c0_20, %c0_21] : memref<1x128x256xbf16, #tpu.memory_space<vmem>>, vector<1x128x256xbf16>
    %47 = vector.shape_cast %46 : vector<1x128x256xbf16> to vector<128x256xbf16>
    %cst_22 = arith.constant dense<0.000000e+00> : vector<48x256xf32>
    %48 = tpu.matmul %37, %47, %cst_22 {dimension_numbers = #tpu.dot_dimension_numbers<[1], [0], [0], [1], [0, 0, 1, 1], [], []>} : vector<48x128xbf16>, vector<128x256xbf16>, vector<48x256xf32> -> vector<48x256xf32>
    %49 = arith.truncf %48 : vector<48x256xf32> to vector<48x256xbf16>
    %c0_23 = arith.constant 0 : index
    %c0_24 = arith.constant 0 : index
    %50 = vector.load %arg8[%c0_23, %c0_24] : memref<48x48xf32, #tpu.memory_space<vmem>>, vector<48x48xf32>
    %cst_25 = arith.constant 0.000000e+00 : f32
    %51 = vector.broadcast %cst_25 : f32 to vector<48x128xf32>
    %52 = vector.extract_strided_slice %45 {offsets = [0, 0], sizes = [48, 128], strides = [1, 1]} : vector<48x512xbf16> to vector<48x128xbf16>
    %53 = vector.extract_strided_slice %45 {offsets = [0, 256], sizes = [48, 128], strides = [1, 1]} : vector<48x512xbf16> to vector<48x128xbf16>
    %cst_26 = arith.constant dense<0.000000e+00> : vector<48x48xf32>
    %54 = tpu.matmul %52, %53, %cst_26 {dimension_numbers = #tpu.dot_dimension_numbers<[1], [1], [0], [0], [0, 0, 1, 0], [], []>} : vector<48x128xbf16>, vector<48x128xbf16>, vector<48x48xf32> -> vector<48x48xf32>
    %55 = arith.addf %54, %50 : vector<48x48xf32>
    %cst_27 = arith.constant dense<0xFF800000> : vector<48xf32>
    %56 = vector.multi_reduction <maximumf>, %55, %cst_27 [1] : vector<48x48xf32> to vector<48xf32>
    %57 = vector.shape_cast %56 : vector<48xf32> to vector<48x1xf32>
    %58 = vector.broadcast %57 : vector<48x1xf32> to vector<48x48xf32>
    %59 = arith.subf %55, %58 : vector<48x48xf32>
    %60 = math.exp %59 : vector<48x48xf32>
    %cst_28 = arith.constant dense<0.000000e+00> : vector<48xf32>
    %61 = vector.multi_reduction <add>, %60, %cst_28 [1] : vector<48x48xf32> to vector<48xf32>
    %62 = vector.shape_cast %61 : vector<48xf32> to vector<48x1xf32>
    %63 = tpu.reciprocal %62 {approx = true} : vector<48x1xf32> -> vector<48x1xf32>
    %64 = vector.broadcast %63 : vector<48x1xf32> to vector<48x48xf32>
    %65 = arith.mulf %60, %64 : vector<48x48xf32>
    %66 = arith.truncf %65 : vector<48x48xf32> to vector<48x48xbf16>
    %67 = vector.extract_strided_slice %49 {offsets = [0, 0], sizes = [48, 128], strides = [1, 1]} : vector<48x256xbf16> to vector<48x128xbf16>
    %cst_29 = arith.constant dense<0.000000e+00> : vector<48x128xf32>
    %68 = tpu.matmul %66, %67, %cst_29 {dimension_numbers = #tpu.dot_dimension_numbers<[1], [0], [0], [1], [0, 0, 1, 1], [], []>} : vector<48x48xbf16>, vector<48x128xbf16>, vector<48x128xf32> -> vector<48x128xf32>
    %69 = arith.addf %51, %68 : vector<48x128xf32>
    %70 = vector.extract_strided_slice %45 {offsets = [0, 128], sizes = [48, 128], strides = [1, 1]} : vector<48x512xbf16> to vector<48x128xbf16>
    %71 = vector.extract_strided_slice %45 {offsets = [0, 384], sizes = [48, 128], strides = [1, 1]} : vector<48x512xbf16> to vector<48x128xbf16>
    %cst_30 = arith.constant dense<0.000000e+00> : vector<48x48xf32>
    %72 = tpu.matmul %70, %71, %cst_30 {dimension_numbers = #tpu.dot_dimension_numbers<[1], [1], [0], [0], [0, 0, 1, 0], [], []>} : vector<48x128xbf16>, vector<48x128xbf16>, vector<48x48xf32> -> vector<48x48xf32>
    %73 = arith.addf %72, %50 : vector<48x48xf32>
    %cst_31 = arith.constant dense<0xFF800000> : vector<48xf32>
    %74 = vector.multi_reduction <maximumf>, %73, %cst_31 [1] : vector<48x48xf32> to vector<48xf32>
    %75 = vector.shape_cast %74 : vector<48xf32> to vector<48x1xf32>
    %76 = vector.broadcast %75 : vector<48x1xf32> to vector<48x48xf32>
    %77 = arith.subf %73, %76 : vector<48x48xf32>
    %78 = math.exp %77 : vector<48x48xf32>
    %cst_32 = arith.constant dense<0.000000e+00> : vector<48xf32>
    %79 = vector.multi_reduction <add>, %78, %cst_32 [1] : vector<48x48xf32> to vector<48xf32>
    %80 = vector.shape_cast %79 : vector<48xf32> to vector<48x1xf32>
    %81 = tpu.reciprocal %80 {approx = true} : vector<48x1xf32> -> vector<48x1xf32>
    %82 = vector.broadcast %81 : vector<48x1xf32> to vector<48x48xf32>
    %83 = arith.mulf %78, %82 : vector<48x48xf32>
    %84 = arith.truncf %83 : vector<48x48xf32> to vector<48x48xbf16>
    %85 = vector.extract_strided_slice %49 {offsets = [0, 128], sizes = [48, 128], strides = [1, 1]} : vector<48x256xbf16> to vector<48x128xbf16>
    %cst_33 = arith.constant dense<0.000000e+00> : vector<48x128xf32>
    %86 = tpu.matmul %84, %85, %cst_33 {dimension_numbers = #tpu.dot_dimension_numbers<[1], [0], [0], [1], [0, 0, 1, 1], [], []>} : vector<48x48xbf16>, vector<48x128xbf16>, vector<48x128xf32> -> vector<48x128xf32>
    %87 = arith.addf %69, %86 : vector<48x128xf32>
    %88 = arith.addf %8, %87 : vector<48x128xf32>
    %c0_34 = arith.constant 0 : index
    %c0_35 = arith.constant 0 : index
    %c0_36 = arith.constant 0 : index
    %89 = vector.load %arg25[%c0_34, %c0_35, %c0_36] : memref<1x1x128xf32, #tpu.memory_space<vmem>>, vector<1x1x128xf32>
    %90 = vector.shape_cast %89 : vector<1x1x128xf32> to vector<1x128xf32>
    %91 = vector.broadcast %90 : vector<1x128xf32> to vector<48x128xf32>
    %92 = arith.addf %88, %91 : vector<48x128xf32>
    %93 = vector.broadcast %4 : vector<1x128xf32> to vector<48x128xf32>
    %94 = arith.mulf %92, %93 : vector<48x128xf32>
    %cst_37 = arith.constant dense<0.000000e+00> : vector<48xf32>
    %95 = vector.multi_reduction <add>, %94, %cst_37 [1] : vector<48x128xf32> to vector<48xf32>
    %96 = vector.shape_cast %95 : vector<48xf32> to vector<48x1xf32>
    %cst_38 = arith.constant 3.125000e-02 : f32
    %97 = vector.broadcast %cst_38 : f32 to vector<48x1xf32>
    %98 = arith.mulf %96, %97 : vector<48x1xf32>
    %99 = vector.broadcast %98 : vector<48x1xf32> to vector<48x128xf32>
    %100 = arith.subf %94, %99 : vector<48x128xf32>
    %101 = vector.broadcast %4 : vector<1x128xf32> to vector<48x128xf32>
    %102 = arith.mulf %100, %101 : vector<48x128xf32>
    %103 = arith.mulf %102, %102 : vector<48x128xf32>
    %cst_39 = arith.constant dense<0.000000e+00> : vector<48xf32>
    %104 = vector.multi_reduction <add>, %103, %cst_39 [1] : vector<48x128xf32> to vector<48xf32>
    %105 = vector.shape_cast %104 : vector<48xf32> to vector<48x1xf32>
    %cst_40 = arith.constant 3.125000e-02 : f32
    %106 = vector.broadcast %cst_40 : f32 to vector<48x1xf32>
    %107 = arith.mulf %105, %106 : vector<48x1xf32>
    %cst_41 = arith.constant 9.99999974E-6 : f32
    %108 = vector.broadcast %cst_41 : f32 to vector<48x1xf32>
    %109 = arith.addf %107, %108 : vector<48x1xf32>
    %110 = math.rsqrt %109 : vector<48x1xf32>
    %111 = vector.broadcast %110 : vector<48x1xf32> to vector<48x128xf32>
    %112 = arith.mulf %102, %111 : vector<48x128xf32>
    %c0_42 = arith.constant 0 : index
    %c0_43 = arith.constant 0 : index
    %c0_44 = arith.constant 0 : index
    %113 = vector.load %arg26[%c0_42, %c0_43, %c0_44] : memref<1x1x128xf32, #tpu.memory_space<vmem>>, vector<1x1x128xf32>
    %114 = vector.shape_cast %113 : vector<1x1x128xf32> to vector<1x128xf32>
    %115 = vector.broadcast %114 : vector<1x128xf32> to vector<48x128xf32>
    %116 = arith.mulf %112, %115 : vector<48x128xf32>
    %c0_45 = arith.constant 0 : index
    %c0_46 = arith.constant 0 : index
    %c0_47 = arith.constant 0 : index
    %117 = vector.load %arg27[%c0_45, %c0_46, %c0_47] : memref<1x1x128xf32, #tpu.memory_space<vmem>>, vector<1x1x128xf32>
    %118 = vector.shape_cast %117 : vector<1x1x128xf32> to vector<1x128xf32>
    %119 = vector.broadcast %118 : vector<1x128xf32> to vector<48x128xf32>
    %120 = arith.addf %116, %119 : vector<48x128xf32>
    %121 = arith.truncf %120 : vector<48x128xf32> to vector<48x128xbf16>
    %c0_48 = arith.constant 0 : index
    %c0_49 = arith.constant 0 : index
    %c0_50 = arith.constant 0 : index
    %122 = vector.load %arg28[%c0_48, %c0_49, %c0_50] : memref<1x128x128xbf16, #tpu.memory_space<vmem>>, vector<1x128x128xbf16>
    %123 = vector.shape_cast %122 : vector<1x128x128xbf16> to vector<128x128xbf16>
    %cst_51 = arith.constant dense<0.000000e+00> : vector<48x128xf32>
    %124 = tpu.matmul %121, %123, %cst_51 {dimension_numbers = #tpu.dot_dimension_numbers<[1], [0], [0], [1], [0, 0, 1, 1], [], []>} : vector<48x128xbf16>, vector<128x128xbf16>, vector<48x128xf32> -> vector<48x128xf32>
    %c0_52 = arith.constant 0 : index
    %c0_53 = arith.constant 0 : index
    %c0_54 = arith.constant 0 : index
    %125 = vector.load %arg29[%c0_52, %c0_53, %c0_54] : memref<1x1x128xf32, #tpu.memory_space<vmem>>, vector<1x1x128xf32>
    %126 = vector.shape_cast %125 : vector<1x1x128xf32> to vector<1x128xf32>
    %127 = vector.broadcast %126 : vector<1x128xf32> to vector<48x128xf32>
    %128 = arith.addf %124, %127 : vector<48x128xf32>
    %cst_55 = arith.constant 5.000000e-01 : f32
    %129 = vector.broadcast %cst_55 : f32 to vector<48x128xf32>
    %130 = arith.mulf %129, %128 : vector<48x128xf32>
    %cst_56 = arith.constant 4.471500e-02 : f32
    %131 = vector.broadcast %cst_56 : f32 to vector<48x128xf32>
    %132 = arith.mulf %131, %128 : vector<48x128xf32>
    %133 = arith.mulf %132, %128 : vector<48x128xf32>
    %134 = arith.mulf %133, %128 : vector<48x128xf32>
    %135 = arith.addf %128, %134 : vector<48x128xf32>
    %cst_57 = arith.constant 0.797884583 : f32
    %136 = vector.broadcast %cst_57 : f32 to vector<48x128xf32>
    %137 = arith.mulf %136, %135 : vector<48x128xf32>
    %138 = math.tanh %137 : vector<48x128xf32>
    %cst_58 = arith.constant 1.000000e+00 : f32
    %139 = vector.broadcast %cst_58 : f32 to vector<48x128xf32>
    %140 = arith.addf %139, %138 : vector<48x128xf32>
    %141 = arith.mulf %130, %140 : vector<48x128xf32>
    %142 = arith.truncf %141 : vector<48x128xf32> to vector<48x128xbf16>
    %c0_59 = arith.constant 0 : index
    %c0_60 = arith.constant 0 : index
    %c0_61 = arith.constant 0 : index
    %143 = vector.load %arg30[%c0_59, %c0_60, %c0_61] : memref<1x128x128xbf16, #tpu.memory_space<vmem>>, vector<1x128x128xbf16>
    %144 = vector.shape_cast %143 : vector<1x128x128xbf16> to vector<128x128xbf16>
    %cst_62 = arith.constant dense<0.000000e+00> : vector<48x128xf32>
    %145 = tpu.matmul %142, %144, %cst_62 {dimension_numbers = #tpu.dot_dimension_numbers<[1], [0], [0], [1], [0, 0, 1, 1], [], []>} : vector<48x128xbf16>, vector<128x128xbf16>, vector<48x128xf32> -> vector<48x128xf32>
    %146 = arith.addf %92, %145 : vector<48x128xf32>
    %c0_63 = arith.constant 0 : index
    %c0_64 = arith.constant 0 : index
    %c0_65 = arith.constant 0 : index
    %147 = vector.load %arg31[%c0_63, %c0_64, %c0_65] : memref<1x1x128xf32, #tpu.memory_space<vmem>>, vector<1x1x128xf32>
    %148 = vector.shape_cast %147 : vector<1x1x128xf32> to vector<1x128xf32>
    %149 = vector.broadcast %148 : vector<1x128xf32> to vector<48x128xf32>
    %150 = arith.addf %146, %149 : vector<48x128xf32>
    %c0_66 = arith.constant 0 : index
    %c0_67 = arith.constant 0 : index
    %151 = vector.load %arg40[%c0_66, %c0_67] : memref<48x128xf32, #tpu.memory_space<vmem>>, vector<48x128xf32>
    tpu.vector_store %arg40[%c0_66, %c0_67], %150 {strides = array<i32>} : memref<48x128xf32, #tpu.memory_space<vmem>>, vector<48x128xf32>,
    %c1_i32 = arith.constant 1 : i32
    %152 = arith.cmpi eq, %arg1, %c1_i32 : i32
    %153 = arith.extui %152 : i1 to i32
    %c0_i32_68 = arith.constant 0 : i32
    %154 = arith.cmpi ne, %153, %c0_i32_68 : i32
    scf.if %154 {
      %155 = vector.extract_strided_slice %150 {offsets = [16, 0], sizes = [16, 128], strides = [1, 1]} : vector<48x128xf32> to vector<16x128xf32>
      %156 = vector.extract_strided_slice %150 {offsets = [32, 0], sizes = [16, 128], strides = [1, 1]} : vector<48x128xf32> to vector<16x128xf32>
      %157 = vector.broadcast %4 : vector<1x128xf32> to vector<16x128xf32>
      %158 = arith.mulf %156, %157 : vector<16x128xf32>
      %cst_69 = arith.constant dense<0.000000e+00> : vector<16xf32>
      %159 = vector.multi_reduction <add>, %158, %cst_69 [1] : vector<16x128xf32> to vector<16xf32>
      %160 = vector.shape_cast %159 : vector<16xf32> to vector<16x1xf32>
      %cst_70 = arith.constant 3.125000e-02 : f32
      %161 = vector.broadcast %cst_70 : f32 to vector<16x1xf32>
      %162 = arith.mulf %160, %161 : vector<16x1xf32>
      %163 = vector.broadcast %162 : vector<16x1xf32> to vector<16x128xf32>
      %164 = arith.subf %158, %163 : vector<16x128xf32>
      %165 = vector.broadcast %4 : vector<1x128xf32> to vector<16x128xf32>
      %166 = arith.mulf %164, %165 : vector<16x128xf32>
      %167 = arith.mulf %166, %166 : vector<16x128xf32>
      %cst_71 = arith.constant dense<0.000000e+00> : vector<16xf32>
      %168 = vector.multi_reduction <add>, %167, %cst_71 [1] : vector<16x128xf32> to vector<16xf32>
      %169 = vector.shape_cast %168 : vector<16xf32> to vector<16x1xf32>
      %cst_72 = arith.constant 3.125000e-02 : f32
      %170 = vector.broadcast %cst_72 : f32 to vector<16x1xf32>
      %171 = arith.mulf %169, %170 : vector<16x1xf32>
      %cst_73 = arith.constant 9.99999974E-6 : f32
      %172 = vector.broadcast %cst_73 : f32 to vector<16x1xf32>
      %173 = arith.addf %171, %172 : vector<16x1xf32>
      %174 = math.rsqrt %173 : vector<16x1xf32>
      %175 = vector.broadcast %174 : vector<16x1xf32> to vector<16x128xf32>
      %176 = arith.mulf %166, %175 : vector<16x128xf32>
      %c0_74 = arith.constant 0 : index
      %c0_75 = arith.constant 0 : index
      %177 = vector.load %arg32[%c0_74, %c0_75] : memref<1x128xf32, #tpu.memory_space<vmem>>, vector<1x128xf32>
      %178 = vector.broadcast %177 : vector<1x128xf32> to vector<16x128xf32>
      %179 = arith.mulf %176, %178 : vector<16x128xf32>
      %c0_76 = arith.constant 0 : index
      %c0_77 = arith.constant 0 : index
      %180 = vector.load %arg33[%c0_76, %c0_77] : memref<1x128xf32, #tpu.memory_space<vmem>>, vector<1x128xf32>
      %181 = vector.broadcast %180 : vector<1x128xf32> to vector<16x128xf32>
      %182 = arith.addf %179, %181 : vector<16x128xf32>
      %183 = vector.broadcast %4 : vector<1x128xf32> to vector<16x128xf32>
      %184 = arith.mulf %155, %183 : vector<16x128xf32>
      %cst_78 = arith.constant dense<0.000000e+00> : vector<16xf32>
      %185 = vector.multi_reduction <add>, %184, %cst_78 [1] : vector<16x128xf32> to vector<16xf32>
      %186 = vector.shape_cast %185 : vector<16xf32> to vector<16x1xf32>
      %cst_79 = arith.constant 3.125000e-02 : f32
      %187 = vector.broadcast %cst_79 : f32 to vector<16x1xf32>
      %188 = arith.mulf %186, %187 : vector<16x1xf32>
      %189 = vector.broadcast %188 : vector<16x1xf32> to vector<16x128xf32>
      %190 = arith.subf %184, %189 : vector<16x128xf32>
      %191 = vector.broadcast %4 : vector<1x128xf32> to vector<16x128xf32>
      %192 = arith.mulf %190, %191 : vector<16x128xf32>
      %193 = arith.mulf %192, %192 : vector<16x128xf32>
      %cst_80 = arith.constant dense<0.000000e+00> : vector<16xf32>
      %194 = vector.multi_reduction <add>, %193, %cst_80 [1] : vector<16x128xf32> to vector<16xf32>
      %195 = vector.shape_cast %194 : vector<16xf32> to vector<16x1xf32>
      %cst_81 = arith.constant 3.125000e-02 : f32
      %196 = vector.broadcast %cst_81 : f32 to vector<16x1xf32>
      %197 = arith.mulf %195, %196 : vector<16x1xf32>
      %cst_82 = arith.constant 9.99999974E-6 : f32
      %198 = vector.broadcast %cst_82 : f32 to vector<16x1xf32>
      %199 = arith.addf %197, %198 : vector<16x1xf32>
      %200 = math.rsqrt %199 : vector<16x1xf32>
      %201 = vector.broadcast %200 : vector<16x1xf32> to vector<16x128xf32>
      %202 = arith.mulf %192, %201 : vector<16x128xf32>
      %c0_83 = arith.constant 0 : index
      %c0_84 = arith.constant 0 : index
      %203 = vector.load %arg32[%c0_83, %c0_84] : memref<1x128xf32, #tpu.memory_space<vmem>>, vector<1x128xf32>
      %204 = vector.broadcast %203 : vector<1x128xf32> to vector<16x128xf32>
      %205 = arith.mulf %202, %204 : vector<16x128xf32>
      %c0_85 = arith.constant 0 : index
      %c0_86 = arith.constant 0 : index
      %206 = vector.load %arg33[%c0_85, %c0_86] : memref<1x128xf32, #tpu.memory_space<vmem>>, vector<1x128xf32>
      %207 = vector.broadcast %206 : vector<1x128xf32> to vector<16x128xf32>
      %208 = arith.addf %205, %207 : vector<16x128xf32>
      %c0_87 = arith.constant 0 : index
      %c0_88 = arith.constant 0 : index
      %209 = vector.load %arg34[%c0_87, %c0_88] : memref<128x128xf32, #tpu.memory_space<vmem>>, vector<128x128xf32>
      %cst_89 = arith.constant dense<0.000000e+00> : vector<16x128xf32>
      %210 = tpu.matmul %182, %209, %cst_89 {dimension_numbers = #tpu.dot_dimension_numbers<[1], [0], [0], [1], [0, 0, 1, 1], [], []>} : vector<16x128xf32>, vector<128x128xf32>, vector<16x128xf32> -> vector<16x128xf32>
      %c0_90 = arith.constant 0 : index
      %c0_91 = arith.constant 0 : index
      %211 = vector.load %arg35[%c0_90, %c0_91] : memref<1x128xf32, #tpu.memory_space<vmem>>, vector<1x128xf32>
      %212 = vector.broadcast %211 : vector<1x128xf32> to vector<16x128xf32>
      %213 = arith.addf %210, %212 : vector<16x128xf32>
      %c0_92 = arith.constant 0 : index
      %c0_93 = arith.constant 0 : index
      %214 = vector.load %arg38[%c0_92, %c0_93] : memref<16x128xf32, #tpu.memory_space<vmem>>, vector<16x128xf32>
      tpu.vector_store %arg38[%c0_92, %c0_93], %213 {strides = array<i32>} : memref<16x128xf32, #tpu.memory_space<vmem>>, vector<16x128xf32>,
      %c0_94 = arith.constant 0 : index
      %c0_95 = arith.constant 0 : index
      %215 = vector.load %arg36[%c0_94, %c0_95] : memref<128x128xf32, #tpu.memory_space<vmem>>, vector<128x128xf32>
      %cst_96 = arith.constant dense<0.000000e+00> : vector<16x128xf32>
      %216 = tpu.matmul %208, %215, %cst_96 {dimension_numbers = #tpu.dot_dimension_numbers<[1], [0], [0], [1], [0, 0, 1, 1], [], []>} : vector<16x128xf32>, vector<128x128xf32>, vector<16x128xf32> -> vector<16x128xf32>
      %c0_97 = arith.constant 0 : index
      %c0_98 = arith.constant 0 : index
      %217 = vector.load %arg37[%c0_97, %c0_98] : memref<1x128xf32, #tpu.memory_space<vmem>>, vector<1x128xf32>
      %218 = vector.broadcast %217 : vector<1x128xf32> to vector<16x128xf32>
      %219 = arith.addf %216, %218 : vector<16x128xf32>
      %220 = math.tanh %219 : vector<16x128xf32>
      %c0_99 = arith.constant 0 : index
      %c0_100 = arith.constant 0 : index
      %221 = vector.load %arg39[%c0_99, %c0_100] : memref<16x128xf32, #tpu.memory_space<vmem>>, vector<16x128xf32>
      tpu.vector_store %arg39[%c0_99, %c0_100], %220 {strides = array<i32>} : memref<16x128xf32, #tpu.memory_space<vmem>>, vector<16x128xf32>,
    } else {
    }
    return
  }
  func.func @transform_0(%arg0: i32, %arg1: i32) -> (i32, i32) {
    %c0_i32 = arith.constant 0 : i32
    %c0_i32_0 = arith.constant 0 : i32
    return %arg0, %c0_i32 : i32, i32
  }
  func.func @transform_1(%arg0: i32, %arg1: i32) -> (i32, i32) {
    %c0_i32 = arith.constant 0 : i32
    %c0_i32_0 = arith.constant 0 : i32
    return %arg0, %c0_i32 : i32, i32
  }
  func.func @transform_2(%arg0: i32, %arg1: i32) -> (i32, i32) {
    %c0_i32 = arith.constant 0 : i32
    %c0_i32_0 = arith.constant 0 : i32
    return %arg0, %c0_i32 : i32, i32
  }
  func.func @transform_3(%arg0: i32, %arg1: i32) -> (i32, i32) {
    %c0_i32 = arith.constant 0 : i32
    %c0_i32_0 = arith.constant 0 : i32
    return %arg0, %c0_i32 : i32, i32
  }
  func.func @transform_4(%arg0: i32, %arg1: i32) -> (i32, i32) {
    %c0_i32 = arith.constant 0 : i32
    %c0_i32_0 = arith.constant 0 : i32
    return %arg0, %c0_i32 : i32, i32
  }
  func.func @transform_5(%arg0: i32, %arg1: i32) -> (i32, i32) {
    %c0_i32 = arith.constant 0 : i32
    %c0_i32_0 = arith.constant 0 : i32
    %c0_i32_1 = arith.constant 0 : i32
    return %c0_i32, %c0_i32_0 : i32, i32
  }
  func.func @transform_6(%arg0: i32, %arg1: i32) -> (i32, i32) {
    %c0_i32 = arith.constant 0 : i32
    %c0_i32_0 = arith.constant 0 : i32
    %c0_i32_1 = arith.constant 0 : i32
    return %c0_i32, %c0_i32_0 : i32, i32
  }
  func.func @transform_7(%arg0: i32, %arg1: i32) -> (i32, i32) {
    %c0_i32 = arith.constant 0 : i32
    %c0_i32_0 = arith.constant 0 : i32
    %c0_i32_1 = arith.constant 0 : i32
    return %c0_i32, %c0_i32_0 : i32, i32
  }
  func.func @transform_8(%arg0: i32, %arg1: i32) -> (i32, i32) {
    %c0_i32 = arith.constant 0 : i32
    %c0_i32_0 = arith.constant 0 : i32
    %c0_i32_1 = arith.constant 0 : i32
    return %c0_i32, %c0_i32_0 : i32, i32
  }
  func.func @transform_9(%arg0: i32, %arg1: i32) -> (i32, i32) {
    %c0_i32 = arith.constant 0 : i32
    %c0_i32_0 = arith.constant 0 : i32
    %c0_i32_1 = arith.constant 0 : i32
    return %c0_i32, %c0_i32_0 : i32, i32
  }
  func.func @transform_10(%arg0: i32, %arg1: i32) -> (i32, i32) {
    %c0_i32 = arith.constant 0 : i32
    %c0_i32_0 = arith.constant 0 : i32
    %c0_i32_1 = arith.constant 0 : i32
    return %c0_i32, %c0_i32_0 : i32, i32
  }
  func.func @transform_11(%arg0: i32, %arg1: i32) -> (i32, i32) {
    %c0_i32 = arith.constant 0 : i32
    %c0_i32_0 = arith.constant 0 : i32
    %c0_i32_1 = arith.constant 0 : i32
    return %c0_i32, %c0_i32_0 : i32, i32
  }
  func.func @transform_12(%arg0: i32, %arg1: i32) -> (i32, i32) {
    %c0_i32 = arith.constant 0 : i32
    %c0_i32_0 = arith.constant 0 : i32
    %c0_i32_1 = arith.constant 0 : i32
    return %c0_i32, %c0_i32_0 : i32, i32
  }
  func.func @transform_13(%arg0: i32, %arg1: i32) -> (i32, i32) {
    %c0_i32 = arith.constant 0 : i32
    %c0_i32_0 = arith.constant 0 : i32
    %c0_i32_1 = arith.constant 0 : i32
    return %c0_i32, %c0_i32_0 : i32, i32
  }
  func.func @transform_14(%arg0: i32, %arg1: i32) -> (i32, i32) {
    %c0_i32 = arith.constant 0 : i32
    %c0_i32_0 = arith.constant 0 : i32
    %c0_i32_1 = arith.constant 0 : i32
    return %c0_i32, %c0_i32_0 : i32, i32
  }
  func.func @transform_15(%arg0: i32, %arg1: i32) -> (i32, i32) {
    %c0_i32 = arith.constant 0 : i32
    %c0_i32_0 = arith.constant 0 : i32
    %c0_i32_1 = arith.constant 0 : i32
    return %c0_i32, %c0_i32_0 : i32, i32
  }
  func.func @transform_16(%arg0: i32, %arg1: i32) -> (i32, i32) {
    %c0_i32 = arith.constant 0 : i32
    %c0_i32_0 = arith.constant 0 : i32
    %c0_i32_1 = arith.constant 0 : i32
    return %c0_i32, %c0_i32_0 : i32, i32
  }
  func.func @transform_17(%arg0: i32, %arg1: i32) -> (i32, i32) {
    %c0_i32 = arith.constant 0 : i32
    %c0_i32_0 = arith.constant 0 : i32
    %c0_i32_1 = arith.constant 0 : i32
    return %c0_i32, %c0_i32_0 : i32, i32
  }
  func.func @transform_18(%arg0: i32, %arg1: i32) -> (i32, i32, i32) {
    %c0_i32 = arith.constant 0 : i32
    %c0_i32_0 = arith.constant 0 : i32
    %c0_i32_1 = arith.constant 0 : i32
    return %arg1, %c0_i32, %c0_i32_0 : i32, i32, i32
  }
  func.func @transform_19(%arg0: i32, %arg1: i32) -> (i32, i32, i32) {
    %c0_i32 = arith.constant 0 : i32
    %c0_i32_0 = arith.constant 0 : i32
    %c0_i32_1 = arith.constant 0 : i32
    return %arg1, %c0_i32, %c0_i32_0 : i32, i32, i32
  }
  func.func @transform_20(%arg0: i32, %arg1: i32) -> (i32, i32, i32) {
    %c0_i32 = arith.constant 0 : i32
    %c0_i32_0 = arith.constant 0 : i32
    %c0_i32_1 = arith.constant 0 : i32
    return %arg1, %c0_i32, %c0_i32_0 : i32, i32, i32
  }
  func.func @transform_21(%arg0: i32, %arg1: i32) -> (i32, i32, i32) {
    %c0_i32 = arith.constant 0 : i32
    %c0_i32_0 = arith.constant 0 : i32
    %c0_i32_1 = arith.constant 0 : i32
    return %arg1, %c0_i32, %c0_i32_0 : i32, i32, i32
  }
  func.func @transform_22(%arg0: i32, %arg1: i32) -> (i32, i32, i32) {
    %c0_i32 = arith.constant 0 : i32
    %c0_i32_0 = arith.constant 0 : i32
    %c0_i32_1 = arith.constant 0 : i32
    return %arg1, %c0_i32, %c0_i32_0 : i32, i32, i32
  }
  func.func @transform_23(%arg0: i32, %arg1: i32) -> (i32, i32, i32) {
    %c0_i32 = arith.constant 0 : i32
    %c0_i32_0 = arith.constant 0 : i32
    %c0_i32_1 = arith.constant 0 : i32
    return %arg1, %c0_i32, %c0_i32_0 : i32, i32, i32
  }
  func.func @transform_24(%arg0: i32, %arg1: i32) -> (i32, i32, i32) {
    %c0_i32 = arith.constant 0 : i32
    %c0_i32_0 = arith.constant 0 : i32
    %c0_i32_1 = arith.constant 0 : i32
    return %arg1, %c0_i32, %c0_i32_0 : i32, i32, i32
  }
  func.func @transform_25(%arg0: i32, %arg1: i32) -> (i32, i32, i32) {
    %c0_i32 = arith.constant 0 : i32
    %c0_i32_0 = arith.constant 0 : i32
    %c0_i32_1 = arith.constant 0 : i32
    return %arg1, %c0_i32, %c0_i32_0 : i32, i32, i32
  }
  func.func @transform_26(%arg0: i32, %arg1: i32) -> (i32, i32, i32) {
    %c0_i32 = arith.constant 0 : i32
    %c0_i32_0 = arith.constant 0 : i32
    %c0_i32_1 = arith.constant 0 : i32
    return %arg1, %c0_i32, %c0_i32_0 : i32, i32, i32
  }
  func.func @transform_27(%arg0: i32, %arg1: i32) -> (i32, i32, i32) {
    %c0_i32 = arith.constant 0 : i32
    %c0_i32_0 = arith.constant 0 : i32
    %c0_i32_1 = arith.constant 0 : i32
    return %arg1, %c0_i32, %c0_i32_0 : i32, i32, i32
  }
  func.func @transform_28(%arg0: i32, %arg1: i32) -> (i32, i32, i32) {
    %c0_i32 = arith.constant 0 : i32
    %c0_i32_0 = arith.constant 0 : i32
    %c0_i32_1 = arith.constant 0 : i32
    return %arg1, %c0_i32, %c0_i32_0 : i32, i32, i32
  }
  func.func @transform_29(%arg0: i32, %arg1: i32) -> (i32, i32, i32) {
    %c0_i32 = arith.constant 0 : i32
    %c0_i32_0 = arith.constant 0 : i32
    %c0_i32_1 = arith.constant 0 : i32
    return %arg1, %c0_i32, %c0_i32_0 : i32, i32, i32
  }
  func.func @transform_30(%arg0: i32, %arg1: i32) -> (i32, i32) {
    %c0_i32 = arith.constant 0 : i32
    %c0_i32_0 = arith.constant 0 : i32
    %c0_i32_1 = arith.constant 0 : i32
    return %c0_i32, %c0_i32_0 : i32, i32
  }
  func.func @transform_31(%arg0: i32, %arg1: i32) -> (i32, i32) {
    %c0_i32 = arith.constant 0 : i32
    %c0_i32_0 = arith.constant 0 : i32
    %c0_i32_1 = arith.constant 0 : i32
    return %c0_i32, %c0_i32_0 : i32, i32
  }
  func.func @transform_32(%arg0: i32, %arg1: i32) -> (i32, i32) {
    %c0_i32 = arith.constant 0 : i32
    %c0_i32_0 = arith.constant 0 : i32
    %c0_i32_1 = arith.constant 0 : i32
    return %c0_i32, %c0_i32_0 : i32, i32
  }
  func.func @transform_33(%arg0: i32, %arg1: i32) -> (i32, i32) {
    %c0_i32 = arith.constant 0 : i32
    %c0_i32_0 = arith.constant 0 : i32
    %c0_i32_1 = arith.constant 0 : i32
    return %c0_i32, %c0_i32_0 : i32, i32
  }
  func.func @transform_34(%arg0: i32, %arg1: i32) -> (i32, i32) {
    %c0_i32 = arith.constant 0 : i32
    %c0_i32_0 = arith.constant 0 : i32
    %c0_i32_1 = arith.constant 0 : i32
    return %c0_i32, %c0_i32_0 : i32, i32
  }
  func.func @transform_35(%arg0: i32, %arg1: i32) -> (i32, i32) {
    %c0_i32 = arith.constant 0 : i32
    %c0_i32_0 = arith.constant 0 : i32
    %c0_i32_1 = arith.constant 0 : i32
    return %c0_i32, %c0_i32_0 : i32, i32
  }
  func.func @transform_36(%arg0: i32, %arg1: i32) -> (i32, i32) {
    %c0_i32 = arith.constant 0 : i32
    %c0_i32_0 = arith.constant 0 : i32
    return %arg0, %c0_i32 : i32, i32
  }
  func.func @transform_37(%arg0: i32, %arg1: i32) -> (i32, i32) {
    %c0_i32 = arith.constant 0 : i32
    %c0_i32_0 = arith.constant 0 : i32
    return %arg0, %c0_i32 : i32, i32
  }
}

</mosaic_0001>

<llo_original>
// kernel: meta_dt_forward.1
$region0: #{meta_dt_forward.1}
  #allocation0 [shape = 'u32[]', space=smem, size = 0x4, offset = 0x4, fixed_abs, tag = 'smem constant byte address 0x4 - core index']
  #allocation1 [shape = 'u32[144,128]{1,0:T(1,128)}', space=vmem, size = 0x12000, scoped, tag = 'internal scratch']
  #allocation2 [shape = 'f32[48,128]{1,0:T(8,128)}', space=vmem, size = 0x6000, scoped, tag = 'scratch operand']
  %s0 = inlined_call_operand.smem [shape: u32[38], index: -1, kind: input, shape index: {}]
  %s1 = sld [smem:[%s0]]
  %s2 = scalar_lea.smem %s0, 1
  %s3 = sld [smem:[%s2]]
  %s4 = scalar_lea.smem %s0, 2
  %s5 = sld [smem:[%s4]]
  %s6 = scalar_lea.smem %s0, 3
  %s7 = sld [smem:[%s6]]
  %s8 = scalar_lea.smem %s0, 4
  %s9 = sld [smem:[%s8]]
  %s10 = scalar_lea.smem %s0, 5
  %s11 = sld [smem:[%s10]]
  %s12 = scalar_lea.smem %s0, 6
  %s13 = sld [smem:[%s12]]
  %s14 = scalar_lea.smem %s0, 7
  %s15 = sld [smem:[%s14]]
  %s16 = scalar_lea.smem %s0, 8
  %s17 = sld [smem:[%s16]]
  %s18 = scalar_lea.smem %s0, 9
  %s19 = sld [smem:[%s18]]
  %s20 = scalar_lea.smem %s0, 10
  %s21 = sld [smem:[%s20]]
  %s22 = scalar_lea.smem %s0, 11
  %s23 = sld [smem:[%s22]]
  %s24 = scalar_lea.smem %s0, 12
  %s25 = sld [smem:[%s24]]
  %s26 = scalar_lea.smem %s0, 13
  %s27 = sld [smem:[%s26]]
  %s28 = scalar_lea.smem %s0, 14
  %s29 = sld [smem:[%s28]]
  %s30 = scalar_lea.smem %s0, 15
  %s31 = sld [smem:[%s30]]
  %s32 = scalar_lea.smem %s0, 16
  %s33 = sld [smem:[%s32]]
  %s34 = scalar_lea.smem %s0, 17
  %s35 = sld [smem:[%s34]]
  %s36 = scalar_lea.smem %s0, 18
  %s37 = sld [smem:[%s36]]
  %s38 = scalar_lea.smem %s0, 19
  %s39 = sld [smem:[%s38]]
  %s40 = scalar_lea.smem %s0, 20
  %s41 = sld [smem:[%s40]]
  %s42 = scalar_lea.smem %s0, 21
  %s43 = sld [smem:[%s42]]
  %s44 = scalar_lea.smem %s0, 22
  %s45 = sld [smem:[%s44]]
  %s46 = scalar_lea.smem %s0, 23
  %s47 = sld [smem:[%s46]]
  %s48 = scalar_lea.smem %s0, 24
  %s49 = sld [smem:[%s48]]
  %s50 = scalar_lea.smem %s0, 25
  %s51 = sld [smem:[%s50]]
  %s52 = scalar_lea.smem %s0, 26
  %s53 = sld [smem:[%s52]]
  %s54 = scalar_lea.smem %s0, 27
  %s55 = sld [smem:[%s54]]
  %s56 = scalar_lea.smem %s0, 28
  %s57 = sld [smem:[%s56]]
  %s58 = scalar_lea.smem %s0, 29
  %s59 = sld [smem:[%s58]]
  %s60 = scalar_lea.smem %s0, 30
  %s61 = sld [smem:[%s60]]
  %s62 = scalar_lea.smem %s0, 31
  %s63 = sld [smem:[%s62]]
  %s64 = scalar_lea.smem %s0, 32
  %s65 = sld [smem:[%s64]]
  %s66 = scalar_lea.smem %s0, 33
  %s67 = sld [smem:[%s66]]
  %s68 = scalar_lea.smem %s0, 34
  %s69 = sld [smem:[%s68]]
  %s70 = scalar_lea.smem %s0, 35
  %s71 = sld [smem:[%s70]]
  %s72 = scalar_lea.smem %s0, 36
  %s73 = sld [smem:[%s72]]
  %s74 = scalar_lea.smem %s0, 37
  %s75 = sld [smem:[%s74]]
  %76 = xla_tuple %s73, %s75
  %s77 = sld [smem:[#allocation0]]
  $region193: #{meta_dt_forward.1} parent=0
    _
  %s79 = ssub.s32 1, %s77
  %s80 = scalar_select 0, %s79, %s77
  loop: start=0, step=1, limit=4
  $region2: #{meta_dt_forward.1} parent=0 // loop_pre_header
    _
  $region3: #{meta_dt_forward.1} parent=0 // loop_header
    %s82 = sphi 0, %s86
    %p83 = scmp.ge.s32.totalorder %s82, 4
    %s89 = sphi 0, %s101
    %s90 = sphi 0, %s97
    %s91 = sphi 0, %s89
    %s92 = sphi 0, %s90
    %s93 = sphi 0, %s91
    %s94 = sphi 0, %s92
    %s104 = sphi 0, %s106
    %s107 = sphi 0, %s104
    %s108 = sphi 0, %s107
    %s124 = sphi 0, %s108
    %s130 = sphi 0, %s132
    %s133 = sphi 0, %s130
    %s134 = sphi 0, %s133
    %s150 = sphi 0, %s134
    %s156 = sphi 0, %s158
    %s159 = sphi 0, %s156
    %s160 = sphi 0, %s159
    %s176 = sphi 0, %s160
    %s182 = sphi 0, %s184
    %s185 = sphi 0, %s182
    %s186 = sphi 0, %s185
    %s202 = sphi 0, %s186
    %s208 = sphi 0, %s210
    %s211 = sphi 0, %s208
    %s212 = sphi 0, %s211
    %s228 = sphi 0, %s212
    %s232 = sphi 0, %s232
    %s234 = sphi 0, %s232
    %s235 = sphi 0, %s234
    %s249 = sphi 0, %s235
    %s253 = sphi 0, %s253
    %s255 = sphi 0, %s253
    %s256 = sphi 0, %s255
    %s270 = sphi 0, %s256
    %s274 = sphi 0, %s274
    %s276 = sphi 0, %s274
    %s277 = sphi 0, %s276
    %s291 = sphi 0, %s277
    %s295 = sphi 0, %s295
    %s297 = sphi 0, %s295
    %s298 = sphi 0, %s297
    %s312 = sphi 0, %s298
    %s316 = sphi 0, %s316
    %s318 = sphi 0, %s316
    %s319 = sphi 0, %s318
    %s333 = sphi 0, %s319
    %s337 = sphi 0, %s337
    %s339 = sphi 0, %s337
    %s340 = sphi 0, %s339
    %s354 = sphi 0, %s340
    %s358 = sphi 0, %s358
    %s360 = sphi 0, %s358
    %s361 = sphi 0, %s360
    %s375 = sphi 0, %s361
    %s379 = sphi 0, %s379
    %s381 = sphi 0, %s379
    %s382 = sphi 0, %s381
    %s396 = sphi 0, %s382
    %s400 = sphi 0, %s400
    %s402 = sphi 0, %s400
    %s403 = sphi 0, %s402
    %s417 = sphi 0, %s403
    %s421 = sphi 0, %s421
    %s423 = sphi 0, %s421
    %s424 = sphi 0, %s423
    %s438 = sphi 0, %s424
    %s442 = sphi 0, %s442
    %s444 = sphi 0, %s442
    %s445 = sphi 0, %s444
    %s459 = sphi 0, %s445
    %s463 = sphi 0, %s463
    %s465 = sphi 0, %s463
    %s466 = sphi 0, %s465
    %s480 = sphi 0, %s466
    %s484 = sphi 0, %s484
    %s486 = sphi 0, %s484
    %s487 = sphi 0, %s486
    %s501 = sphi 0, %s487
    %s507 = sphi 0, %s509
    %s510 = sphi 0, %s507
    %s511 = sphi 0, %s510
    %s527 = sphi 0, %s511
    %s533 = sphi 0, %s535
    %s536 = sphi 0, %s533
    %s537 = sphi 0, %s536
    %s553 = sphi 0, %s537
    %s559 = sphi 0, %s561
    %s562 = sphi 0, %s559
    %s563 = sphi 0, %s562
    %s579 = sphi 0, %s563
    %s585 = sphi 0, %s587
    %s588 = sphi 0, %s585
    %s589 = sphi 0, %s588
    %s605 = sphi 0, %s589
    %s611 = sphi 0, %s613
    %s614 = sphi 0, %s611
    %s615 = sphi 0, %s614
    %s631 = sphi 0, %s615
    %s637 = sphi 0, %s639
    %s640 = sphi 0, %s637
    %s641 = sphi 0, %s640
    %s657 = sphi 0, %s641
    %s663 = sphi 0, %s665
    %s666 = sphi 0, %s663
    %s667 = sphi 0, %s666
    %s683 = sphi 0, %s667
    %s689 = sphi 0, %s691
    %s692 = sphi 0, %s689
    %s693 = sphi 0, %s692
    %s709 = sphi 0, %s693
    %s715 = sphi 0, %s717
    %s718 = sphi 0, %s715
    %s719 = sphi 0, %s718
    %s735 = sphi 0, %s719
    %s741 = sphi 0, %s743
    %s744 = sphi 0, %s741
    %s745 = sphi 0, %s744
    %s761 = sphi 0, %s745
    %s767 = sphi 0, %s769
    %s770 = sphi 0, %s767
    %s771 = sphi 0, %s770
    %s787 = sphi 0, %s771
    %s793 = sphi 0, %s795
    %s796 = sphi 0, %s793
    %s797 = sphi 0, %s796
    %s813 = sphi 0, %s797
    %s817 = sphi 0, %s817
    %s819 = sphi 0, %s817
    %s820 = sphi 0, %s819
    %s834 = sphi 0, %s820
    %s838 = sphi 0, %s838
    %s840 = sphi 0, %s838
    %s841 = sphi 0, %s840
    %s855 = sphi 0, %s841
    %s859 = sphi 0, %s859
    %s861 = sphi 0, %s859
    %s862 = sphi 0, %s861
    %s876 = sphi 0, %s862
    %s880 = sphi 0, %s880
    %s882 = sphi 0, %s880
    %s883 = sphi 0, %s882
    %s897 = sphi 0, %s883
    %s901 = sphi 0, %s901
    %s903 = sphi 0, %s901
    %s904 = sphi 0, %s903
    %s918 = sphi 0, %s904
    %s922 = sphi 0, %s922
    %s924 = sphi 0, %s922
    %s925 = sphi 0, %s924
    %s939 = sphi 0, %s925
    %s945 = sphi 0, %s947
    %s948 = sphi 0, %s945
    %s949 = sphi 0, %s948
    %s965 = sphi 0, %s949
    %s971 = sphi 0, %s973
    %s974 = sphi 0, %s971
    %s975 = sphi 0, %s974
    %s991 = sphi 0, %s975
  $region4: #{meta_dt_forward.1} parent=0 // loop_header_branch
    %85 = sbr.rel (%p83) target = $region8
  $region5: #{meta_dt_forward.1} parent=0 // loop_body
    %s87 = ssub.s32 %s82, 1
    %s88 = ssub.s32 %s82, 2
    %s95 = sadd.s32 1, %s90
    %p96 = scmp.ge.s32.totalorder %s95, 2
    %s97 = scalar_select %p96, 0, %s95
    %s98 = sadd.s32 1, %s89
    %s99 = scalar_select %p96, %s98, %s89
    %p100 = scmp.ge.s32.totalorder %s99, 1
    %s101 = scalar_select %p100, 0, %s99
    %s102 = ssub.s32 %s89, %s101
    %p103 = scmp.eq.s32.totalorder %s102, 0
    %s105 = sadd.s32 %s104, 1
    %s106 = scalar_select %p103, %s104, %s105
    %p109 = pneg %p103
    %p110 = scmp.eq.s32.totalorder %s82, 1
    %p111 = por %p109, %p110
    %p112 = scmp.ne.s32.totalorder %s104, %s107
    %p113 = scmp.eq.s32.totalorder %s82, 0
    %p114 = por %p112, %p113
    %p115 = scmp.ne.s32.totalorder %s104, %s107
    %p116 = scmp.eq.s32.totalorder %s87, 1
    %p117 = por %p115, %p116
    %p118 = scmp.ne.s32.totalorder %s107, %s108
    %p119 = scmp.eq.s32.totalorder %s87, 0
    %p120 = por %p118, %p119
    %p121 = scmp.ne.s32.totalorder %s107, %s108
    %p122 = scmp.eq.s32.totalorder %s88, 1
    %p123 = por %p121, %p122
    %p125 = scmp.ne.s32.totalorder %s108, %s124
    %p126 = scmp.eq.s32.totalorder %s88, 0
    %p127 = por %p125, %p126
    %s128 = ssub.s32 %s89, %s101
    %p129 = scmp.eq.s32.totalorder %s128, 0
    %s131 = sadd.s32 %s130, 1
    %s132 = scalar_select %p129, %s130, %s131
    %p135 = pneg %p129
    %p136 = scmp.eq.s32.totalorder %s82, 1
    %p137 = por %p135, %p136
    %p138 = scmp.ne.s32.totalorder %s130, %s133
    %p139 = scmp.eq.s32.totalorder %s82, 0
    %p140 = por %p138, %p139
    %p141 = scmp.ne.s32.totalorder %s130, %s133
    %p142 = scmp.eq.s32.totalorder %s87, 1
    %p143 = por %p141, %p142
    %p144 = scmp.ne.s32.totalorder %s133, %s134
    %p145 = scmp.eq.s32.totalorder %s87, 0
    %p146 = por %p144, %p145
    %p147 = scmp.ne.s32.totalorder %s133, %s134
    %p148 = scmp.eq.s32.totalorder %s88, 1
    %p149 = por %p147, %p148
    %p151 = scmp.ne.s32.totalorder %s134, %s150
    %p152 = scmp.eq.s32.totalorder %s88, 0
    %p153 = por %p151, %p152
    %s154 = ssub.s32 %s89, %s101
    %p155 = scmp.eq.s32.totalorder %s154, 0
    %s157 = sadd.s32 %s156, 1
    %s158 = scalar_select %p155, %s156, %s157
    %p161 = pneg %p155
    %p162 = scmp.eq.s32.totalorder %s82, 1
    %p163 = por %p161, %p162
    %p164 = scmp.ne.s32.totalorder %s156, %s159
    %p165 = scmp.eq.s32.totalorder %s82, 0
    %p166 = por %p164, %p165
    %p167 = scmp.ne.s32.totalorder %s156, %s159
    %p168 = scmp.eq.s32.totalorder %s87, 1
    %p169 = por %p167, %p168
    %p170 = scmp.ne.s32.totalorder %s159, %s160
    %p171 = scmp.eq.s32.totalorder %s87, 0
    %p172 = por %p170, %p171
    %p173 = scmp.ne.s32.totalorder %s159, %s160
    %p174 = scmp.eq.s32.totalorder %s88, 1
    %p175 = por %p173, %p174
    %p177 = scmp.ne.s32.totalorder %s160, %s176
    %p178 = scmp.eq.s32.totalorder %s88, 0
    %p179 = por %p177, %p178
    %s180 = ssub.s32 %s89, %s101
    %p181 = scmp.eq.s32.totalorder %s180, 0
    %s183 = sadd.s32 %s182, 1
    %s184 = scalar_select %p181, %s182, %s183
    %p187 = pneg %p181
    %p188 = scmp.eq.s32.totalorder %s82, 1
    %p189 = por %p187, %p188
    %p190 = scmp.ne.s32.totalorder %s182, %s185
    %p191 = scmp.eq.s32.totalorder %s82, 0
    %p192 = por %p190, %p191
    %p193 = scmp.ne.s32.totalorder %s182, %s185
    %p194 = scmp.eq.s32.totalorder %s87, 1
    %p195 = por %p193, %p194
    %p196 = scmp.ne.s32.totalorder %s185, %s186
    %p197 = scmp.eq.s32.totalorder %s87, 0
    %p198 = por %p196, %p197
    %p199 = scmp.ne.s32.totalorder %s185, %s186
    %p200 = scmp.eq.s32.totalorder %s88, 1
    %p201 = por %p199, %p200
    %p203 = scmp.ne.s32.totalorder %s186, %s202
    %p204 = scmp.eq.s32.totalorder %s88, 0
    %p205 = por %p203, %p204
    %s206 = ssub.s32 %s89, %s101
    %p207 = scmp.eq.s32.totalorder %s206, 0
    %s209 = sadd.s32 %s208, 1
    %s210 = scalar_select %p207, %s208, %s209
    %p213 = pneg %p207
    %p214 = scmp.eq.s32.totalorder %s82, 1
    %p215 = por %p213, %p214
    %p216 = scmp.ne.s32.totalorder %s208, %s211
    %p217 = scmp.eq.s32.totalorder %s82, 0
    %p218 = por %p216, %p217
    %p219 = scmp.ne.s32.totalorder %s208, %s211
    %p220 = scmp.eq.s32.totalorder %s87, 1
    %p221 = por %p219, %p220
    %p222 = scmp.ne.s32.totalorder %s211, %s212
    %p223 = scmp.eq.s32.totalorder %s87, 0
    %p224 = por %p222, %p223
    %p225 = scmp.ne.s32.totalorder %s211, %s212
    %p226 = scmp.eq.s32.totalorder %s88, 1
    %p227 = por %p225, %p226
    %p229 = scmp.ne.s32.totalorder %s212, %s228
    %p230 = scmp.eq.s32.totalorder %s88, 0
    %p231 = por %p229, %p230
    %s233 = sadd.s32 %s232, 1
    %p236 = scmp.eq.s32.totalorder %s82, 1
    %p237 = scmp.ne.s32.totalorder %s232, %s234
    %p238 = scmp.eq.s32.totalorder %s82, 0
    %p239 = por %p237, %p238
    %p240 = scmp.ne.s32.totalorder %s232, %s234
    %p241 = scmp.eq.s32.totalorder %s87, 1
    %p242 = por %p240, %p241
    %p243 = scmp.ne.s32.totalorder %s234, %s235
    %p244 = scmp.eq.s32.totalorder %s87, 0
    %p245 = por %p243, %p244
    %p246 = scmp.ne.s32.totalorder %s234, %s235
    %p247 = scmp.eq.s32.totalorder %s88, 1
    %p248 = por %p246, %p247
    %p250 = scmp.ne.s32.totalorder %s235, %s249
    %p251 = scmp.eq.s32.totalorder %s88, 0
    %p252 = por %p250, %p251
    %s254 = sadd.s32 %s253, 1
    %p257 = scmp.eq.s32.totalorder %s82, 1
    %p258 = scmp.ne.s32.totalorder %s253, %s255
    %p259 = scmp.eq.s32.totalorder %s82, 0
    %p260 = por %p258, %p259
    %p261 = scmp.ne.s32.totalorder %s253, %s255
    %p262 = scmp.eq.s32.totalorder %s87, 1
    %p263 = por %p261, %p262
    %p264 = scmp.ne.s32.totalorder %s255, %s256
    %p265 = scmp.eq.s32.totalorder %s87, 0
    %p266 = por %p264, %p265
    %p267 = scmp.ne.s32.totalorder %s255, %s256
    %p268 = scmp.eq.s32.totalorder %s88, 1
    %p269 = por %p267, %p268
    %p271 = scmp.ne.s32.totalorder %s256, %s270
    %p272 = scmp.eq.s32.totalorder %s88, 0
    %p273 = por %p271, %p272
    %s275 = sadd.s32 %s274, 1
    %p278 = scmp.eq.s32.totalorder %s82, 1
    %p279 = scmp.ne.s32.totalorder %s274, %s276
    %p280 = scmp.eq.s32.totalorder %s82, 0
    %p281 = por %p279, %p280
    %p282 = scmp.ne.s32.totalorder %s274, %s276
    %p283 = scmp.eq.s32.totalorder %s87, 1
    %p284 = por %p282, %p283
    %p285 = scmp.ne.s32.totalorder %s276, %s277
    %p286 = scmp.eq.s32.totalorder %s87, 0
    %p287 = por %p285, %p286
    %p288 = scmp.ne.s32.totalorder %s276, %s277
    %p289 = scmp.eq.s32.totalorder %s88, 1
    %p290 = por %p288, %p289
    %p292 = scmp.ne.s32.totalorder %s277, %s291
    %p293 = scmp.eq.s32.totalorder %s88, 0
    %p294 = por %p292, %p293
    %s296 = sadd.s32 %s295, 1
    %p299 = scmp.eq.s32.totalorder %s82, 1
    %p300 = scmp.ne.s32.totalorder %s295, %s297
    %p301 = scmp.eq.s32.totalorder %s82, 0
    %p302 = por %p300, %p301
    %p303 = scmp.ne.s32.totalorder %s295, %s297
    %p304 = scmp.eq.s32.totalorder %s87, 1
    %p305 = por %p303, %p304
    %p306 = scmp.ne.s32.totalorder %s297, %s298
    %p307 = scmp.eq.s32.totalorder %s87, 0
    %p308 = por %p306, %p307
    %p309 = scmp.ne.s32.totalorder %s297, %s298
    %p310 = scmp.eq.s32.totalorder %s88, 1
    %p311 = por %p309, %p310
    %p313 = scmp.ne.s32.totalorder %s298, %s312
    %p314 = scmp.eq.s32.totalorder %s88, 0
    %p315 = por %p313, %p314
    %s317 = sadd.s32 %s316, 1
    %p320 = scmp.eq.s32.totalorder %s82, 1
    %p321 = scmp.ne.s32.totalorder %s316, %s318
    %p322 = scmp.eq.s32.totalorder %s82, 0
    %p323 = por %p321, %p322
    %p324 = scmp.ne.s32.totalorder %s316, %s318
    %p325 = scmp.eq.s32.totalorder %s87, 1
    %p326 = por %p324, %p325
    %p327 = scmp.ne.s32.totalorder %s318, %s319
    %p328 = scmp.eq.s32.totalorder %s87, 0
    %p329 = por %p327, %p328
    %p330 = scmp.ne.s32.totalorder %s318, %s319
    %p331 = scmp.eq.s32.totalorder %s88, 1
    %p332 = por %p330, %p331
    %p334 = scmp.ne.s32.totalorder %s319, %s333
    %p335 = scmp.eq.s32.totalorder %s88, 0
    %p336 = por %p334, %p335
    %s338 = sadd.s32 %s337, 1
    %p341 = scmp.eq.s32.totalorder %s82, 1
    %p342 = scmp.ne.s32.totalorder %s337, %s339
    %p343 = scmp.eq.s32.totalorder %s82, 0
    %p344 = por %p342, %p343
    %p345 = scmp.ne.s32.totalorder %s337, %s339
    %p346 = scmp.eq.s32.totalorder %s87, 1
    %p347 = por %p345, %p346
    %p348 = scmp.ne.s32.totalorder %s339, %s340
    %p349 = scmp.eq.s32.totalorder %s87, 0
    %p350 = por %p348, %p349
    %p351 = scmp.ne.s32.totalorder %s339, %s340
    %p352 = scmp.eq.s32.totalorder %s88, 1
    %p353 = por %p351, %p352
    %p355 = scmp.ne.s32.totalorder %s340, %s354
    %p356 = scmp.eq.s32.totalorder %s88, 0
    %p357 = por %p355, %p356
    %s359 = sadd.s32 %s358, 1
    %p362 = scmp.eq.s32.totalorder %s82, 1
    %p363 = scmp.ne.s32.totalorder %s358, %s360
    %p364 = scmp.eq.s32.totalorder %s82, 0
    %p365 = por %p363, %p364
    %p366 = scmp.ne.s32.totalorder %s358, %s360
    %p367 = scmp.eq.s32.totalorder %s87, 1
    %p368 = por %p366, %p367
    %p369 = scmp.ne.s32.totalorder %s360, %s361
    %p370 = scmp.eq.s32.totalorder %s87, 0
    %p371 = por %p369, %p370
    %p372 = scmp.ne.s32.totalorder %s360, %s361
    %p373 = scmp.eq.s32.totalorder %s88, 1
    %p374 = por %p372, %p373
    %p376 = scmp.ne.s32.totalorder %s361, %s375
    %p377 = scmp.eq.s32.totalorder %s88, 0
    %p378 = por %p376, %p377
    %s380 = sadd.s32 %s379, 1
    %p383 = scmp.eq.s32.totalorder %s82, 1
    %p384 = scmp.ne.s32.totalorder %s379, %s381
    %p385 = scmp.eq.s32.totalorder %s82, 0
    %p386 = por %p384, %p385
    %p387 = scmp.ne.s32.totalorder %s379, %s381
    %p388 = scmp.eq.s32.totalorder %s87, 1
    %p389 = por %p387, %p388
    %p390 = scmp.ne.s32.totalorder %s381, %s382
    %p391 = scmp.eq.s32.totalorder %s87, 0
    %p392 = por %p390, %p391
    %p393 = scmp.ne.s32.totalorder %s381, %s382
    %p394 = scmp.eq.s32.totalorder %s88, 1
    %p395 = por %p393, %p394
    %p397 = scmp.ne.s32.totalorder %s382, %s396
    %p398 = scmp.eq.s32.totalorder %s88, 0
    %p399 = por %p397, %p398
    %s401 = sadd.s32 %s400, 1
    %p404 = scmp.eq.s32.totalorder %s82, 1
    %p405 = scmp.ne.s32.totalorder %s400, %s402
    %p406 = scmp.eq.s32.totalorder %s82, 0
    %p407 = por %p405, %p406
    %p408 = scmp.ne.s32.totalorder %s400, %s402
    %p409 = scmp.eq.s32.totalorder %s87, 1
    %p410 = por %p408, %p409
    %p411 = scmp.ne.s32.totalorder %s402, %s403
    %p412 = scmp.eq.s32.totalorder %s87, 0
    %p413 = por %p411, %p412
    %p414 = scmp.ne.s32.totalorder %s402, %s403
    %p415 = scmp.eq.s32.totalorder %s88, 1
    %p416 = por %p414, %p415
    %p418 = scmp.ne.s32.totalorder %s403, %s417
    %p419 = scmp.eq.s32.totalorder %s88, 0
    %p420 = por %p418, %p419
    %s422 = sadd.s32 %s421, 1
    %p425 = scmp.eq.s32.totalorder %s82, 1
    %p426 = scmp.ne.s32.totalorder %s421, %s423
    %p427 = scmp.eq.s32.totalorder %s82, 0
    %p428 = por %p426, %p427
    %p429 = scmp.ne.s32.totalorder %s421, %s423
    %p430 = scmp.eq.s32.totalorder %s87, 1
    %p431 = por %p429, %p430
    %p432 = scmp.ne.s32.totalorder %s423, %s424
    %p433 = scmp.eq.s32.totalorder %s87, 0
    %p434 = por %p432, %p433
    %p435 = scmp.ne.s32.totalorder %s423, %s424
    %p436 = scmp.eq.s32.totalorder %s88, 1
    %p437 = por %p435, %p436
    %p439 = scmp.ne.s32.totalorder %s424, %s438
    %p440 = scmp.eq.s32.totalorder %s88, 0
    %p441 = por %p439, %p440
    %s443 = sadd.s32 %s442, 1
    %p446 = scmp.eq.s32.totalorder %s82, 1
    %p447 = scmp.ne.s32.totalorder %s442, %s444
    %p448 = scmp.eq.s32.totalorder %s82, 0
    %p449 = por %p447, %p448
    %p450 = scmp.ne.s32.totalorder %s442, %s444
    %p451 = scmp.eq.s32.totalorder %s87, 1
    %p452 = por %p450, %p451
    %p453 = scmp.ne.s32.totalorder %s444, %s445
    %p454 = scmp.eq.s32.totalorder %s87, 0
    %p455 = por %p453, %p454
    %p456 = scmp.ne.s32.totalorder %s444, %s445
    %p457 = scmp.eq.s32.totalorder %s88, 1
    %p458 = por %p456, %p457
    %p460 = scmp.ne.s32.totalorder %s445, %s459
    %p461 = scmp.eq.s32.totalorder %s88, 0
    %p462 = por %p460, %p461
    %s464 = sadd.s32 %s463, 1
    %p467 = scmp.eq.s32.totalorder %s82, 1
    %p468 = scmp.ne.s32.totalorder %s463, %s465
    %p469 = scmp.eq.s32.totalorder %s82, 0
    %p470 = por %p468, %p469
    %p471 = scmp.ne.s32.totalorder %s463, %s465
    %p472 = scmp.eq.s32.totalorder %s87, 1
    %p473 = por %p471, %p472
    %p474 = scmp.ne.s32.totalorder %s465, %s466
    %p475 = scmp.eq.s32.totalorder %s87, 0
    %p476 = por %p474, %p475
    %p477 = scmp.ne.s32.totalorder %s465, %s466
    %p478 = scmp.eq.s32.totalorder %s88, 1
    %p479 = por %p477, %p478
    %p481 = scmp.ne.s32.totalorder %s466, %s480
    %p482 = scmp.eq.s32.totalorder %s88, 0
    %p483 = por %p481, %p482
    %s485 = sadd.s32 %s484, 1
    %p488 = scmp.eq.s32.totalorder %s82, 1
    %p489 = scmp.ne.s32.totalorder %s484, %s486
    %p490 = scmp.eq.s32.totalorder %s82, 0
    %p491 = por %p489, %p490
    %p492 = scmp.ne.s32.totalorder %s484, %s486
    %p493 = scmp.eq.s32.totalorder %s87, 1
    %p494 = por %p492, %p493
    %p495 = scmp.ne.s32.totalorder %s486, %s487
    %p496 = scmp.eq.s32.totalorder %s87, 0
    %p497 = por %p495, %p496
    %p498 = scmp.ne.s32.totalorder %s486, %s487
    %p499 = scmp.eq.s32.totalorder %s88, 1
    %p500 = por %p498, %p499
    %p502 = scmp.ne.s32.totalorder %s487, %s501
    %p503 = scmp.eq.s32.totalorder %s88, 0
    %p504 = por %p502, %p503
    %s505 = ssub.s32 %s90, %s97
    %p506 = scmp.eq.s32.totalorder %s505, 0
    %s508 = sadd.s32 %s507, 1
    %s509 = scalar_select %p506, %s507, %s508
    %p512 = pneg %p506
    %p513 = scmp.eq.s32.totalorder %s82, 1
    %p514 = por %p512, %p513
    %p515 = scmp.ne.s32.totalorder %s507, %s510
    %p516 = scmp.eq.s32.totalorder %s82, 0
    %p517 = por %p515, %p516
    %p518 = scmp.ne.s32.totalorder %s507, %s510
    %p519 = scmp.eq.s32.totalorder %s87, 1
    %p520 = por %p518, %p519
    %p521 = scmp.ne.s32.totalorder %s510, %s511
    %p522 = scmp.eq.s32.totalorder %s87, 0
    %p523 = por %p521, %p522
    %p524 = scmp.ne.s32.totalorder %s510, %s511
    %p525 = scmp.eq.s32.totalorder %s88, 1
    %p526 = por %p524, %p525
    %p528 = scmp.ne.s32.totalorder %s511, %s527
    %p529 = scmp.eq.s32.totalorder %s88, 0
    %p530 = por %p528, %p529
    %s531 = ssub.s32 %s90, %s97
    %p532 = scmp.eq.s32.totalorder %s531, 0
    %s534 = sadd.s32 %s533, 1
    %s535 = scalar_select %p532, %s533, %s534
    %p538 = pneg %p532
    %p539 = scmp.eq.s32.totalorder %s82, 1
    %p540 = por %p538, %p539
    %p541 = scmp.ne.s32.totalorder %s533, %s536
    %p542 = scmp.eq.s32.totalorder %s82, 0
    %p543 = por %p541, %p542
    %p544 = scmp.ne.s32.totalorder %s533, %s536
    %p545 = scmp.eq.s32.totalorder %s87, 1
    %p546 = por %p544, %p545
    %p547 = scmp.ne.s32.totalorder %s536, %s537
    %p548 = scmp.eq.s32.totalorder %s87, 0
    %p549 = por %p547, %p548
    %p550 = scmp.ne.s32.totalorder %s536, %s537
    %p551 = scmp.eq.s32.totalorder %s88, 1
    %p552 = por %p550, %p551
    %p554 = scmp.ne.s32.totalorder %s537, %s553
    %p555 = scmp.eq.s32.totalorder %s88, 0
    %p556 = por %p554, %p555
    %s557 = ssub.s32 %s90, %s97
    %p558 = scmp.eq.s32.totalorder %s557, 0
    %s560 = sadd.s32 %s559, 1
    %s561 = scalar_select %p558, %s559, %s560
    %p564 = pneg %p558
    %p565 = scmp.eq.s32.totalorder %s82, 1
    %p566 = por %p564, %p565
    %p567 = scmp.ne.s32.totalorder %s559, %s562
    %p568 = scmp.eq.s32.totalorder %s82, 0
    %p569 = por %p567, %p568
    %p570 = scmp.ne.s32.totalorder %s559, %s562
    %p571 = scmp.eq.s32.totalorder %s87, 1
    %p572 = por %p570, %p571
    %p573 = scmp.ne.s32.totalorder %s562, %s563
    %p574 = scmp.eq.s32.totalorder %s87, 0
    %p575 = por %p573, %p574
    %p576 = scmp.ne.s32.totalorder %s562, %s563
    %p577 = scmp.eq.s32.totalorder %s88, 1
    %p578 = por %p576, %p577
    %p580 = scmp.ne.s32.totalorder %s563, %s579
    %p581 = scmp.eq.s32.totalorder %s88, 0
    %p582 = por %p580, %p581
    %s583 = ssub.s32 %s90, %s97
    %p584 = scmp.eq.s32.totalorder %s583, 0
    %s586 = sadd.s32 %s585, 1
    %s587 = scalar_select %p584, %s585, %s586
    %p590 = pneg %p584
    %p591 = scmp.eq.s32.totalorder %s82, 1
    %p592 = por %p590, %p591
    %p593 = scmp.ne.s32.totalorder %s585, %s588
    %p594 = scmp.eq.s32.totalorder %s82, 0
    %p595 = por %p593, %p594
    %p596 = scmp.ne.s32.totalorder %s585, %s588
    %p597 = scmp.eq.s32.totalorder %s87, 1
    %p598 = por %p596, %p597
    %p599 = scmp.ne.s32.totalorder %s588, %s589
    %p600 = scmp.eq.s32.totalorder %s87, 0
    %p601 = por %p599, %p600
    %p602 = scmp.ne.s32.totalorder %s588, %s589
    %p603 = scmp.eq.s32.totalorder %s88, 1
    %p604 = por %p602, %p603
    %p606 = scmp.ne.s32.totalorder %s589, %s605
    %p607 = scmp.eq.s32.totalorder %s88, 0
    %p608 = por %p606, %p607
    %s609 = ssub.s32 %s90, %s97
    %p610 = scmp.eq.s32.totalorder %s609, 0
    %s612 = sadd.s32 %s611, 1
    %s613 = scalar_select %p610, %s611, %s612
    %p616 = pneg %p610
    %p617 = scmp.eq.s32.totalorder %s82, 1
    %p618 = por %p616, %p617
    %p619 = scmp.ne.s32.totalorder %s611, %s614
    %p620 = scmp.eq.s32.totalorder %s82, 0
    %p621 = por %p619, %p620
    %p622 = scmp.ne.s32.totalorder %s611, %s614
    %p623 = scmp.eq.s32.totalorder %s87, 1
    %p624 = por %p622, %p623
    %p625 = scmp.ne.s32.totalorder %s614, %s615
    %p626 = scmp.eq.s32.totalorder %s87, 0
    %p627 = por %p625, %p626
    %p628 = scmp.ne.s32.totalorder %s614, %s615
    %p629 = scmp.eq.s32.totalorder %s88, 1
    %p630 = por %p628, %p629
    %p632 = scmp.ne.s32.totalorder %s615, %s631
    %p633 = scmp.eq.s32.totalorder %s88, 0
    %p634 = por %p632, %p633
    %s635 = ssub.s32 %s90, %s97
    %p636 = scmp.eq.s32.totalorder %s635, 0
    %s638 = sadd.s32 %s637, 1
    %s639 = scalar_select %p636, %s637, %s638
    %p642 = pneg %p636
    %p643 = scmp.eq.s32.totalorder %s82, 1
    %p644 = por %p642, %p643
    %p645 = scmp.ne.s32.totalorder %s637, %s640
    %p646 = scmp.eq.s32.totalorder %s82, 0
    %p647 = por %p645, %p646
    %p648 = scmp.ne.s32.totalorder %s637, %s640
    %p649 = scmp.eq.s32.totalorder %s87, 1
    %p650 = por %p648, %p649
    %p651 = scmp.ne.s32.totalorder %s640, %s641
    %p652 = scmp.eq.s32.totalorder %s87, 0
    %p653 = por %p651, %p652
    %p654 = scmp.ne.s32.totalorder %s640, %s641
    %p655 = scmp.eq.s32.totalorder %s88, 1
    %p656 = por %p654, %p655
    %p658 = scmp.ne.s32.totalorder %s641, %s657
    %p659 = scmp.eq.s32.totalorder %s88, 0
    %p660 = por %p658, %p659
    %s661 = ssub.s32 %s90, %s97
    %p662 = scmp.eq.s32.totalorder %s661, 0
    %s664 = sadd.s32 %s663, 1
    %s665 = scalar_select %p662, %s663, %s664
    %p668 = pneg %p662
    %p669 = scmp.eq.s32.totalorder %s82, 1
    %p670 = por %p668, %p669
    %p671 = scmp.ne.s32.totalorder %s663, %s666
    %p672 = scmp.eq.s32.totalorder %s82, 0
    %p673 = por %p671, %p672
    %p674 = scmp.ne.s32.totalorder %s663, %s666
    %p675 = scmp.eq.s32.totalorder %s87, 1
    %p676 = por %p674, %p675
    %p677 = scmp.ne.s32.totalorder %s666, %s667
    %p678 = scmp.eq.s32.totalorder %s87, 0
    %p679 = por %p677, %p678
    %p680 = scmp.ne.s32.totalorder %s666, %s667
    %p681 = scmp.eq.s32.totalorder %s88, 1
    %p682 = por %p680, %p681
    %p684 = scmp.ne.s32.totalorder %s667, %s683
    %p685 = scmp.eq.s32.totalorder %s88, 0
    %p686 = por %p684, %p685
    %s687 = ssub.s32 %s90, %s97
    %p688 = scmp.eq.s32.totalorder %s687, 0
    %s690 = sadd.s32 %s689, 1
    %s691 = scalar_select %p688, %s689, %s690
    %p694 = pneg %p688
    %p695 = scmp.eq.s32.totalorder %s82, 1
    %p696 = por %p694, %p695
    %p697 = scmp.ne.s32.totalorder %s689, %s692
    %p698 = scmp.eq.s32.totalorder %s82, 0
    %p699 = por %p697, %p698
    %p700 = scmp.ne.s32.totalorder %s689, %s692
    %p701 = scmp.eq.s32.totalorder %s87, 1
    %p702 = por %p700, %p701
    %p703 = scmp.ne.s32.totalorder %s692, %s693
    %p704 = scmp.eq.s32.totalorder %s87, 0
    %p705 = por %p703, %p704
    %p706 = scmp.ne.s32.totalorder %s692, %s693
    %p707 = scmp.eq.s32.totalorder %s88, 1
    %p708 = por %p706, %p707
    %p710 = scmp.ne.s32.totalorder %s693, %s709
    %p711 = scmp.eq.s32.totalorder %s88, 0
    %p712 = por %p710, %p711
    %s713 = ssub.s32 %s90, %s97
    %p714 = scmp.eq.s32.totalorder %s713, 0
    %s716 = sadd.s32 %s715, 1
    %s717 = scalar_select %p714, %s715, %s716
    %p720 = pneg %p714
    %p721 = scmp.eq.s32.totalorder %s82, 1
    %p722 = por %p720, %p721
    %p723 = scmp.ne.s32.totalorder %s715, %s718
    %p724 = scmp.eq.s32.totalorder %s82, 0
    %p725 = por %p723, %p724
    %p726 = scmp.ne.s32.totalorder %s715, %s718
    %p727 = scmp.eq.s32.totalorder %s87, 1
    %p728 = por %p726, %p727
    %p729 = scmp.ne.s32.totalorder %s718, %s719
    %p730 = scmp.eq.s32.totalorder %s87, 0
    %p731 = por %p729, %p730
    %p732 = scmp.ne.s32.totalorder %s718, %s719
    %p733 = scmp.eq.s32.totalorder %s88, 1
    %p734 = por %p732, %p733
    %p736 = scmp.ne.s32.totalorder %s719, %s735
    %p737 = scmp.eq.s32.totalorder %s88, 0
    %p738 = por %p736, %p737
    %s739 = ssub.s32 %s90, %s97
    %p740 = scmp.eq.s32.totalorder %s739, 0
    %s742 = sadd.s32 %s741, 1
    %s743 = scalar_select %p740, %s741, %s742
    %p746 = pneg %p740
    %p747 = scmp.eq.s32.totalorder %s82, 1
    %p748 = por %p746, %p747
    %p749 = scmp.ne.s32.totalorder %s741, %s744
    %p750 = scmp.eq.s32.totalorder %s82, 0
    %p751 = por %p749, %p750
    %p752 = scmp.ne.s32.totalorder %s741, %s744
    %p753 = scmp.eq.s32.totalorder %s87, 1
    %p754 = por %p752, %p753
    %p755 = scmp.ne.s32.totalorder %s744, %s745
    %p756 = scmp.eq.s32.totalorder %s87, 0
    %p757 = por %p755, %p756
    %p758 = scmp.ne.s32.totalorder %s744, %s745
    %p759 = scmp.eq.s32.totalorder %s88, 1
    %p760 = por %p758, %p759
    %p762 = scmp.ne.s32.totalorder %s745, %s761
    %p763 = scmp.eq.s32.totalorder %s88, 0
    %p764 = por %p762, %p763
    %s765 = ssub.s32 %s90, %s97
    %p766 = scmp.eq.s32.totalorder %s765, 0
    %s768 = sadd.s32 %s767, 1
    %s769 = scalar_select %p766, %s767, %s768
    %p772 = pneg %p766
    %p773 = scmp.eq.s32.totalorder %s82, 1
    %p774 = por %p772, %p773
    %p775 = scmp.ne.s32.totalorder %s767, %s770
    %p776 = scmp.eq.s32.totalorder %s82, 0
    %p777 = por %p775, %p776
    %p778 = scmp.ne.s32.totalorder %s767, %s770
    %p779 = scmp.eq.s32.totalorder %s87, 1
    %p780 = por %p778, %p779
    %p781 = scmp.ne.s32.totalorder %s770, %s771
    %p782 = scmp.eq.s32.totalorder %s87, 0
    %p783 = por %p781, %p782
    %p784 = scmp.ne.s32.totalorder %s770, %s771
    %p785 = scmp.eq.s32.totalorder %s88, 1
    %p786 = por %p784, %p785
    %p788 = scmp.ne.s32.totalorder %s771, %s787
    %p789 = scmp.eq.s32.totalorder %s88, 0
    %p790 = por %p788, %p789
    %s791 = ssub.s32 %s90, %s97
    %p792 = scmp.eq.s32.totalorder %s791, 0
    %s794 = sadd.s32 %s793, 1
    %s795 = scalar_select %p792, %s793, %s794
    %p798 = pneg %p792
    %p799 = scmp.eq.s32.totalorder %s82, 1
    %p800 = por %p798, %p799
    %p801 = scmp.ne.s32.totalorder %s793, %s796
    %p802 = scmp.eq.s32.totalorder %s82, 0
    %p803 = por %p801, %p802
    %p804 = scmp.ne.s32.totalorder %s793, %s796
    %p805 = scmp.eq.s32.totalorder %s87, 1
    %p806 = por %p804, %p805
    %p807 = scmp.ne.s32.totalorder %s796, %s797
    %p808 = scmp.eq.s32.totalorder %s87, 0
    %p809 = por %p807, %p808
    %p810 = scmp.ne.s32.totalorder %s796, %s797
    %p811 = scmp.eq.s32.totalorder %s88, 1
    %p812 = por %p810, %p811
    %p814 = scmp.ne.s32.totalorder %s797, %s813
    %p815 = scmp.eq.s32.totalorder %s88, 0
    %p816 = por %p814, %p815
    %s818 = sadd.s32 %s817, 1
    %p821 = scmp.eq.s32.totalorder %s82, 1
    %p822 = scmp.ne.s32.totalorder %s817, %s819
    %p823 = scmp.eq.s32.totalorder %s82, 0
    %p824 = por %p822, %p823
    %p825 = scmp.ne.s32.totalorder %s817, %s819
    %p826 = scmp.eq.s32.totalorder %s87, 1
    %p827 = por %p825, %p826
    %p828 = scmp.ne.s32.totalorder %s819, %s820
    %p829 = scmp.eq.s32.totalorder %s87, 0
    %p830 = por %p828, %p829
    %p831 = scmp.ne.s32.totalorder %s819, %s820
    %p832 = scmp.eq.s32.totalorder %s88, 1
    %p833 = por %p831, %p832
    %p835 = scmp.ne.s32.totalorder %s820, %s834
    %p836 = scmp.eq.s32.totalorder %s88, 0
    %p837 = por %p835, %p836
    %s839 = sadd.s32 %s838, 1
    %p842 = scmp.eq.s32.totalorder %s82, 1
    %p843 = scmp.ne.s32.totalorder %s838, %s840
    %p844 = scmp.eq.s32.totalorder %s82, 0
    %p845 = por %p843, %p844
    %p846 = scmp.ne.s32.totalorder %s838, %s840
    %p847 = scmp.eq.s32.totalorder %s87, 1
    %p848 = por %p846, %p847
    %p849 = scmp.ne.s32.totalorder %s840, %s841
    %p850 = scmp.eq.s32.totalorder %s87, 0
    %p851 = por %p849, %p850
    %p852 = scmp.ne.s32.totalorder %s840, %s841
    %p853 = scmp.eq.s32.totalorder %s88, 1
    %p854 = por %p852, %p853
    %p856 = scmp.ne.s32.totalorder %s841, %s855
    %p857 = scmp.eq.s32.totalorder %s88, 0
    %p858 = por %p856, %p857
    %s860 = sadd.s32 %s859, 1
    %p863 = scmp.eq.s32.totalorder %s82, 1
    %p864 = scmp.ne.s32.totalorder %s859, %s861
    %p865 = scmp.eq.s32.totalorder %s82, 0
    %p866 = por %p864, %p865
    %p867 = scmp.ne.s32.totalorder %s859, %s861
    %p868 = scmp.eq.s32.totalorder %s87, 1
    %p869 = por %p867, %p868
    %p870 = scmp.ne.s32.totalorder %s861, %s862
    %p871 = scmp.eq.s32.totalorder %s87, 0
    %p872 = por %p870, %p871
    %p873 = scmp.ne.s32.totalorder %s861, %s862
    %p874 = scmp.eq.s32.totalorder %s88, 1
    %p875 = por %p873, %p874
    %p877 = scmp.ne.s32.totalorder %s862, %s876
    %p878 = scmp.eq.s32.totalorder %s88, 0
    %p879 = por %p877, %p878
    %s881 = sadd.s32 %s880, 1
    %p884 = scmp.eq.s32.totalorder %s82, 1
    %p885 = scmp.ne.s32.totalorder %s880, %s882
    %p886 = scmp.eq.s32.totalorder %s82, 0
    %p887 = por %p885, %p886
    %p888 = scmp.ne.s32.totalorder %s880, %s882
    %p889 = scmp.eq.s32.totalorder %s87, 1
    %p890 = por %p888, %p889
    %p891 = scmp.ne.s32.totalorder %s882, %s883
    %p892 = scmp.eq.s32.totalorder %s87, 0
    %p893 = por %p891, %p892
    %p894 = scmp.ne.s32.totalorder %s882, %s883
    %p895 = scmp.eq.s32.totalorder %s88, 1
    %p896 = por %p894, %p895
    %p898 = scmp.ne.s32.totalorder %s883, %s897
    %p899 = scmp.eq.s32.totalorder %s88, 0
    %p900 = por %p898, %p899
    %s902 = sadd.s32 %s901, 1
    %p905 = scmp.eq.s32.totalorder %s82, 1
    %p906 = scmp.ne.s32.totalorder %s901, %s903
    %p907 = scmp.eq.s32.totalorder %s82, 0
    %p908 = por %p906, %p907
    %p909 = scmp.ne.s32.totalorder %s901, %s903
    %p910 = scmp.eq.s32.totalorder %s87, 1
    %p911 = por %p909, %p910
    %p912 = scmp.ne.s32.totalorder %s903, %s904
    %p913 = scmp.eq.s32.totalorder %s87, 0
    %p914 = por %p912, %p913
    %p915 = scmp.ne.s32.totalorder %s903, %s904
    %p916 = scmp.eq.s32.totalorder %s88, 1
    %p917 = por %p915, %p916
    %p919 = scmp.ne.s32.totalorder %s904, %s918
    %p920 = scmp.eq.s32.totalorder %s88, 0
    %p921 = por %p919, %p920
    %s923 = sadd.s32 %s922, 1
    %p926 = scmp.eq.s32.totalorder %s82, 1
    %p927 = scmp.ne.s32.totalorder %s922, %s924
    %p928 = scmp.eq.s32.totalorder %s82, 0
    %p929 = por %p927, %p928
    %p930 = scmp.ne.s32.totalorder %s922, %s924
    %p931 = scmp.eq.s32.totalorder %s87, 1
    %p932 = por %p930, %p931
    %p933 = scmp.ne.s32.totalorder %s924, %s925
    %p934 = scmp.eq.s32.totalorder %s87, 0
    %p935 = por %p933, %p934
    %p936 = scmp.ne.s32.totalorder %s924, %s925
    %p937 = scmp.eq.s32.totalorder %s88, 1
    %p938 = por %p936, %p937
    %p940 = scmp.ne.s32.totalorder %s925, %s939
    %p941 = scmp.eq.s32.totalorder %s88, 0
    %p942 = por %p940, %p941
    %s943 = ssub.s32 %s89, %s101
    %p944 = scmp.eq.s32.totalorder %s943, 0
    %s946 = sadd.s32 %s945, 1
    %s947 = scalar_select %p944, %s945, %s946
    %p950 = pneg %p944
    %p951 = scmp.eq.s32.totalorder %s82, 1
    %p952 = por %p950, %p951
    %p953 = scmp.ne.s32.totalorder %s945, %s948
    %p954 = scmp.eq.s32.totalorder %s82, 0
    %p955 = por %p953, %p954
    %p956 = scmp.ne.s32.totalorder %s945, %s948
    %p957 = scmp.eq.s32.totalorder %s87, 1
    %p958 = por %p956, %p957
    %p959 = scmp.ne.s32.totalorder %s948, %s949
    %p960 = scmp.eq.s32.totalorder %s87, 0
    %p961 = por %p959, %p960
    %p962 = scmp.ne.s32.totalorder %s948, %s949
    %p963 = scmp.eq.s32.totalorder %s88, 1
    %p964 = por %p962, %p963
    %p966 = scmp.ne.s32.totalorder %s949, %s965
    %p967 = scmp.eq.s32.totalorder %s88, 0
    %p968 = por %p966, %p967
    %s969 = ssub.s32 %s89, %s101
    %p970 = scmp.eq.s32.totalorder %s969, 0
    %s972 = sadd.s32 %s971, 1
    %s973 = scalar_select %p970, %s971, %s972
    %p976 = pneg %p970
    %p977 = scmp.eq.s32.totalorder %s82, 1
    %p978 = por %p976, %p977
    %p979 = scmp.ne.s32.totalorder %s971, %s974
    %p980 = scmp.eq.s32.totalorder %s82, 0
    %p981 = por %p979, %p980
    %p982 = scmp.ne.s32.totalorder %s971, %s974
    %p983 = scmp.eq.s32.totalorder %s87, 1
    %p984 = por %p982, %p983
    %p985 = scmp.ne.s32.totalorder %s974, %s975
    %p986 = scmp.eq.s32.totalorder %s87, 0
    %p987 = por %p985, %p986
    %p988 = scmp.ne.s32.totalorder %s974, %s975
    %p989 = scmp.eq.s32.totalorder %s88, 1
    %p990 = por %p988, %p989
    %p992 = scmp.ne.s32.totalorder %s975, %s991
    %p993 = scmp.eq.s32.totalorder %s88, 0
    %p994 = por %p992, %p993
    %p995 = scmp.le.s32.totalorder 1, %s82
    %p996 = scmp.lt.s32.totalorder %s82, 3
    %p997 = pnand %p995, %p996
    %p998 = pneg %p997
    // Predicated region
    $region9: #{meta_dt_forward.1} parent=5 // pred_check
      _
    $region10: #{meta_dt_forward.1} parent=5 // pred_check_branch
      %1000 = sbr.rel (%p997) target = $region12
    $region11: #{meta_dt_forward.1} parent=5 // pred_region
      %s1001 = ssub.s32 %s82, 1
      // Predicated region
      $region13: #{meta_dt_forward.1} parent=11 // pred_check
        %p1002 = pneg %p120
      $region14: #{meta_dt_forward.1} parent=11 // pred_check_branch
        %1004 = sbr.rel (%p1002) target = $region16
      $region15: #{meta_dt_forward.1} parent=11 // pred_region
        %s1005 = smul.u32 2, %s91
        %p1006 = scmp.lt.s32.totalorder %s1005, 1
        %s1007 = scalar_select %p1006, %s1005, 1
        %s1008 = smul.addr %s1007, 8
        %s1009 = scalar_lea.vmem %s1, %s1008
        %s1010 = smul.u32 2, %s91
      $region16: #{meta_dt_forward.1} parent=11 // pred_fallthru
        _
      // Predicated region
      $region17: #{meta_dt_forward.1} parent=11 // pred_check
        %p1011 = pneg %p146
      $region18: #{meta_dt_forward.1} parent=11 // pred_check_branch
        %1013 = sbr.rel (%p1011) target = $region20
      $region19: #{meta_dt_forward.1} parent=11 // pred_region
        %s1014 = smul.u32 2, %s91
        %p1015 = scmp.lt.s32.totalorder %s1014, 1
        %s1016 = scalar_select %p1015, %s1014, 1
        %s1017 = smul.addr %s1016, 8
        %s1018 = scalar_lea.vmem %s3, %s1017
        %s1019 = smul.u32 2, %s91
      $region20: #{meta_dt_forward.1} parent=11 // pred_fallthru
        _
      // Predicated region
      $region21: #{meta_dt_forward.1} parent=11 // pred_check
        %p1020 = pneg %p172
      $region22: #{meta_dt_forward.1} parent=11 // pred_check_branch
        %1022 = sbr.rel (%p1020) target = $region24
      $region23: #{meta_dt_forward.1} parent=11 // pred_region
        %s1023 = smul.u32 2, %s91
        %p1024 = scmp.lt.s32.totalorder %s1023, 1
        %s1025 = scalar_select %p1024, %s1023, 1
        %s1026 = smul.addr %s1025, 8
        %s1027 = scalar_lea.vmem %s5, %s1026
        %s1028 = smul.u32 2, %s91
      $region24: #{meta_dt_forward.1} parent=11 // pred_fallthru
        _
      // Predicated region
      $region25: #{meta_dt_forward.1} parent=11 // pred_check
        %p1029 = pneg %p198
      $region26: #{meta_dt_forward.1} parent=11 // pred_check_branch
        %1031 = sbr.rel (%p1029) target = $region28
      $region27: #{meta_dt_forward.1} parent=11 // pred_region
        %s1032 = smul.u32 2, %s91
        %p1033 = scmp.lt.s32.totalorder %s1032, 1
        %s1034 = scalar_select %p1033, %s1032, 1
        %s1035 = smul.addr %s1034, 8
        %s1036 = scalar_lea.vmem %s7, %s1035
        %s1037 = smul.u32 2, %s91
      $region28: #{meta_dt_forward.1} parent=11 // pred_fallthru
        _
      // Predicated region
      $region29: #{meta_dt_forward.1} parent=11 // pred_check
        %p1038 = pneg %p224
      $region30: #{meta_dt_forward.1} parent=11 // pred_check_branch
        %1040 = sbr.rel (%p1038) target = $region32
      $region31: #{meta_dt_forward.1} parent=11 // pred_region
        %s1041 = smul.u32 2, %s91
        %p1042 = scmp.lt.s32.totalorder %s1041, 1
        %s1043 = scalar_select %p1042, %s1041, 1
        %s1044 = smul.addr %s1043, 8
        %s1045 = scalar_lea.vmem %s9, %s1044
        %s1046 = smul.u32 2, %s91
      $region32: #{meta_dt_forward.1} parent=11 // pred_fallthru
        _
      // Predicated region
      $region33: #{meta_dt_forward.1} parent=11 // pred_check
        %p1047 = pneg %p245
      $region34: #{meta_dt_forward.1} parent=11 // pred_check_branch
        %1049 = sbr.rel (%p1047) target = $region36
      $region35: #{meta_dt_forward.1} parent=11 // pred_region
        _
      $region36: #{meta_dt_forward.1} parent=11 // pred_fallthru
        _
      // Predicated region
      $region37: #{meta_dt_forward.1} parent=11 // pred_check
        %p1050 = pneg %p266
      $region38: #{meta_dt_forward.1} parent=11 // pred_check_branch
        %1052 = sbr.rel (%p1050) target = $region40
      $region39: #{meta_dt_forward.1} parent=11 // pred_region
        _
      $region40: #{meta_dt_forward.1} parent=11 // pred_fallthru
        _
      // Predicated region
      $region41: #{meta_dt_forward.1} parent=11 // pred_check
        %p1053 = pneg %p287
      $region42: #{meta_dt_forward.1} parent=11 // pred_check_branch
        %1055 = sbr.rel (%p1053) target = $region44
      $region43: #{meta_dt_forward.1} parent=11 // pred_region
        _
      $region44: #{meta_dt_forward.1} parent=11 // pred_fallthru
        _
      // Predicated region
      $region45: #{meta_dt_forward.1} parent=11 // pred_check
        %p1056 = pneg %p308
      $region46: #{meta_dt_forward.1} parent=11 // pred_check_branch
        %1058 = sbr.rel (%p1056) target = $region48
      $region47: #{meta_dt_forward.1} parent=11 // pred_region
        _
      $region48: #{meta_dt_forward.1} parent=11 // pred_fallthru
        _
      // Predicated region
      $region49: #{meta_dt_forward.1} parent=11 // pred_check
        %p1059 = pneg %p329
      $region50: #{meta_dt_forward.1} parent=11 // pred_check_branch
        %1061 = sbr.rel (%p1059) target = $region52
      $region51: #{meta_dt_forward.1} parent=11 // pred_region
        _
      $region52: #{meta_dt_forward.1} parent=11 // pred_fallthru
        _
      // Predicated region
      $region53: #{meta_dt_forward.1} parent=11 // pred_check
        %p1062 = pneg %p350
      $region54: #{meta_dt_forward.1} parent=11 // pred_check_branch
        %1064 = sbr.rel (%p1062) target = $region56
      $region55: #{meta_dt_forward.1} parent=11 // pred_region
        _
      $region56: #{meta_dt_forward.1} parent=11 // pred_fallthru
        _
      // Predicated region
      $region57: #{meta_dt_forward.1} parent=11 // pred_check
        %p1065 = pneg %p371
      $region58: #{meta_dt_forward.1} parent=11 // pred_check_branch
        %1067 = sbr.rel (%p1065) target = $region60
      $region59: #{meta_dt_forward.1} parent=11 // pred_region
        _
      $region60: #{meta_dt_forward.1} parent=11 // pred_fallthru
        _
      // Predicated region
      $region61: #{meta_dt_forward.1} parent=11 // pred_check
        %p1068 = pneg %p392
      $region62: #{meta_dt_forward.1} parent=11 // pred_check_branch
        %1070 = sbr.rel (%p1068) target = $region64
      $region63: #{meta_dt_forward.1} parent=11 // pred_region
        _
      $region64: #{meta_dt_forward.1} parent=11 // pred_fallthru
        _
      // Predicated region
      $region65: #{meta_dt_forward.1} parent=11 // pred_check
        %p1071 = pneg %p413
      $region66: #{meta_dt_forward.1} parent=11 // pred_check_branch
        %1073 = sbr.rel (%p1071) target = $region68
      $region67: #{meta_dt_forward.1} parent=11 // pred_region
        _
      $region68: #{meta_dt_forward.1} parent=11 // pred_fallthru
        _
      // Predicated region
      $region69: #{meta_dt_forward.1} parent=11 // pred_check
        %p1074 = pneg %p434
      $region70: #{meta_dt_forward.1} parent=11 // pred_check_branch
        %1076 = sbr.rel (%p1074) target = $region72
      $region71: #{meta_dt_forward.1} parent=11 // pred_region
        _
      $region72: #{meta_dt_forward.1} parent=11 // pred_fallthru
        _
      // Predicated region
      $region73: #{meta_dt_forward.1} parent=11 // pred_check
        %p1077 = pneg %p455
      $region74: #{meta_dt_forward.1} parent=11 // pred_check_branch
        %1079 = sbr.rel (%p1077) target = $region76
      $region75: #{meta_dt_forward.1} parent=11 // pred_region
        _
      $region76: #{meta_dt_forward.1} parent=11 // pred_fallthru
        _
      // Predicated region
      $region77: #{meta_dt_forward.1} parent=11 // pred_check
        %p1080 = pneg %p476
      $region78: #{meta_dt_forward.1} parent=11 // pred_check_branch
        %1082 = sbr.rel (%p1080) target = $region80
      $region79: #{meta_dt_forward.1} parent=11 // pred_region
        _
      $region80: #{meta_dt_forward.1} parent=11 // pred_fallthru
        _
      // Predicated region
      $region81: #{meta_dt_forward.1} parent=11 // pred_check
        %p1083 = pneg %p497
      $region82: #{meta_dt_forward.1} parent=11 // pred_check_branch
        %1085 = sbr.rel (%p1083) target = $region84
      $region83: #{meta_dt_forward.1} parent=11 // pred_region
        _
      $region84: #{meta_dt_forward.1} parent=11 // pred_fallthru
        _
      // Predicated region
      $region85: #{meta_dt_forward.1} parent=11 // pred_check
        %p1086 = pneg %p830
      $region86: #{meta_dt_forward.1} parent=11 // pred_check_branch
        %1088 = sbr.rel (%p1086) target = $region88
      $region87: #{meta_dt_forward.1} parent=11 // pred_region
        _
      $region88: #{meta_dt_forward.1} parent=11 // pred_fallthru
        _
      // Predicated region
      $region89: #{meta_dt_forward.1} parent=11 // pred_check
        %p1089 = pneg %p851
      $region90: #{meta_dt_forward.1} parent=11 // pred_check_branch
        %1091 = sbr.rel (%p1089) target = $region92
      $region91: #{meta_dt_forward.1} parent=11 // pred_region
        _
      $region92: #{meta_dt_forward.1} parent=11 // pred_fallthru
        _
      // Predicated region
      $region93: #{meta_dt_forward.1} parent=11 // pred_check
        %p1092 = pneg %p872
      $region94: #{meta_dt_forward.1} parent=11 // pred_check_branch
        %1094 = sbr.rel (%p1092) target = $region96
      $region95: #{meta_dt_forward.1} parent=11 // pred_region
        _
      $region96: #{meta_dt_forward.1} parent=11 // pred_fallthru
        _
      // Predicated region
      $region97: #{meta_dt_forward.1} parent=11 // pred_check
        %p1095 = pneg %p893
      $region98: #{meta_dt_forward.1} parent=11 // pred_check_branch
        %1097 = sbr.rel (%p1095) target = $region100
      $region99: #{meta_dt_forward.1} parent=11 // pred_region
        _
      $region100: #{meta_dt_forward.1} parent=11 // pred_fallthru
        _
      // Predicated region
      $region101: #{meta_dt_forward.1} parent=11 // pred_check
        %p1098 = pneg %p914
      $region102: #{meta_dt_forward.1} parent=11 // pred_check_branch
        %1100 = sbr.rel (%p1098) target = $region104
      $region103: #{meta_dt_forward.1} parent=11 // pred_region
        _
      $region104: #{meta_dt_forward.1} parent=11 // pred_fallthru
        _
      // Predicated region
      $region105: #{meta_dt_forward.1} parent=11 // pred_check
        %p1101 = pneg %p935
      $region106: #{meta_dt_forward.1} parent=11 // pred_check_branch
        %1103 = sbr.rel (%p1101) target = $region108
      $region107: #{meta_dt_forward.1} parent=11 // pred_region
        _
      $region108: #{meta_dt_forward.1} parent=11 // pred_fallthru
        _
    $region12: #{meta_dt_forward.1} parent=5 // pred_fallthru
      _
    %p1104 = scmp.lt.s32.totalorder %s82, 2
    // Predicated region
    $region109: #{meta_dt_forward.1} parent=5 // pred_check
      %p1105 = pneg %p1104
    $region110: #{meta_dt_forward.1} parent=5 // pred_check_branch
      %1107 = sbr.rel (%p1105) target = $region112
    $region111: #{meta_dt_forward.1} parent=5 // pred_region
      // Predicated region
      $region113: #{meta_dt_forward.1} parent=111 // pred_check
        %p1108 = pneg %p517
      $region114: #{meta_dt_forward.1} parent=111 // pred_check_branch
        %1110 = sbr.rel (%p1108) target = $region116
      $region115: #{meta_dt_forward.1} parent=111 // pred_region
        %p1111 = scmp.lt.s32.totalorder %s90, 1
        %s1112 = scalar_select %p1111, %s90, 1
        %s1113 = scalar_lea.vmem %s37, %s1112
      $region116: #{meta_dt_forward.1} parent=111 // pred_fallthru
        _
      // Predicated region
      $region117: #{meta_dt_forward.1} parent=111 // pred_check
        %p1114 = pneg %p543
      $region118: #{meta_dt_forward.1} parent=111 // pred_check_branch
        %1116 = sbr.rel (%p1114) target = $region120
      $region119: #{meta_dt_forward.1} parent=111 // pred_region
        %p1117 = scmp.lt.s32.totalorder %s90, 1
        %s1118 = scalar_select %p1117, %s90, 1
        %s1119 = scalar_lea.vmem %s39, %s1118
      $region120: #{meta_dt_forward.1} parent=111 // pred_fallthru
        _
      // Predicated region
      $region121: #{meta_dt_forward.1} parent=111 // pred_check
        %p1120 = pneg %p569
      $region122: #{meta_dt_forward.1} parent=111 // pred_check_branch
        %1122 = sbr.rel (%p1120) target = $region124
      $region123: #{meta_dt_forward.1} parent=111 // pred_region
        %p1123 = scmp.lt.s32.totalorder %s90, 1
        %s1124 = scalar_select %p1123, %s90, 1
        %s1125 = smul.addr %s1124, 64
        %s1126 = smul.addr %s1125, 4
        %s1127 = scalar_lea.vmem %s41, %s1126
      $region124: #{meta_dt_forward.1} parent=111 // pred_fallthru
        _
      // Predicated region
      $region125: #{meta_dt_forward.1} parent=111 // pred_check
        %p1128 = pneg %p595
      $region126: #{meta_dt_forward.1} parent=111 // pred_check_branch
        %1130 = sbr.rel (%p1128) target = $region128
      $region127: #{meta_dt_forward.1} parent=111 // pred_region
        %p1131 = scmp.lt.s32.totalorder %s90, 1
        %s1132 = scalar_select %p1131, %s90, 1
        %s1133 = smul.addr %s1132, 4
        %s1134 = scalar_lea.vmem %s43, %s1133
      $region128: #{meta_dt_forward.1} parent=111 // pred_fallthru
        _
      // Predicated region
      $region129: #{meta_dt_forward.1} parent=111 // pred_check
        %p1135 = pneg %p621
      $region130: #{meta_dt_forward.1} parent=111 // pred_check_branch
        %1137 = sbr.rel (%p1135) target = $region132
      $region131: #{meta_dt_forward.1} parent=111 // pred_region
        %p1138 = scmp.lt.s32.totalorder %s90, 1
        %s1139 = scalar_select %p1138, %s90, 1
        %s1140 = smul.addr %s1139, 32
        %s1141 = smul.addr %s1140, 4
        %s1142 = scalar_lea.vmem %s45, %s1141
      $region132: #{meta_dt_forward.1} parent=111 // pred_fallthru
        _
      // Predicated region
      $region133: #{meta_dt_forward.1} parent=111 // pred_check
        %p1143 = pneg %p647
      $region134: #{meta_dt_forward.1} parent=111 // pred_check_branch
        %1145 = sbr.rel (%p1143) target = $region136
      $region135: #{meta_dt_forward.1} parent=111 // pred_region
        %p1146 = scmp.lt.s32.totalorder %s90, 1
        %s1147 = scalar_select %p1146, %s90, 1
        %s1148 = scalar_lea.vmem %s47, %s1147
      $region136: #{meta_dt_forward.1} parent=111 // pred_fallthru
        _
      // Predicated region
      $region137: #{meta_dt_forward.1} parent=111 // pred_check
        %p1149 = pneg %p673
      $region138: #{meta_dt_forward.1} parent=111 // pred_check_branch
        %1151 = sbr.rel (%p1149) target = $region140
      $region139: #{meta_dt_forward.1} parent=111 // pred_region
        %p1152 = scmp.lt.s32.totalorder %s90, 1
        %s1153 = scalar_select %p1152, %s90, 1
        %s1154 = scalar_lea.vmem %s49, %s1153
      $region140: #{meta_dt_forward.1} parent=111 // pred_fallthru
        _
      // Predicated region
      $region141: #{meta_dt_forward.1} parent=111 // pred_check
        %p1155 = pneg %p699
      $region142: #{meta_dt_forward.1} parent=111 // pred_check_branch
        %1157 = sbr.rel (%p1155) target = $region144
      $region143: #{meta_dt_forward.1} parent=111 // pred_region
        %p1158 = scmp.lt.s32.totalorder %s90, 1
        %s1159 = scalar_select %p1158, %s90, 1
        %s1160 = scalar_lea.vmem %s51, %s1159
      $region144: #{meta_dt_forward.1} parent=111 // pred_fallthru
        _
      // Predicated region
      $region145: #{meta_dt_forward.1} parent=111 // pred_check
        %p1161 = pneg %p725
      $region146: #{meta_dt_forward.1} parent=111 // pred_check_branch
        %1163 = sbr.rel (%p1161) target = $region148
      $region147: #{meta_dt_forward.1} parent=111 // pred_region
        %p1164 = scmp.lt.s32.totalorder %s90, 1
        %s1165 = scalar_select %p1164, %s90, 1
        %s1166 = smul.addr %s1165, 16
        %s1167 = smul.addr %s1166, 4
        %s1168 = scalar_lea.vmem %s53, %s1167
      $region148: #{meta_dt_forward.1} parent=111 // pred_fallthru
        _
      // Predicated region
      $region149: #{meta_dt_forward.1} parent=111 // pred_check
        %p1169 = pneg %p751
      $region150: #{meta_dt_forward.1} parent=111 // pred_check_branch
        %1171 = sbr.rel (%p1169) target = $region152
      $region151: #{meta_dt_forward.1} parent=111 // pred_region
        %p1172 = scmp.lt.s32.totalorder %s90, 1
        %s1173 = scalar_select %p1172, %s90, 1
        %s1174 = scalar_lea.vmem %s55, %s1173
      $region152: #{meta_dt_forward.1} parent=111 // pred_fallthru
        _
      // Predicated region
      $region153: #{meta_dt_forward.1} parent=111 // pred_check
        %p1175 = pneg %p777
      $region154: #{meta_dt_forward.1} parent=111 // pred_check_branch
        %1177 = sbr.rel (%p1175) target = $region156
      $region155: #{meta_dt_forward.1} parent=111 // pred_region
        %p1178 = scmp.lt.s32.totalorder %s90, 1
        %s1179 = scalar_select %p1178, %s90, 1
        %s1180 = smul.addr %s1179, 16
        %s1181 = smul.addr %s1180, 4
        %s1182 = scalar_lea.vmem %s57, %s1181
      $region156: #{meta_dt_forward.1} parent=111 // pred_fallthru
        _
      // Predicated region
      $region157: #{meta_dt_forward.1} parent=111 // pred_check
        %p1183 = pneg %p803
      $region158: #{meta_dt_forward.1} parent=111 // pred_check_branch
        %1185 = sbr.rel (%p1183) target = $region160
      $region159: #{meta_dt_forward.1} parent=111 // pred_region
        %p1186 = scmp.lt.s32.totalorder %s90, 1
        %s1187 = scalar_select %p1186, %s90, 1
        %s1188 = scalar_lea.vmem %s59, %s1187
      $region160: #{meta_dt_forward.1} parent=111 // pred_fallthru
        _
    $region112: #{meta_dt_forward.1} parent=5 // pred_fallthru
      _
    %p1189 = scmp.le.s32.totalorder 1, %s82
    %p1190 = scmp.lt.s32.totalorder %s82, 3
    %p1191 = pnand %p1189, %p1190
    %p1192 = pneg %p1191
    // Predicated region
    $region161: #{meta_dt_forward.1} parent=5 // pred_check
      _
    $region162: #{meta_dt_forward.1} parent=5 // pred_check_branch
      %1194 = sbr.rel (%p1191) target = $region164
    $region163: #{meta_dt_forward.1} parent=5 // pred_region
      %s1195 = ssub.s32 %s82, 1
      %s1196 = smul.u32 2, %s91
      %p1197 = scmp.lt.s32.totalorder %s1196, 1
      %s1198 = scalar_select %p1197, %s1196, 1
      %s1199 = smul.addr %s1198, 8
      %s1200 = scalar_lea.vmem %s1, %s1199
      %p1201 = pneg %p120
      %p1202 = pneg %p117
      %s1203 = smul.u32 2, %s91
      %p1204 = scmp.lt.s32.totalorder %s1203, 1
      %s1205 = scalar_select %p1204, %s1203, 1
      %s1206 = smul.addr %s1205, 8
      %s1207 = scalar_lea.vmem %s3, %s1206
      %p1208 = pneg %p146
      %p1209 = pneg %p143
      %s1210 = smul.u32 2, %s91
      %p1211 = scmp.lt.s32.totalorder %s1210, 1
      %s1212 = scalar_select %p1211, %s1210, 1
      %s1213 = smul.addr %s1212, 8
      %s1214 = scalar_lea.vmem %s5, %s1213
      %p1215 = pneg %p172
      %p1216 = pneg %p169
      %s1217 = smul.u32 2, %s91
      %p1218 = scmp.lt.s32.totalorder %s1217, 1
      %s1219 = scalar_select %p1218, %s1217, 1
      %s1220 = smul.addr %s1219, 8
      %s1221 = scalar_lea.vmem %s7, %s1220
      %p1222 = pneg %p198
      %p1223 = pneg %p195
      %s1224 = smul.u32 2, %s91
      %p1225 = scmp.lt.s32.totalorder %s1224, 1
      %s1226 = scalar_select %p1225, %s1224, 1
      %s1227 = smul.addr %s1226, 8
      %s1228 = scalar_lea.vmem %s9, %s1227
      %p1229 = pneg %p224
      %p1230 = pneg %p221
      %p1231 = pneg %p245
      %p1232 = pneg %p242
      %p1233 = pneg %p266
      %p1234 = pneg %p263
      %p1235 = pneg %p287
      %p1236 = pneg %p284
      %p1237 = pneg %p308
      %p1238 = pneg %p305
      %p1239 = pneg %p329
      %p1240 = pneg %p326
      %p1241 = pneg %p350
      %p1242 = pneg %p347
      %p1243 = pneg %p371
      %p1244 = pneg %p368
      %p1245 = pneg %p392
      %p1246 = pneg %p389
      %p1247 = pneg %p413
      %p1248 = pneg %p410
      %p1249 = pneg %p434
      %p1250 = pneg %p431
      %p1251 = pneg %p455
      %p1252 = pneg %p452
      %p1253 = pneg %p476
      %p1254 = pneg %p473
      %p1255 = pneg %p497
      %p1256 = pneg %p494
      %p1257 = scmp.lt.s32.totalorder %s92, 1
      %s1258 = scalar_select %p1257, %s92, 1
      %s1259 = scalar_lea.vmem %s37, %s1258
      %p1260 = pneg %p523
      %p1261 = pneg %p520
      %p1262 = scmp.lt.s32.totalorder %s92, 1
      %s1263 = scalar_select %p1262, %s92, 1
      %s1264 = scalar_lea.vmem %s39, %s1263
      %p1265 = pneg %p549
      %p1266 = pneg %p546
      %p1267 = scmp.lt.s32.totalorder %s92, 1
      %s1268 = scalar_select %p1267, %s92, 1
      %s1269 = smul.addr %s1268, 64
      %s1270 = smul.addr %s1269, 4
      %s1271 = scalar_lea.vmem %s41, %s1270
      %p1272 = pneg %p575
      %p1273 = pneg %p572
      %p1274 = scmp.lt.s32.totalorder %s92, 1
      %s1275 = scalar_select %p1274, %s92, 1
      %s1276 = smul.addr %s1275, 4
      %s1277 = scalar_lea.vmem %s43, %s1276
      %p1278 = pneg %p601
      %p1279 = pneg %p598
      %p1280 = scmp.lt.s32.totalorder %s92, 1
      %s1281 = scalar_select %p1280, %s92, 1
      %s1282 = smul.addr %s1281, 32
      %s1283 = smul.addr %s1282, 4
      %s1284 = scalar_lea.vmem %s45, %s1283
      %p1285 = pneg %p627
      %p1286 = pneg %p624
      %p1287 = scmp.lt.s32.totalorder %s92, 1
      %s1288 = scalar_select %p1287, %s92, 1
      %s1289 = scalar_lea.vmem %s47, %s1288
      %p1290 = pneg %p653
      %p1291 = pneg %p650
      %p1292 = scmp.lt.s32.totalorder %s92, 1
      %s1293 = scalar_select %p1292, %s92, 1
      %s1294 = scalar_lea.vmem %s49, %s1293
      %p1295 = pneg %p679
      %p1296 = pneg %p676
      %p1297 = scmp.lt.s32.totalorder %s92, 1
      %s1298 = scalar_select %p1297, %s92, 1
      %s1299 = scalar_lea.vmem %s51, %s1298
      %p1300 = pneg %p705
      %p1301 = pneg %p702
      %p1302 = scmp.lt.s32.totalorder %s92, 1
      %s1303 = scalar_select %p1302, %s92, 1
      %s1304 = smul.addr %s1303, 16
      %s1305 = smul.addr %s1304, 4
      %s1306 = scalar_lea.vmem %s53, %s1305
      %p1307 = pneg %p731
      %p1308 = pneg %p728
      %p1309 = scmp.lt.s32.totalorder %s92, 1
      %s1310 = scalar_select %p1309, %s92, 1
      %s1311 = scalar_lea.vmem %s55, %s1310
      %p1312 = pneg %p757
      %p1313 = pneg %p754
      %p1314 = scmp.lt.s32.totalorder %s92, 1
      %s1315 = scalar_select %p1314, %s92, 1
      %s1316 = smul.addr %s1315, 16
      %s1317 = smul.addr %s1316, 4
      %s1318 = scalar_lea.vmem %s57, %s1317
      %p1319 = pneg %p783
      %p1320 = pneg %p780
      %p1321 = scmp.lt.s32.totalorder %s92, 1
      %s1322 = scalar_select %p1321, %s92, 1
      %s1323 = scalar_lea.vmem %s59, %s1322
      %p1324 = pneg %p809
      %p1325 = pneg %p806
      %p1326 = pneg %p830
      %p1327 = pneg %p827
      %p1328 = pneg %p851
      %p1329 = pneg %p848
      %p1330 = pneg %p872
      %p1331 = pneg %p869
      %p1332 = pneg %p893
      %p1333 = pneg %p890
      %p1334 = pneg %p914
      %p1335 = pneg %p911
      %p1336 = pneg %p935
      %p1337 = pneg %p932
      %p1338 = pneg %p961
      %p1339 = pneg %p958
      %s1340 = smul.u32 2, %s91
      %p1341 = scmp.lt.s32.totalorder %s1340, 1
      %s1342 = scalar_select %p1341, %s1340, 1
      %s1343 = smul.addr %s1342, 8
      %s1344 = scalar_lea.vmem %s73, %s1343
      %p1345 = pneg %p987
      %p1346 = pneg %p984
      %s1347 = smul.u32 2, %s91
      %p1348 = scmp.lt.s32.totalorder %s1347, 1
      %s1349 = scalar_select %p1348, %s1347, 1
      %s1350 = smul.addr %s1349, 8
      %s1351 = scalar_lea.vmem %s75, %s1350
      %s1352 = smul.u32 2, %s91
      %p1353 = scmp.lt.s32.totalorder %s1352, 1
      %s1354 = scalar_select %p1353, %s1352, 1
      %s1355 = smul.addr %s1354, 8
      %s1356 = scalar_lea.vmem %s1, %s1355
      %s1357 = smul.u32 2, %s91
      %s1358 = smul.u32 2, %s91
      %p1359 = scmp.lt.s32.totalorder %s1358, 1
      %s1360 = scalar_select %p1359, %s1358, 1
      %s1361 = smul.addr %s1360, 8
      %s1362 = scalar_lea.vmem %s3, %s1361
      %s1363 = smul.u32 2, %s91
      %s1364 = smul.u32 2, %s91
      %p1365 = scmp.lt.s32.totalorder %s1364, 1
      %s1366 = scalar_select %p1365, %s1364, 1
      %s1367 = smul.addr %s1366, 8
      %s1368 = scalar_lea.vmem %s5, %s1367
      %s1369 = smul.u32 2, %s91
      %s1370 = smul.u32 2, %s91
      %p1371 = scmp.lt.s32.totalorder %s1370, 1
      %s1372 = scalar_select %p1371, %s1370, 1
      %s1373 = smul.addr %s1372, 8
      %s1374 = scalar_lea.vmem %s7, %s1373
      %s1375 = smul.u32 2, %s91
      %s1376 = smul.u32 2, %s91
      %p1377 = scmp.lt.s32.totalorder %s1376, 1
      %s1378 = scalar_select %p1377, %s1376, 1
      %s1379 = smul.addr %s1378, 8
      %s1380 = scalar_lea.vmem %s9, %s1379
      %s1381 = smul.u32 2, %s91
      %p1382 = scmp.lt.s32.totalorder %s92, 1
      %s1383 = scalar_select %p1382, %s92, 1
      %s1384 = scalar_lea.vmem %s37, %s1383
      %p1385 = scmp.lt.s32.totalorder %s92, 1
      %s1386 = scalar_select %p1385, %s92, 1
      %s1387 = scalar_lea.vmem %s39, %s1386
      %p1388 = scmp.lt.s32.totalorder %s92, 1
      %s1389 = scalar_select %p1388, %s92, 1
      %s1390 = smul.addr %s1389, 64
      %s1391 = smul.addr %s1390, 4
      %s1392 = scalar_lea.vmem %s41, %s1391
      %p1393 = scmp.lt.s32.totalorder %s92, 1
      %s1394 = scalar_select %p1393, %s92, 1
      %s1395 = smul.addr %s1394, 4
      %s1396 = scalar_lea.vmem %s43, %s1395
      %p1397 = scmp.lt.s32.totalorder %s92, 1
      %s1398 = scalar_select %p1397, %s92, 1
      %s1399 = smul.addr %s1398, 32
      %s1400 = smul.addr %s1399, 4
      %s1401 = scalar_lea.vmem %s45, %s1400
      %p1402 = scmp.lt.s32.totalorder %s92, 1
      %s1403 = scalar_select %p1402, %s92, 1
      %s1404 = scalar_lea.vmem %s47, %s1403
      %p1405 = scmp.lt.s32.totalorder %s92, 1
      %s1406 = scalar_select %p1405, %s92, 1
      %s1407 = scalar_lea.vmem %s49, %s1406
      %p1408 = scmp.lt.s32.totalorder %s92, 1
      %s1409 = scalar_select %p1408, %s92, 1
      %s1410 = scalar_lea.vmem %s51, %s1409
      %p1411 = scmp.lt.s32.totalorder %s92, 1
      %s1412 = scalar_select %p1411, %s92, 1
      %s1413 = smul.addr %s1412, 16
      %s1414 = smul.addr %s1413, 4
      %s1415 = scalar_lea.vmem %s53, %s1414
      %p1416 = scmp.lt.s32.totalorder %s92, 1
      %s1417 = scalar_select %p1416, %s92, 1
      %s1418 = scalar_lea.vmem %s55, %s1417
      %p1419 = scmp.lt.s32.totalorder %s92, 1
      %s1420 = scalar_select %p1419, %s92, 1
      %s1421 = smul.addr %s1420, 16
      %s1422 = smul.addr %s1421, 4
      %s1423 = scalar_lea.vmem %s57, %s1422
      %p1424 = scmp.lt.s32.totalorder %s92, 1
      %s1425 = scalar_select %p1424, %s92, 1
      %s1426 = scalar_lea.vmem %s59, %s1425
      %s1427 = smul.u32 2, %s91
      %p1428 = scmp.lt.s32.totalorder %s1427, 1
      %s1429 = scalar_select %p1428, %s1427, 1
      %s1430 = smul.addr %s1429, 8
      %s1431 = scalar_lea.vmem %s73, %s1430
      %s1432 = smul.u32 2, %s91
      %s1433 = smul.u32 2, %s91
      %p1434 = scmp.lt.s32.totalorder %s1433, 1
      %s1435 = scalar_select %p1434, %s1433, 1
      %s1436 = smul.addr %s1435, 8
      %s1437 = scalar_lea.vmem %s75, %s1436
      %s1438 = smul.u32 2, %s91
      %v1440 = vlaneseq
      %v1441 = vand.u32 %v1440, 127
      %vm1442 = vcmp.lt.s32.totalorder %v1441, 32
      %v1443 = vsel %vm1442, 1, 0
      %v1444 = vcvt.s32.f32 %v1443
      %p1445 = scmp.eq.s32.totalorder %s92, 0
      // Predicated region
      $region165: #{meta_dt_forward.1} parent=163 // pred_check
        %p1446 = pneg %p1445
      $region166: #{meta_dt_forward.1} parent=163 // pred_check_branch
        %1448 = sbr.rel (%p1446) target = $region168
      $region167: #{meta_dt_forward.1} parent=163 // pred_region
        %v1449 = vld [vmem:[%s1380] sm:$0xff]
        %v1450 = vld [vmem:[%s1380 + $0x8] sm:$0xff]
        %v1451 = vld [vmem:[%s1356] sm:$0xff]
        %v1452 = vld [vmem:[%s1356 + $0x8] sm:$0xff]
        %v1453 = vld [vmem:[%s15] sm:$0xff]
        %v1454 = vld [vmem:[%s15 + $0x8] sm:$0x7]
        %v1455 = vld [vmem:[%s17] sm:$0x1]
        %v1457 = vlaneseq
        %v1458 = vshrl.u32 %v1457, 7
        %v1459 = vsub.s32 0, %v1458
        %v1460 = vrot.slane %v1455, %v1459
        %vm1462 = vcmask 89088
        %v1464 = vsel %vm1462, %v1451, 0
        %v1467 = vsel %vm1462, %v1452, 0
        %vm1469 = vcmask 1042432
        %v1471 = vsel %vm1469, %v1454, 0
        %1473 = vmatprep.subr.mxu0 0.0
        %1474 = vmatpush1.msra.mxu0 %v1453
        %1475 = vmatprep.subr.mxu0 0.0
        %1476 = vmatpush1.msra.mxu0 %v1471
        %1477 = vmatprep.subr.mxu0 0.0
        %1478 = vmatpush1.msra.mxu0 0.0
        %1479 = vmatprep.subr.mxu0 0.0
        %1480 = vmatpush1.msra.mxu0 0.0
        %1481 = vmatprep.subr.mxu0 0.0
        %1482 = vmatpush1.msra.mxu0 0.0
        %1483 = vmatprep.subr.mxu0 0.0
        %1484 = vmatpush1.msra.mxu0 0.0
        %1485 = vmatprep.subr.mxu0 0.0
        %1486 = vmatpush1.msra.mxu0 0.0
        %1487 = vmatprep.subr.mxu0 0.0
        %1488 = vmatpush1.msra.mxu0 0.0
        %1489 = vmatprep.subr.mxu0 0.0
        %1490 = vmatpush1.msra.mxu0 0.0
        %1491 = vmatprep.subr.mxu0 0.0
        %1492 = vmatpush1.msra.mxu0 0.0
        %1493 = vmatprep.subr.mxu0 0.0
        %1494 = vmatpush1.msra.mxu0 0.0
        %1495 = vmatprep.subr.mxu0 0.0
        %1496 = vmatpush1.msra.mxu0 0.0
        %1497 = vmatprep.subr.mxu0 0.0
        %1498 = vmatpush1.msra.mxu0 0.0
        %1499 = vmatprep.subr.mxu0 0.0
        %1500 = vmatpush1.msra.mxu0 0.0
        %1501 = vmatprep.subr.mxu0 0.0
        %1502 = vmatpush1.msra.mxu0 0.0
        %1503 = vmatprep.subr.mxu0 0.0
        %1504 = vmatpush1.msra.mxu0 0.0
        %1505 = vmatprep.subr.mxu0 0.0
        %1506 = vmatpush1.msra.mxu0 0.0
        %1507 = vmatprep.subr.mxu0 0.0
        %1508 = vmatpush1.msra.mxu0 0.0
        %1509 = vmatprep.subr.mxu0 0.0
        %1510 = vmatpush1.msra.mxu0 0.0
        %1511 = vmatprep.subr.mxu0 0.0
        %1512 = vmatpush1.msra.mxu0 0.0
        %1513 = vmatprep.subr.mxu0 0.0
        %1514 = vmatpush1.msra.mxu0 0.0
        %1515 = vmatprep.subr.mxu0 0.0
        %1516 = vmatpush1.msra.mxu0 0.0
        %1517 = vmatprep.subr.mxu0 0.0
        %1518 = vmatpush1.msra.mxu0 0.0
        %1519 = vmatprep.subr.mxu0 0.0
        %1520 = vmatpush1.msra.mxu0 0.0
        %1521 = vmatprep.subr.mxu0 0.0
        %1522 = vmatpush1.msra.mxu0 0.0
        %1523 = vmatprep.subr.mxu0 0.0
        %1524 = vmatpush1.msra.mxu0 0.0
        %1525 = vmatprep.subr.mxu0 0.0
        %1526 = vmatpush1.msra.mxu0 0.0
        %1527 = vmatprep.subr.mxu0 0.0
        %1528 = vmatpush1.msra.mxu0 0.0
        %1529 = vmatprep.subr.mxu0 0.0
        %1530 = vmatpush1.msra.mxu0 0.0
        %1531 = vmatprep.subr.mxu0 0.0
        %1532 = vmatpush1.msra.mxu0 0.0
        %1533 = vmatprep.subr.mxu0 0.0
        %1534 = vmatpush1.msra.mxu0 0.0
        %1535 = vmatprep.subr.mxu0 0.0
        %1536 = vmatpush1.msra.mxu0 0.0
        %1537 = vmatprep.mubr.f32.mxu0 0.0
        %1538 = vmatmul.mubr.f32.gmra.mrb[0].mxu0 %v1464
        %v1539 = vpop.f32.mrb[0].mxu0
        %v1540 = vadd.f32 %v1460, %v1539
        %v1541 = vpop.f32.mrb[0].mxu0
        %1542 = vmatprep.mubr.f32.mxu0 0.0
        %1543 = vmatmul.mubr.f32.gmra.mrb[0].mxu0 %v1467
        %v1544 = vpop.f32.mrb[0].mxu0
        %v1545 = vadd.f32 %v1460, %v1544
        %v1546 = vpop.f32.mrb[0].mxu0
        %1547 = vdwg.mxu0
        %v1548 = vld [vmem:[%s19] sm:$0xff]
        %v1549 = vld [vmem:[%s1362] sm:$0xff]
        %v1550 = vld [vmem:[%s1362 + $0x8] sm:$0xff]
        %v1551 = vld [vmem:[%s21] sm:$0xff]
        %vm1552 = vcmask 64512
        %v1554 = vsel %vm1552, %v1549, 0
        %v1557 = vsel %vm1552, %v1550, 0
        %1559 = vmatprep.subr.mxu0 0.0
        %1560 = vmatpush1.msra.mxu0 %v1551
        %1561 = vmatprep.subr.mxu0 0.0
        %1562 = vmatpush1.msra.mxu0 0.0
        %1563 = vmatprep.subr.mxu0 0.0
        %1564 = vmatpush1.msra.mxu0 0.0
        %1565 = vmatprep.subr.mxu0 0.0
        %1566 = vmatpush1.msra.mxu0 0.0
        %1567 = vmatprep.subr.mxu0 0.0
        %1568 = vmatpush1.msra.mxu0 0.0
        %1569 = vmatprep.subr.mxu0 0.0
        %1570 = vmatpush1.msra.mxu0 0.0
        %1571 = vmatprep.subr.mxu0 0.0
        %1572 = vmatpush1.msra.mxu0 0.0
        %1573 = vmatprep.subr.mxu0 0.0
        %1574 = vmatpush1.msra.mxu0 0.0
        %1575 = vmatprep.subr.mxu0 0.0
        %1576 = vmatpush1.msra.mxu0 0.0
        %1577 = vmatprep.subr.mxu0 0.0
        %1578 = vmatpush1.msra.mxu0 0.0
        %1579 = vmatprep.subr.mxu0 0.0
        %1580 = vmatpush1.msra.mxu0 0.0
        %1581 = vmatprep.subr.mxu0 0.0
        %1582 = vmatpush1.msra.mxu0 0.0
        %1583 = vmatprep.subr.mxu0 0.0
        %1584 = vmatpush1.msra.mxu0 0.0
        %1585 = vmatprep.subr.mxu0 0.0
        %1586 = vmatpush1.msra.mxu0 0.0
        %1587 = vmatprep.subr.mxu0 0.0
        %1588 = vmatpush1.msra.mxu0 0.0
        %1589 = vmatprep.subr.mxu0 0.0
        %1590 = vmatpush1.msra.mxu0 0.0
        %1591 = vmatprep.subr.mxu0 0.0
        %1592 = vmatpush1.msra.mxu0 0.0
        %1593 = vmatprep.subr.mxu0 0.0
        %1594 = vmatpush1.msra.mxu0 0.0
        %1595 = vmatprep.subr.mxu0 0.0
        %1596 = vmatpush1.msra.mxu0 0.0
        %1597 = vmatprep.subr.mxu0 0.0
        %1598 = vmatpush1.msra.mxu0 0.0
        %1599 = vmatprep.subr.mxu0 0.0
        %1600 = vmatpush1.msra.mxu0 0.0
        %1601 = vmatprep.subr.mxu0 0.0
        %1602 = vmatpush1.msra.mxu0 0.0
        %1603 = vmatprep.subr.mxu0 0.0
        %1604 = vmatpush1.msra.mxu0 0.0
        %1605 = vmatprep.subr.mxu0 0.0
        %1606 = vmatpush1.msra.mxu0 0.0
        %1607 = vmatprep.subr.mxu0 0.0
        %1608 = vmatpush1.msra.mxu0 0.0
        %1609 = vmatprep.subr.mxu0 0.0
        %1610 = vmatpush1.msra.mxu0 0.0
        %1611 = vmatprep.subr.mxu0 0.0
        %1612 = vmatpush1.msra.mxu0 0.0
        %1613 = vmatprep.subr.mxu0 0.0
        %1614 = vmatpush1.msra.mxu0 0.0
        %1615 = vmatprep.subr.mxu0 0.0
        %1616 = vmatpush1.msra.mxu0 0.0
        %1617 = vmatprep.subr.mxu0 0.0
        %1618 = vmatpush1.msra.mxu0 0.0
        %1619 = vmatprep.subr.mxu0 0.0
        %1620 = vmatpush1.msra.mxu0 0.0
        %1621 = vmatprep.subr.mxu0 0.0
        %1622 = vmatpush1.msra.mxu0 0.0
        %1623 = vmatprep.mubr.f32.mxu0 0.0
        %1624 = vmatmul.mubr.f32.gmra.mrb[0].mxu0 %v1554
        %v1625 = vpop.f32.mrb[0].mxu0
        %v1626 = vadd.f32 0.0, %v1625
        %v1627 = vpop.f32.mrb[0].mxu0
        %1628 = vmatprep.mubr.f32.mxu0 0.0
        %1629 = vmatmul.mubr.f32.gmra.mrb[0].mxu0 %v1557
        %v1630 = vpop.f32.mrb[0].mxu0
        %v1631 = vadd.f32 0.0, %v1630
        %v1632 = vpop.f32.mrb[0].mxu0
        %1633 = vdwg.mxu0
        %v1635 = vsel %vm1552, %v1540, 0
        %v1638 = vsel %vm1552, %v1545, 0
        %1640 = vmatprep.subr.mxu0 0.0
        %1641 = vmatpush1.msra.mxu0 %v1548
        %1642 = vmatprep.subr.mxu0 0.0
        %1643 = vmatpush1.msra.mxu0 0.0
        %1644 = vmatprep.subr.mxu0 0.0
        %1645 = vmatpush1.msra.mxu0 0.0
        %1646 = vmatprep.subr.mxu0 0.0
        %1647 = vmatpush1.msra.mxu0 0.0
        %1648 = vmatprep.subr.mxu0 0.0
        %1649 = vmatpush1.msra.mxu0 0.0
        %1650 = vmatprep.subr.mxu0 0.0
        %1651 = vmatpush1.msra.mxu0 0.0
        %1652 = vmatprep.subr.mxu0 0.0
        %1653 = vmatpush1.msra.mxu0 0.0
        %1654 = vmatprep.subr.mxu0 0.0
        %1655 = vmatpush1.msra.mxu0 0.0
        %1656 = vmatprep.subr.mxu0 0.0
        %1657 = vmatpush1.msra.mxu0 0.0
        %1658 = vmatprep.subr.mxu0 0.0
        %1659 = vmatpush1.msra.mxu0 0.0
        %1660 = vmatprep.subr.mxu0 0.0
        %1661 = vmatpush1.msra.mxu0 0.0
        %1662 = vmatprep.subr.mxu0 0.0
        %1663 = vmatpush1.msra.mxu0 0.0
        %1664 = vmatprep.subr.mxu0 0.0
        %1665 = vmatpush1.msra.mxu0 0.0
        %1666 = vmatprep.subr.mxu0 0.0
        %1667 = vmatpush1.msra.mxu0 0.0
        %1668 = vmatprep.subr.mxu0 0.0
        %1669 = vmatpush1.msra.mxu0 0.0
        %1670 = vmatprep.subr.mxu0 0.0
        %1671 = vmatpush1.msra.mxu0 0.0
        %1672 = vmatprep.subr.mxu0 0.0
        %1673 = vmatpush1.msra.mxu0 0.0
        %1674 = vmatprep.subr.mxu0 0.0
        %1675 = vmatpush1.msra.mxu0 0.0
        %1676 = vmatprep.subr.mxu0 0.0
        %1677 = vmatpush1.msra.mxu0 0.0
        %1678 = vmatprep.subr.mxu0 0.0
        %1679 = vmatpush1.msra.mxu0 0.0
        %1680 = vmatprep.subr.mxu0 0.0
        %1681 = vmatpush1.msra.mxu0 0.0
        %1682 = vmatprep.subr.mxu0 0.0
        %1683 = vmatpush1.msra.mxu0 0.0
        %1684 = vmatprep.subr.mxu0 0.0
        %1685 = vmatpush1.msra.mxu0 0.0
        %1686 = vmatprep.subr.mxu0 0.0
        %1687 = vmatpush1.msra.mxu0 0.0
        %1688 = vmatprep.subr.mxu0 0.0
        %1689 = vmatpush1.msra.mxu0 0.0
        %1690 = vmatprep.subr.mxu0 0.0
        %1691 = vmatpush1.msra.mxu0 0.0
        %1692 = vmatprep.subr.mxu0 0.0
        %1693 = vmatpush1.msra.mxu0 0.0
        %1694 = vmatprep.subr.mxu0 0.0
        %1695 = vmatpush1.msra.mxu0 0.0
        %1696 = vmatprep.subr.mxu0 0.0
        %1697 = vmatpush1.msra.mxu0 0.0
        %1698 = vmatprep.subr.mxu0 0.0
        %1699 = vmatpush1.msra.mxu0 0.0
        %1700 = vmatprep.subr.mxu0 0.0
        %1701 = vmatpush1.msra.mxu0 0.0
        %1702 = vmatprep.subr.mxu0 0.0
        %1703 = vmatpush1.msra.mxu0 0.0
        %1704 = vmatprep.mubr.f32.mxu0 0.0
        %1705 = vmatmul.mubr.f32.gmra.mrb[0].mxu0 %v1635
        %v1706 = vpop.f32.mrb[0].mxu0
        %v1707 = vadd.f32 %v1626, %v1706
        %v1708 = vpop.f32.mrb[0].mxu0
        %1709 = vmatprep.mubr.f32.mxu0 0.0
        %1710 = vmatmul.mubr.f32.gmra.mrb[0].mxu0 %v1638
        %v1711 = vpop.f32.mrb[0].mxu0
        %v1712 = vadd.f32 %v1631, %v1711
        %v1713 = vpop.f32.mrb[0].mxu0
        %1714 = vdwg.mxu0
        %v1715 = vld [vmem:[%s23] sm:$0x1]
        %v1717 = vlaneseq
        %v1718 = vshrl.u32 %v1717, 7
        %v1719 = vsub.s32 0, %v1718
        %v1720 = vrot.slane %v1715, %v1719
        %v1722 = vadd.f32 %v1707, %v1720
        %v1723 = vadd.f32 %v1712, %v1720
        %v1724 = vadd.f32 %v1722, %v1449
        %v1725 = vadd.f32 %v1723, %v1450
        %v1726 = vld [vmem:[%s1368] sm:$0xff]
        %v1727 = vld [vmem:[%s1368 + $0x8] sm:$0xff]
        %v1728 = vld [vmem:[%s25] sm:$0x7]
        %v1729 = vld [vmem:[%s27] sm:$0x1]
        %v1731 = vlaneseq
        %v1732 = vshrl.u32 %v1731, 7
        %v1733 = vsub.s32 0, %v1732
        %v1734 = vrot.slane %v1729, %v1733
        %vm1736 = vcmask 23552
        %v1738 = vsel %vm1736, %v1726, 0
        %v1741 = vsel %vm1736, %v1727, 0
        %v1744 = vsel %vm1469, %v1728, 0
        %1746 = vmatprep.subr.mxu0 0.0
        %1747 = vmatpush1.msra.mxu0 %v1744
        %1748 = vmatprep.subr.mxu0 0.0
        %1749 = vmatpush1.msra.mxu0 0.0
        %1750 = vmatprep.subr.mxu0 0.0
        %1751 = vmatpush1.msra.mxu0 0.0
        %1752 = vmatprep.subr.mxu0 0.0
        %1753 = vmatpush1.msra.mxu0 0.0
        %1754 = vmatprep.subr.mxu0 0.0
        %1755 = vmatpush1.msra.mxu0 0.0
        %1756 = vmatprep.subr.mxu0 0.0
        %1757 = vmatpush1.msra.mxu0 0.0
        %1758 = vmatprep.subr.mxu0 0.0
        %1759 = vmatpush1.msra.mxu0 0.0
        %1760 = vmatprep.subr.mxu0 0.0
        %1761 = vmatpush1.msra.mxu0 0.0
        %1762 = vmatprep.subr.mxu0 0.0
        %1763 = vmatpush1.msra.mxu0 0.0
        %1764 = vmatprep.subr.mxu0 0.0
        %1765 = vmatpush1.msra.mxu0 0.0
        %1766 = vmatprep.subr.mxu0 0.0
        %1767 = vmatpush1.msra.mxu0 0.0
        %1768 = vmatprep.subr.mxu0 0.0
        %1769 = vmatpush1.msra.mxu0 0.0
        %1770 = vmatprep.subr.mxu0 0.0
        %1771 = vmatpush1.msra.mxu0 0.0
        %1772 = vmatprep.subr.mxu0 0.0
        %1773 = vmatpush1.msra.mxu0 0.0
        %1774 = vmatprep.subr.mxu0 0.0
        %1775 = vmatpush1.msra.mxu0 0.0
        %1776 = vmatprep.subr.mxu0 0.0
        %1777 = vmatpush1.msra.mxu0 0.0
        %1778 = vmatprep.subr.mxu0 0.0
        %1779 = vmatpush1.msra.mxu0 0.0
        %1780 = vmatprep.subr.mxu0 0.0
        %1781 = vmatpush1.msra.mxu0 0.0
        %1782 = vmatprep.subr.mxu0 0.0
        %1783 = vmatpush1.msra.mxu0 0.0
        %1784 = vmatprep.subr.mxu0 0.0
        %1785 = vmatpush1.msra.mxu0 0.0
        %1786 = vmatprep.subr.mxu0 0.0
        %1787 = vmatpush1.msra.mxu0 0.0
        %1788 = vmatprep.subr.mxu0 0.0
        %1789 = vmatpush1.msra.mxu0 0.0
        %1790 = vmatprep.subr.mxu0 0.0
        %1791 = vmatpush1.msra.mxu0 0.0
        %1792 = vmatprep.subr.mxu0 0.0
        %1793 = vmatpush1.msra.mxu0 0.0
        %1794 = vmatprep.subr.mxu0 0.0
        %1795 = vmatpush1.msra.mxu0 0.0
        %1796 = vmatprep.subr.mxu0 0.0
        %1797 = vmatpush1.msra.mxu0 0.0
        %1798 = vmatprep.subr.mxu0 0.0
        %1799 = vmatpush1.msra.mxu0 0.0
        %1800 = vmatprep.subr.mxu0 0.0
        %1801 = vmatpush1.msra.mxu0 0.0
        %1802 = vmatprep.subr.mxu0 0.0
        %1803 = vmatpush1.msra.mxu0 0.0
        %1804 = vmatprep.subr.mxu0 0.0
        %1805 = vmatpush1.msra.mxu0 0.0
        %1806 = vmatprep.subr.mxu0 0.0
        %1807 = vmatpush1.msra.mxu0 0.0
        %1808 = vmatprep.subr.mxu0 0.0
        %1809 = vmatpush1.msra.mxu0 0.0
        %1810 = vmatprep.mubr.f32.mxu0 0.0
        %1811 = vmatmul.mubr.f32.gmra.mrb[0].mxu0 %v1738
        %v1812 = vpop.f32.mrb[0].mxu0
        %v1813 = vadd.f32 %v1734, %v1812
        %v1814 = vpop.f32.mrb[0].mxu0
        %1815 = vmatprep.mubr.f32.mxu0 0.0
        %1816 = vmatmul.mubr.f32.gmra.mrb[0].mxu0 %v1741
        %v1817 = vpop.f32.mrb[0].mxu0
        %v1818 = vadd.f32 %v1734, %v1817
        %v1819 = vpop.f32.mrb[0].mxu0
        %1820 = vdwg.mxu0
        %v1821 = vadd.f32 %v1813, %v1449
        %v1822 = vadd.f32 %v1818, %v1450
        %v1823 = vld [vmem:[%s1374] sm:$0xff]
        %v1824 = vld [vmem:[%s1374 + $0x8] sm:$0xff]
        %v1825 = vld [vmem:[%s29] sm:$0x1]
        %1827 = vset.pattern.permute.xlu0 0
        %1828 = vperm.xlu0 %1827, %v1823
        %v1829 = vpop.permute.xlu0 %1828
        %1832 = vset.pattern.permute.xlu0 0
        %1833 = vperm.xlu0 %1832, %v1824
        %v1834 = vpop.permute.xlu0 %1833
        %v1837 = vlaneseq
        %v1838 = vshrl.u32 %v1837, 7
        %v1839 = vsub.s32 0, %v1838
        %v1840 = vrot.slane %v1825, %v1839
        %v1842 = vmul.f32 %v1829, %v1840
        %v1843 = vmul.f32 %v1834, %v1840
        %v1844 = vld [vmem:[%s31] sm:$0x1]
        %v1846 = vlaneseq
        %v1847 = vshrl.u32 %v1846, 7
        %v1848 = vsub.s32 0, %v1847
        %v1849 = vrot.slane %v1844, %v1848
        %v1851 = vadd.f32 %v1842, %v1849
        %v1852 = vadd.f32 %v1843, %v1849
        %v1853 = vadd.f32 %v1851, %v1449
        %v1854 = vadd.f32 %v1852, %v1450
        %v1855 = vmul.f32 %v1853, %v1444
        %v1856 = vmul.f32 %v1854, %v1444
        %1857 = vadd.xlane.f32.xlu0 %v1855
        %v1858 = vpop.xlane.xlu0 %1857
        %1859 = vadd.xlane.f32.xlu0 %v1856
        %v1860 = vpop.xlane.xlu0 %1859
        %v1861 = vmul.f32 %v1858, 0.03125
        %v1862 = vmul.f32 %v1860, 0.03125
        %v1863 = vsub.f32 %v1855, %v1861
        %v1864 = vsub.f32 %v1856, %v1862
        %v1865 = vmul.f32 %v1863, %v1444
        %v1866 = vmul.f32 %v1864, %v1444
        %v1867 = vmul.f32 %v1865, %v1865
        %v1868 = vmul.f32 %v1866, %v1866
        %1869 = vadd.xlane.f32.xlu0 %v1867
        %v1870 = vpop.xlane.xlu0 %1869
        %1871 = vadd.xlane.f32.xlu0 %v1868
        %v1872 = vpop.xlane.xlu0 %1871
        %v1873 = vmul.f32 %v1870, 0.03125
        %v1874 = vmul.f32 %v1872, 0.03125
        %v1875 = vadd.f32 %v1873, 1e-05
        %v1876 = vadd.f32 %v1874, 1e-05
        %v1877 = vrsqrt.pop %v1875
        %v1878 = vrsqrt.pop %v1876
        %v1879 = vmul.f32 %v1865, %v1877
        %v1880 = vmul.f32 %v1866, %v1878
        %v1881 = vld [vmem:[%s33] sm:$0x1]
        %v1883 = vlaneseq
        %v1884 = vshrl.u32 %v1883, 7
        %v1885 = vsub.s32 0, %v1884
        %v1886 = vrot.slane %v1881, %v1885
        %v1888 = vmul.f32 %v1879, %v1886
        %v1889 = vmul.f32 %v1880, %v1886
        %v1890 = vld [vmem:[%s35] sm:$0x1]
        %v1892 = vlaneseq
        %v1893 = vshrl.u32 %v1892, 7
        %v1894 = vsub.s32 0, %v1893
        %v1895 = vrot.slane %v1890, %v1894
        %v1897 = vadd.f32 %v1888, %v1895
        %v1898 = vadd.f32 %v1889, %v1895
        %v1899 = vld [vmem:[%s11] sm:$0xff]
        %v1900 = vld [vmem:[%s11 + $0x8] sm:$0xff]
        %v1901 = vadd.f32 %v1897, %v1899
        %v1902 = vadd.f32 %v1898, %v1900
        %1903 = vst [vmem:[#allocation2] sm:$0xff] %v1901
        %1904 = vst [vmem:[#allocation2 + $0x8] sm:$0xff] %v1902
        %v1905 = vmul.f32 %v1724, %v1444
        %v1906 = vmul.f32 %v1725, %v1444
        %1907 = vadd.xlane.f32.xlu0 %v1905
        %v1908 = vpop.xlane.xlu0 %1907
        %1909 = vadd.xlane.f32.xlu0 %v1906
        %v1910 = vpop.xlane.xlu0 %1909
        %v1911 = vmul.f32 %v1908, 0.03125
        %v1912 = vmul.f32 %v1910, 0.03125
        %v1913 = vsub.f32 %v1905, %v1911
        %v1914 = vsub.f32 %v1906, %v1912
        %v1915 = vmul.f32 %v1913, %v1444
        %v1916 = vmul.f32 %v1914, %v1444
        %v1917 = vmul.f32 %v1915, %v1915
        %v1918 = vmul.f32 %v1916, %v1916
        %1919 = vadd.xlane.f32.xlu0 %v1917
        %v1920 = vpop.xlane.xlu0 %1919
        %1921 = vadd.xlane.f32.xlu0 %v1918
        %v1922 = vpop.xlane.xlu0 %1921
        %v1923 = vmul.f32 %v1920, 0.03125
        %v1924 = vmul.f32 %v1922, 0.03125
        %v1925 = vadd.f32 %v1923, 1e-05
        %v1926 = vadd.f32 %v1924, 1e-05
        %v1927 = vrsqrt.pop %v1925
        %v1928 = vrsqrt.pop %v1926
        %v1929 = vmul.f32 %v1915, %v1927
        %v1930 = vmul.f32 %v1916, %v1928
        %v1931 = vld [vmem:[%s33] sm:$0x1]
        %v1933 = vlaneseq
        %v1934 = vshrl.u32 %v1933, 7
        %v1935 = vsub.s32 0, %v1934
        %v1936 = vrot.slane %v1931, %v1935
        %v1938 = vmul.f32 %v1929, %v1936
        %v1939 = vmul.f32 %v1930, %v1936
        %v1940 = vld [vmem:[%s35] sm:$0x1]
        %v1942 = vlaneseq
        %v1943 = vshrl.u32 %v1942, 7
        %v1944 = vsub.s32 0, %v1943
        %v1945 = vrot.slane %v1940, %v1944
        %v1947 = vadd.f32 %v1938, %v1945
        %v1948 = vadd.f32 %v1939, %v1945
        %v1949 = vld [vmem:[%s11 + $0x10] sm:$0xff]
        %v1950 = vld [vmem:[%s11 + $0x18] sm:$0xff]
        %v1951 = vadd.f32 %v1947, %v1949
        %v1952 = vadd.f32 %v1948, %v1950
        %1953 = vst [vmem:[#allocation2 + $0x10] sm:$0xff] %v1951
        %1954 = vst [vmem:[#allocation2 + $0x18] sm:$0xff] %v1952
        %v1955 = vmul.f32 %v1821, %v1444
        %v1956 = vmul.f32 %v1822, %v1444
        %1957 = vadd.xlane.f32.xlu0 %v1955
        %v1958 = vpop.xlane.xlu0 %1957
        %1959 = vadd.xlane.f32.xlu0 %v1956
        %v1960 = vpop.xlane.xlu0 %1959
        %v1961 = vmul.f32 %v1958, 0.03125
        %v1962 = vmul.f32 %v1960, 0.03125
        %v1963 = vsub.f32 %v1955, %v1961
        %v1964 = vsub.f32 %v1956, %v1962
        %v1965 = vmul.f32 %v1963, %v1444
        %v1966 = vmul.f32 %v1964, %v1444
        %v1967 = vmul.f32 %v1965, %v1965
        %v1968 = vmul.f32 %v1966, %v1966
        %1969 = vadd.xlane.f32.xlu0 %v1967
        %v1970 = vpop.xlane.xlu0 %1969
        %1971 = vadd.xlane.f32.xlu0 %v1968
        %v1972 = vpop.xlane.xlu0 %1971
        %v1973 = vmul.f32 %v1970, 0.03125
        %v1974 = vmul.f32 %v1972, 0.03125
        %v1975 = vadd.f32 %v1973, 1e-05
        %v1976 = vadd.f32 %v1974, 1e-05
        %v1977 = vrsqrt.pop %v1975
        %v1978 = vrsqrt.pop %v1976
        %v1979 = vmul.f32 %v1965, %v1977
        %v1980 = vmul.f32 %v1966, %v1978
        %v1981 = vld [vmem:[%s33] sm:$0x1]
        %v1983 = vlaneseq
        %v1984 = vshrl.u32 %v1983, 7
        %v1985 = vsub.s32 0, %v1984
        %v1986 = vrot.slane %v1981, %v1985
        %v1988 = vmul.f32 %v1979, %v1986
        %v1989 = vmul.f32 %v1980, %v1986
        %v1990 = vld [vmem:[%s35] sm:$0x1]
        %v1992 = vlaneseq
        %v1993 = vshrl.u32 %v1992, 7
        %v1994 = vsub.s32 0, %v1993
        %v1995 = vrot.slane %v1990, %v1994
        %v1997 = vadd.f32 %v1988, %v1995
        %v1998 = vadd.f32 %v1989, %v1995
        %v1999 = vld [vmem:[%s11 + $0x20] sm:$0xff]
        %v2000 = vld [vmem:[%s11 + $0x28] sm:$0xff]
        %v2001 = vadd.f32 %v1997, %v1999
        %v2002 = vadd.f32 %v1998, %v2000
        %2003 = vst [vmem:[#allocation2 + $0x20] sm:$0xff] %v2001
        %2004 = vst [vmem:[#allocation2 + $0x28] sm:$0xff] %v2002
      $region168: #{meta_dt_forward.1} parent=163 // pred_fallthru
        _
      %v2005 = vld [vmem:[#allocation2] sm:$0xff]
      %v2006 = vld [vmem:[#allocation2 + $0x8] sm:$0xff]
      %v2007 = vld [vmem:[#allocation2 + $0x10] sm:$0xff]
      %v2008 = vld [vmem:[#allocation2 + $0x18] sm:$0xff]
      %v2009 = vld [vmem:[#allocation2 + $0x20] sm:$0xff]
      %v2010 = vld [vmem:[#allocation2 + $0x28] sm:$0xff]
      %v2011 = vmul.f32 %v2005, %v1444
      %v2012 = vmul.f32 %v2006, %v1444
      %v2013 = vmul.f32 %v2007, %v1444
      %v2014 = vmul.f32 %v2008, %v1444
      %v2015 = vmul.f32 %v2009, %v1444
      %v2016 = vmul.f32 %v2010, %v1444
      %2017 = vadd.xlane.f32.xlu0 %v2011
      %v2018 = vpop.xlane.xlu0 %2017
      %2019 = vadd.xlane.f32.xlu0 %v2012
      %v2020 = vpop.xlane.xlu0 %2019
      %2021 = vadd.xlane.f32.xlu0 %v2013
      %v2022 = vpop.xlane.xlu0 %2021
      %2023 = vadd.xlane.f32.xlu0 %v2014
      %v2024 = vpop.xlane.xlu0 %2023
      %2025 = vadd.xlane.f32.xlu0 %v2015
      %v2026 = vpop.xlane.xlu0 %2025
      %2027 = vadd.xlane.f32.xlu0 %v2016
      %v2028 = vpop.xlane.xlu0 %2027
      %v2029 = vmul.f32 %v2018, 0.03125
      %v2030 = vmul.f32 %v2020, 0.03125
      %v2031 = vmul.f32 %v2022, 0.03125
      %v2032 = vmul.f32 %v2024, 0.03125
      %v2033 = vmul.f32 %v2026, 0.03125
      %v2034 = vmul.f32 %v2028, 0.03125
      %v2035 = vsub.f32 %v2011, %v2029
      %v2036 = vsub.f32 %v2012, %v2030
      %v2037 = vsub.f32 %v2013, %v2031
      %v2038 = vsub.f32 %v2014, %v2032
      %v2039 = vsub.f32 %v2015, %v2033
      %v2040 = vsub.f32 %v2016, %v2034
      %v2041 = vmul.f32 %v2035, %v1444
      %v2042 = vmul.f32 %v2036, %v1444
      %v2043 = vmul.f32 %v2037, %v1444
      %v2044 = vmul.f32 %v2038, %v1444
      %v2045 = vmul.f32 %v2039, %v1444
      %v2046 = vmul.f32 %v2040, %v1444
      %v2047 = vmul.f32 %v2041, %v2041
      %v2048 = vmul.f32 %v2042, %v2042
      %v2049 = vmul.f32 %v2043, %v2043
      %v2050 = vmul.f32 %v2044, %v2044
      %v2051 = vmul.f32 %v2045, %v2045
      %v2052 = vmul.f32 %v2046, %v2046
      %2053 = vadd.xlane.f32.xlu0 %v2047
      %v2054 = vpop.xlane.xlu0 %2053
      %2055 = vadd.xlane.f32.xlu0 %v2048
      %v2056 = vpop.xlane.xlu0 %2055
      %2057 = vadd.xlane.f32.xlu0 %v2049
      %v2058 = vpop.xlane.xlu0 %2057
      %2059 = vadd.xlane.f32.xlu0 %v2050
      %v2060 = vpop.xlane.xlu0 %2059
      %2061 = vadd.xlane.f32.xlu0 %v2051
      %v2062 = vpop.xlane.xlu0 %2061
      %2063 = vadd.xlane.f32.xlu0 %v2052
      %v2064 = vpop.xlane.xlu0 %2063
      %v2065 = vmul.f32 %v2054, 0.03125
      %v2066 = vmul.f32 %v2056, 0.03125
      %v2067 = vmul.f32 %v2058, 0.03125
      %v2068 = vmul.f32 %v2060, 0.03125
      %v2069 = vmul.f32 %v2062, 0.03125
      %v2070 = vmul.f32 %v2064, 0.03125
      %v2071 = vadd.f32 %v2065, 1e-05
      %v2072 = vadd.f32 %v2066, 1e-05
      %v2073 = vadd.f32 %v2067, 1e-05
      %v2074 = vadd.f32 %v2068, 1e-05
      %v2075 = vadd.f32 %v2069, 1e-05
      %v2076 = vadd.f32 %v2070, 1e-05
      %v2077 = vrsqrt.pop %v2071
      %v2078 = vrsqrt.pop %v2072
      %v2079 = vrsqrt.pop %v2073
      %v2080 = vrsqrt.pop %v2074
      %v2081 = vrsqrt.pop %v2075
      %v2082 = vrsqrt.pop %v2076
      %v2083 = vmul.f32 %v2041, %v2077
      %v2084 = vmul.f32 %v2042, %v2078
      %v2085 = vmul.f32 %v2043, %v2079
      %v2086 = vmul.f32 %v2044, %v2080
      %v2087 = vmul.f32 %v2045, %v2081
      %v2088 = vmul.f32 %v2046, %v2082
      %v2089 = vld [vmem:[%s1384] sm:$0x1]
      %v2091 = vlaneseq
      %v2092 = vshrl.u32 %v2091, 7
      %v2093 = vsub.s32 0, %v2092
      %v2094 = vrot.slane %v2089, %v2093
      %v2096 = vmul.f32 %v2083, %v2094
      %v2097 = vmul.f32 %v2084, %v2094
      %v2098 = vmul.f32 %v2085, %v2094
      %v2099 = vmul.f32 %v2086, %v2094
      %v2100 = vmul.f32 %v2087, %v2094
      %v2101 = vmul.f32 %v2088, %v2094
      %v2102 = vld [vmem:[%s1387] sm:$0x1]
      %v2104 = vlaneseq
      %v2105 = vshrl.u32 %v2104, 7
      %v2106 = vsub.s32 0, %v2105
      %v2107 = vrot.slane %v2102, %v2106
      %v2109 = vadd.f32 %v2096, %v2107
      %v2110 = vadd.f32 %v2097, %v2107
      %v2111 = vadd.f32 %v2098, %v2107
      %v2112 = vadd.f32 %v2099, %v2107
      %v2113 = vadd.f32 %v2100, %v2107
      %v2114 = vadd.f32 %v2101, %v2107
      %v2115 = vpack.c.bf16 %v2110, %v2109
      %v2116 = vpack.c.bf16 %v2112, %v2111
      %v2117 = vpack.c.bf16 %v2114, %v2113
      %v2118 = vld [vmem:[%s1392] sm:$0xff]
      %v2119 = vld [vmem:[%s1392 + $0x8] sm:$0xff]
      %v2120 = vld [vmem:[%s1392 + $0x10] sm:$0xff]
      %v2121 = vld [vmem:[%s1392 + $0x18] sm:$0xff]
      %v2122 = vld [vmem:[%s1392 + $0x20] sm:$0xff]
      %v2123 = vld [vmem:[%s1392 + $0x28] sm:$0xff]
      %v2124 = vld [vmem:[%s1392 + $0x30] sm:$0xff]
      %v2125 = vld [vmem:[%s1392 + $0x38] sm:$0xff]
      %v2126 = vld [vmem:[%s1392 + $0x40] sm:$0xff]
      %v2127 = vld [vmem:[%s1392 + $0x48] sm:$0xff]
      %v2128 = vld [vmem:[%s1392 + $0x50] sm:$0xff]
      %v2129 = vld [vmem:[%s1392 + $0x58] sm:$0xff]
      %v2130 = vld [vmem:[%s1392 + $0x60] sm:$0xff]
      %v2131 = vld [vmem:[%s1392 + $0x68] sm:$0xff]
      %v2132 = vld [vmem:[%s1392 + $0x70] sm:$0xff]
      %v2133 = vld [vmem:[%s1392 + $0x78] sm:$0xff]
      %v2134 = vld [vmem:[%s1392 + $0x80] sm:$0xff]
      %v2135 = vld [vmem:[%s1392 + $0x88] sm:$0xff]
      %v2136 = vld [vmem:[%s1392 + $0x90] sm:$0xff]
      %v2137 = vld [vmem:[%s1392 + $0x98] sm:$0xff]
      %v2138 = vld [vmem:[%s1392 + $0xa0] sm:$0xff]
      %v2139 = vld [vmem:[%s1392 + $0xa8] sm:$0xff]
      %v2140 = vld [vmem:[%s1392 + $0xb0] sm:$0xff]
      %v2141 = vld [vmem:[%s1392 + $0xb8] sm:$0xff]
      %v2142 = vld [vmem:[%s1392 + $0xc0] sm:$0xff]
      %v2143 = vld [vmem:[%s1392 + $0xc8] sm:$0xff]
      %v2144 = vld [vmem:[%s1392 + $0xd0] sm:$0xff]
      %v2145 = vld [vmem:[%s1392 + $0xd8] sm:$0xff]
      %v2146 = vld [vmem:[%s1392 + $0xe0] sm:$0xff]
      %v2147 = vld [vmem:[%s1392 + $0xe8] sm:$0xff]
      %v2148 = vld [vmem:[%s1392 + $0xf0] sm:$0xff]
      %v2149 = vld [vmem:[%s1392 + $0xf8] sm:$0xff]
      %v2150 = vld [vmem:[%s1396] sm:$0xf]
      %v2152 = vlaneseq
      %v2153 = vshrl.u32 %v2152, 7
      %v2154 = vsub.s32 0, %v2153
      %v2155 = vrot.slane %v2150, %v2154
      %v2156 = vlaneseq
      %v2157 = vshrl.u32 %v2156, 7
      %v2158 = vsub.s32 1, %v2157
      %v2159 = vrot.slane %v2150, %v2158
      %v2160 = vlaneseq
      %v2161 = vshrl.u32 %v2160, 7
      %v2162 = vsub.s32 2, %v2161
      %v2163 = vrot.slane %v2150, %v2162
      %v2164 = vlaneseq
      %v2165 = vshrl.u32 %v2164, 7
      %v2166 = vsub.s32 3, %v2165
      %v2167 = vrot.slane %v2150, %v2166
      %v2204 = vunpack.c.l.b16 %v2118
      %v2205 = vunpack.c.h.b16 %v2118
      %v2206 = vunpack.c.l.b16 %v2119
      %v2207 = vunpack.c.h.b16 %v2119
      %v2208 = vunpack.c.l.b16 %v2120
      %v2209 = vunpack.c.h.b16 %v2120
      %v2210 = vunpack.c.l.b16 %v2121
      %v2211 = vunpack.c.h.b16 %v2121
      %v2212 = vunpack.c.l.b16 %v2122
      %v2213 = vunpack.c.h.b16 %v2122
      %v2214 = vunpack.c.l.b16 %v2123
      %v2215 = vunpack.c.h.b16 %v2123
      %v2216 = vunpack.c.l.b16 %v2124
      %v2217 = vunpack.c.h.b16 %v2124
      %v2218 = vunpack.c.l.b16 %v2125
      %v2219 = vunpack.c.h.b16 %v2125
      %v2220 = vunpack.c.l.b16 %v2126
      %v2221 = vunpack.c.h.b16 %v2126
      %v2222 = vunpack.c.l.b16 %v2127
      %v2223 = vunpack.c.h.b16 %v2127
      %v2224 = vunpack.c.l.b16 %v2128
      %v2225 = vunpack.c.h.b16 %v2128
      %v2226 = vunpack.c.l.b16 %v2129
      %v2227 = vunpack.c.h.b16 %v2129
      %v2228 = vunpack.c.l.b16 %v2130
      %v2229 = vunpack.c.h.b16 %v2130
      %v2230 = vunpack.c.l.b16 %v2131
      %v2231 = vunpack.c.h.b16 %v2131
      %v2232 = vunpack.c.l.b16 %v2132
      %v2233 = vunpack.c.h.b16 %v2132
      %v2234 = vunpack.c.l.b16 %v2133
      %v2235 = vunpack.c.h.b16 %v2133
      %v2236 = vunpack.c.l.b16 %v2134
      %v2237 = vunpack.c.h.b16 %v2134
      %v2238 = vunpack.c.l.b16 %v2135
      %v2239 = vunpack.c.h.b16 %v2135
      %v2240 = vunpack.c.l.b16 %v2136
      %v2241 = vunpack.c.h.b16 %v2136
      %v2242 = vunpack.c.l.b16 %v2137
      %v2243 = vunpack.c.h.b16 %v2137
      %v2244 = vunpack.c.l.b16 %v2138
      %v2245 = vunpack.c.h.b16 %v2138
      %v2246 = vunpack.c.l.b16 %v2139
      %v2247 = vunpack.c.h.b16 %v2139
      %v2248 = vunpack.c.l.b16 %v2140
      %v2249 = vunpack.c.h.b16 %v2140
      %v2250 = vunpack.c.l.b16 %v2141
      %v2251 = vunpack.c.h.b16 %v2141
      %v2252 = vunpack.c.l.b16 %v2142
      %v2253 = vunpack.c.h.b16 %v2142
      %v2254 = vunpack.c.l.b16 %v2143
      %v2255 = vunpack.c.h.b16 %v2143
      %v2256 = vunpack.c.l.b16 %v2144
      %v2257 = vunpack.c.h.b16 %v2144
      %v2258 = vunpack.c.l.b16 %v2145
      %v2259 = vunpack.c.h.b16 %v2145
      %v2260 = vunpack.c.l.b16 %v2146
      %v2261 = vunpack.c.h.b16 %v2146
      %v2262 = vunpack.c.l.b16 %v2147
      %v2263 = vunpack.c.h.b16 %v2147
      %v2264 = vunpack.c.l.b16 %v2148
      %v2265 = vunpack.c.h.b16 %v2148
      %v2266 = vunpack.c.l.b16 %v2149
      %v2267 = vunpack.c.h.b16 %v2149
      %v2268 = vpack.c.b16 %v2208, %v2204
      %v2269 = vpack.c.b16 %v2209, %v2205
      %v2270 = vpack.c.b16 %v2210, %v2206
      %v2271 = vpack.c.b16 %v2211, %v2207
      %v2272 = vpack.c.b16 %v2216, %v2212
      %v2273 = vpack.c.b16 %v2217, %v2213
      %v2274 = vpack.c.b16 %v2218, %v2214
      %v2275 = vpack.c.b16 %v2219, %v2215
      %v2276 = vpack.c.b16 %v2224, %v2220
      %v2277 = vpack.c.b16 %v2225, %v2221
      %v2278 = vpack.c.b16 %v2226, %v2222
      %v2279 = vpack.c.b16 %v2227, %v2223
      %v2280 = vpack.c.b16 %v2232, %v2228
      %v2281 = vpack.c.b16 %v2233, %v2229
      %v2282 = vpack.c.b16 %v2234, %v2230
      %v2283 = vpack.c.b16 %v2235, %v2231
      %v2284 = vpack.c.b16 %v2240, %v2236
      %v2285 = vpack.c.b16 %v2241, %v2237
      %v2286 = vpack.c.b16 %v2242, %v2238
      %v2287 = vpack.c.b16 %v2243, %v2239
      %v2288 = vpack.c.b16 %v2248, %v2244
      %v2289 = vpack.c.b16 %v2249, %v2245
      %v2290 = vpack.c.b16 %v2250, %v2246
      %v2291 = vpack.c.b16 %v2251, %v2247
      %v2292 = vpack.c.b16 %v2256, %v2252
      %v2293 = vpack.c.b16 %v2257, %v2253
      %v2294 = vpack.c.b16 %v2258, %v2254
      %v2295 = vpack.c.b16 %v2259, %v2255
      %v2296 = vpack.c.b16 %v2264, %v2260
      %v2297 = vpack.c.b16 %v2265, %v2261
      %v2298 = vpack.c.b16 %v2266, %v2262
      %v2299 = vpack.c.b16 %v2267, %v2263
      %2332 = vmatprep.subr.bf16.mxu0 %v2269
      %2333 = vmatpush1.bf16.msra.mxu0 %v2268
      %2334 = vmatprep.subr.bf16.mxu0 %v2273
      %2335 = vmatpush1.bf16.msra.mxu0 %v2272
      %2336 = vmatprep.subr.bf16.mxu0 %v2277
      %2337 = vmatpush1.bf16.msra.mxu0 %v2276
      %2338 = vmatprep.subr.bf16.mxu0 %v2281
      %2339 = vmatpush1.bf16.msra.mxu0 %v2280
      %2340 = vmatprep.subr.bf16.mxu0 %v2285
      %2341 = vmatpush1.bf16.msra.mxu0 %v2284
      %2342 = vmatprep.subr.bf16.mxu0 %v2289
      %2343 = vmatpush1.bf16.msra.mxu0 %v2288
      %2344 = vmatprep.subr.bf16.mxu0 %v2293
      %2345 = vmatpush1.bf16.msra.mxu0 %v2292
      %2346 = vmatprep.subr.bf16.mxu0 %v2297
      %2347 = vmatpush1.bf16.msra.mxu0 %v2296
      %2348 = vmatprep.subr.bf16.mxu0 0
      %2349 = vmatpush1.bf16.msra.mxu0 0
      %2350 = vmatprep.subr.bf16.mxu0 0
      %2351 = vmatpush1.bf16.msra.mxu0 0
      %2352 = vmatprep.subr.bf16.mxu0 0
      %2353 = vmatpush1.bf16.msra.mxu0 0
      %2354 = vmatprep.subr.bf16.mxu0 0
      %2355 = vmatpush1.bf16.msra.mxu0 0
      %2356 = vmatprep.subr.bf16.mxu0 0
      %2357 = vmatpush1.bf16.msra.mxu0 0
      %2358 = vmatprep.subr.bf16.mxu0 0
      %2359 = vmatpush1.bf16.msra.mxu0 0
      %2360 = vmatprep.subr.bf16.mxu0 0
      %2361 = vmatpush1.bf16.msra.mxu0 0
      %2362 = vmatprep.subr.bf16.mxu0 0
      %2363 = vmatpush1.bf16.msra.mxu0 0
      %2364 = vmatprep.mubr.bf16.mxu0 0
      %2365 = vmatmul.mubr.bf16.gmra.mrb[0].mxu0 %v2115
      %v2366 = vpop.f32.mrb[0].mxu0
      %v2367 = vadd.f32 %v2155, %v2366
      %v2368 = vpop.f32.mrb[0].mxu0
      %v2369 = vadd.f32 %v2159, %v2368
      %v2370 = vpop.f32.mrb[0].mxu0
      %v2371 = vadd.f32 %v2155, %v2370
      %v2372 = vpop.f32.mrb[0].mxu0
      %v2373 = vadd.f32 %v2159, %v2372
      %2374 = vmatprep.mubr.bf16.mxu0 0
      %2375 = vmatmul.mubr.bf16.gmra.mrb[0].mxu0 %v2116
      %v2376 = vpop.f32.mrb[0].mxu0
      %v2377 = vadd.f32 %v2155, %v2376
      %v2378 = vpop.f32.mrb[0].mxu0
      %v2379 = vadd.f32 %v2159, %v2378
      %v2380 = vpop.f32.mrb[0].mxu0
      %v2381 = vadd.f32 %v2155, %v2380
      %v2382 = vpop.f32.mrb[0].mxu0
      %v2383 = vadd.f32 %v2159, %v2382
      %2384 = vmatprep.mubr.bf16.mxu0 0
      %2385 = vmatmul.mubr.bf16.gmra.mrb[0].mxu0 %v2117
      %v2386 = vpop.f32.mrb[0].mxu0
      %v2387 = vadd.f32 %v2155, %v2386
      %v2388 = vpop.f32.mrb[0].mxu0
      %v2389 = vadd.f32 %v2159, %v2388
      %v2390 = vpop.f32.mrb[0].mxu0
      %v2391 = vadd.f32 %v2155, %v2390
      %v2392 = vpop.f32.mrb[0].mxu0
      %v2393 = vadd.f32 %v2159, %v2392
      %2394 = vdwg.mxu0
      %2395 = vmatprep.subr.bf16.mxu0 %v2271
      %2396 = vmatpush1.bf16.msra.mxu0 %v2270
      %2397 = vmatprep.subr.bf16.mxu0 %v2275
      %2398 = vmatpush1.bf16.msra.mxu0 %v2274
      %2399 = vmatprep.subr.bf16.mxu0 %v2279
      %2400 = vmatpush1.bf16.msra.mxu0 %v2278
      %2401 = vmatprep.subr.bf16.mxu0 %v2283
      %2402 = vmatpush1.bf16.msra.mxu0 %v2282
      %2403 = vmatprep.subr.bf16.mxu0 %v2287
      %2404 = vmatpush1.bf16.msra.mxu0 %v2286
      %2405 = vmatprep.subr.bf16.mxu0 %v2291
      %2406 = vmatpush1.bf16.msra.mxu0 %v2290
      %2407 = vmatprep.subr.bf16.mxu0 %v2295
      %2408 = vmatpush1.bf16.msra.mxu0 %v2294
      %2409 = vmatprep.subr.bf16.mxu0 %v2299
      %2410 = vmatpush1.bf16.msra.mxu0 %v2298
      %2411 = vmatprep.subr.bf16.mxu0 0
      %2412 = vmatpush1.bf16.msra.mxu0 0
      %2413 = vmatprep.subr.bf16.mxu0 0
      %2414 = vmatpush1.bf16.msra.mxu0 0
      %2415 = vmatprep.subr.bf16.mxu0 0
      %2416 = vmatpush1.bf16.msra.mxu0 0
      %2417 = vmatprep.subr.bf16.mxu0 0
      %2418 = vmatpush1.bf16.msra.mxu0 0
      %2419 = vmatprep.subr.bf16.mxu0 0
      %2420 = vmatpush1.bf16.msra.mxu0 0
      %2421 = vmatprep.subr.bf16.mxu0 0
      %2422 = vmatpush1.bf16.msra.mxu0 0
      %2423 = vmatprep.subr.bf16.mxu0 0
      %2424 = vmatpush1.bf16.msra.mxu0 0
      %2425 = vmatprep.subr.bf16.mxu0 0
      %2426 = vmatpush1.bf16.msra.mxu0 0
      %2427 = vmatprep.mubr.bf16.mxu0 0
      %2428 = vmatmul.mubr.bf16.gmra.mrb[0].mxu0 %v2115
      %v2429 = vpop.f32.mrb[0].mxu0
      %v2430 = vadd.f32 %v2163, %v2429
      %v2431 = vpop.f32.mrb[0].mxu0
      %v2432 = vadd.f32 %v2167, %v2431
      %v2433 = vpop.f32.mrb[0].mxu0
      %v2434 = vadd.f32 %v2163, %v2433
      %v2435 = vpop.f32.mrb[0].mxu0
      %v2436 = vadd.f32 %v2167, %v2435
      %2437 = vmatprep.mubr.bf16.mxu0 0
      %2438 = vmatmul.mubr.bf16.gmra.mrb[0].mxu0 %v2116
      %v2439 = vpop.f32.mrb[0].mxu0
      %v2440 = vadd.f32 %v2163, %v2439
      %v2441 = vpop.f32.mrb[0].mxu0
      %v2442 = vadd.f32 %v2167, %v2441
      %v2443 = vpop.f32.mrb[0].mxu0
      %v2444 = vadd.f32 %v2163, %v2443
      %v2445 = vpop.f32.mrb[0].mxu0
      %v2446 = vadd.f32 %v2167, %v2445
      %2447 = vmatprep.mubr.bf16.mxu0 0
      %2448 = vmatmul.mubr.bf16.gmra.mrb[0].mxu0 %v2117
      %v2449 = vpop.f32.mrb[0].mxu0
      %v2450 = vadd.f32 %v2163, %v2449
      %v2451 = vpop.f32.mrb[0].mxu0
      %v2452 = vadd.f32 %v2167, %v2451
      %v2453 = vpop.f32.mrb[0].mxu0
      %v2454 = vadd.f32 %v2163, %v2453
      %v2455 = vpop.f32.mrb[0].mxu0
      %v2456 = vadd.f32 %v2167, %v2455
      %2457 = vdwg.mxu0
      %v2458 = vpack.c.bf16 %v2371, %v2367
      %v2459 = vpack.c.bf16 %v2373, %v2369
      %v2460 = vpack.c.bf16 %v2434, %v2430
      %v2461 = vpack.c.bf16 %v2436, %v2432
      %v2462 = vpack.c.bf16 %v2381, %v2377
      %v2463 = vpack.c.bf16 %v2383, %v2379
      %v2464 = vpack.c.bf16 %v2444, %v2440
      %v2465 = vpack.c.bf16 %v2446, %v2442
      %v2466 = vpack.c.bf16 %v2391, %v2387
      %v2467 = vpack.c.bf16 %v2393, %v2389
      %v2468 = vpack.c.bf16 %v2454, %v2450
      %v2469 = vpack.c.bf16 %v2456, %v2452
      %v2470 = vld [vmem:[%s1401] sm:$0xff]
      %v2471 = vld [vmem:[%s1401 + $0x8] sm:$0xff]
      %v2472 = vld [vmem:[%s1401 + $0x10] sm:$0xff]
      %v2473 = vld [vmem:[%s1401 + $0x18] sm:$0xff]
      %v2474 = vld [vmem:[%s1401 + $0x20] sm:$0xff]
      %v2475 = vld [vmem:[%s1401 + $0x28] sm:$0xff]
      %v2476 = vld [vmem:[%s1401 + $0x30] sm:$0xff]
      %v2477 = vld [vmem:[%s1401 + $0x38] sm:$0xff]
      %v2478 = vld [vmem:[%s1401 + $0x40] sm:$0xff]
      %v2479 = vld [vmem:[%s1401 + $0x48] sm:$0xff]
      %v2480 = vld [vmem:[%s1401 + $0x50] sm:$0xff]
      %v2481 = vld [vmem:[%s1401 + $0x58] sm:$0xff]
      %v2482 = vld [vmem:[%s1401 + $0x60] sm:$0xff]
      %v2483 = vld [vmem:[%s1401 + $0x68] sm:$0xff]
      %v2484 = vld [vmem:[%s1401 + $0x70] sm:$0xff]
      %v2485 = vld [vmem:[%s1401 + $0x78] sm:$0xff]
      %v2502 = vunpack.c.l.b16 %v2470
      %v2503 = vunpack.c.h.b16 %v2470
      %v2504 = vunpack.c.l.b16 %v2471
      %v2505 = vunpack.c.h.b16 %v2471
      %v2506 = vunpack.c.l.b16 %v2472
      %v2507 = vunpack.c.h.b16 %v2472
      %v2508 = vunpack.c.l.b16 %v2473
      %v2509 = vunpack.c.h.b16 %v2473
      %v2510 = vunpack.c.l.b16 %v2474
      %v2511 = vunpack.c.h.b16 %v2474
      %v2512 = vunpack.c.l.b16 %v2475
      %v2513 = vunpack.c.h.b16 %v2475
      %v2514 = vunpack.c.l.b16 %v2476
      %v2515 = vunpack.c.h.b16 %v2476
      %v2516 = vunpack.c.l.b16 %v2477
      %v2517 = vunpack.c.h.b16 %v2477
      %v2518 = vunpack.c.l.b16 %v2478
      %v2519 = vunpack.c.h.b16 %v2478
      %v2520 = vunpack.c.l.b16 %v2479
      %v2521 = vunpack.c.h.b16 %v2479
      %v2522 = vunpack.c.l.b16 %v2480
      %v2523 = vunpack.c.h.b16 %v2480
      %v2524 = vunpack.c.l.b16 %v2481
      %v2525 = vunpack.c.h.b16 %v2481
      %v2526 = vunpack.c.l.b16 %v2482
      %v2527 = vunpack.c.h.b16 %v2482
      %v2528 = vunpack.c.l.b16 %v2483
      %v2529 = vunpack.c.h.b16 %v2483
      %v2530 = vunpack.c.l.b16 %v2484
      %v2531 = vunpack.c.h.b16 %v2484
      %v2532 = vunpack.c.l.b16 %v2485
      %v2533 = vunpack.c.h.b16 %v2485
      %v2534 = vpack.c.b16 %v2504, %v2502
      %v2535 = vpack.c.b16 %v2505, %v2503
      %v2536 = vpack.c.b16 %v2508, %v2506
      %v2537 = vpack.c.b16 %v2509, %v2507
      %v2538 = vpack.c.b16 %v2512, %v2510
      %v2539 = vpack.c.b16 %v2513, %v2511
      %v2540 = vpack.c.b16 %v2516, %v2514
      %v2541 = vpack.c.b16 %v2517, %v2515
      %v2542 = vpack.c.b16 %v2520, %v2518
      %v2543 = vpack.c.b16 %v2521, %v2519
      %v2544 = vpack.c.b16 %v2524, %v2522
      %v2545 = vpack.c.b16 %v2525, %v2523
      %v2546 = vpack.c.b16 %v2528, %v2526
      %v2547 = vpack.c.b16 %v2529, %v2527
      %v2548 = vpack.c.b16 %v2532, %v2530
      %v2549 = vpack.c.b16 %v2533, %v2531
      %2566 = vmatprep.subr.bf16.mxu0 %v2535
      %2567 = vmatpush1.bf16.msra.mxu0 %v2534
      %2568 = vmatprep.subr.bf16.mxu0 %v2537
      %2569 = vmatpush1.bf16.msra.mxu0 %v2536
      %2570 = vmatprep.subr.bf16.mxu0 %v2539
      %2571 = vmatpush1.bf16.msra.mxu0 %v2538
      %2572 = vmatprep.subr.bf16.mxu0 %v2541
      %2573 = vmatpush1.bf16.msra.mxu0 %v2540
      %2574 = vmatprep.subr.bf16.mxu0 %v2543
      %2575 = vmatpush1.bf16.msra.mxu0 %v2542
      %2576 = vmatprep.subr.bf16.mxu0 %v2545
      %2577 = vmatpush1.bf16.msra.mxu0 %v2544
      %2578 = vmatprep.subr.bf16.mxu0 %v2547
      %2579 = vmatpush1.bf16.msra.mxu0 %v2546
      %2580 = vmatprep.subr.bf16.mxu0 %v2549
      %2581 = vmatpush1.bf16.msra.mxu0 %v2548
      %2582 = vmatprep.subr.bf16.mxu0 0
      %2583 = vmatpush1.bf16.msra.mxu0 0
      %2584 = vmatprep.subr.bf16.mxu0 0
      %2585 = vmatpush1.bf16.msra.mxu0 0
      %2586 = vmatprep.subr.bf16.mxu0 0
      %2587 = vmatpush1.bf16.msra.mxu0 0
      %2588 = vmatprep.subr.bf16.mxu0 0
      %2589 = vmatpush1.bf16.msra.mxu0 0
      %2590 = vmatprep.subr.bf16.mxu0 0
      %2591 = vmatpush1.bf16.msra.mxu0 0
      %2592 = vmatprep.subr.bf16.mxu0 0
      %2593 = vmatpush1.bf16.msra.mxu0 0
      %2594 = vmatprep.subr.bf16.mxu0 0
      %2595 = vmatpush1.bf16.msra.mxu0 0
      %2596 = vmatprep.subr.bf16.mxu0 0
      %2597 = vmatpush1.bf16.msra.mxu0 0
      %2598 = vmatprep.mubr.bf16.mxu0 0
      %2599 = vmatmul.mubr.bf16.gmra.mrb[0].mxu0 %v2115
      %v2600 = vpop.f32.mrb[0].mxu0
      %v2601 = vadd.f32 0.0, %v2600
      %v2602 = vpop.f32.mrb[0].mxu0
      %v2603 = vadd.f32 0.0, %v2602
      %v2604 = vpop.f32.mrb[0].mxu0
      %v2605 = vadd.f32 0.0, %v2604
      %v2606 = vpop.f32.mrb[0].mxu0
      %v2607 = vadd.f32 0.0, %v2606
      %2608 = vmatprep.mubr.bf16.mxu0 0
      %2609 = vmatmul.mubr.bf16.gmra.mrb[0].mxu0 %v2116
      %v2610 = vpop.f32.mrb[0].mxu0
      %v2611 = vadd.f32 0.0, %v2610
      %v2612 = vpop.f32.mrb[0].mxu0
      %v2613 = vadd.f32 0.0, %v2612
      %v2614 = vpop.f32.mrb[0].mxu0
      %v2615 = vadd.f32 0.0, %v2614
      %v2616 = vpop.f32.mrb[0].mxu0
      %v2617 = vadd.f32 0.0, %v2616
      %2618 = vmatprep.mubr.bf16.mxu0 0
      %2619 = vmatmul.mubr.bf16.gmra.mrb[0].mxu0 %v2117
      %v2620 = vpop.f32.mrb[0].mxu0
      %v2621 = vadd.f32 0.0, %v2620
      %v2622 = vpop.f32.mrb[0].mxu0
      %v2623 = vadd.f32 0.0, %v2622
      %v2624 = vpop.f32.mrb[0].mxu0
      %v2625 = vadd.f32 0.0, %v2624
      %v2626 = vpop.f32.mrb[0].mxu0
      %v2627 = vadd.f32 0.0, %v2626
      %2628 = vdwg.mxu0
      %v2629 = vpack.c.bf16 %v2605, %v2601
      %v2630 = vpack.c.bf16 %v2607, %v2603
      %v2631 = vpack.c.bf16 %v2615, %v2611
      %v2632 = vpack.c.bf16 %v2617, %v2613
      %v2633 = vpack.c.bf16 %v2625, %v2621
      %v2634 = vpack.c.bf16 %v2627, %v2623
      %v2635 = vld [vmem:[%s13] sm:$0xff]
      %v2636 = vld [vmem:[%s13 + $0x8] sm:$0xff]
      %v2637 = vld [vmem:[%s13 + $0x10] sm:$0xff]
      %v2638 = vld [vmem:[%s13 + $0x18] sm:$0xff]
      %v2639 = vld [vmem:[%s13 + $0x20] sm:$0xff]
      %v2640 = vld [vmem:[%s13 + $0x28] sm:$0xff]
      %2641 = vmatprep.subr.bf16.mxu0 0
      %2642 = vmatpush1.bf16.xpose.msra.mxu0 %v2460
      %2643 = vmatprep.subr.bf16.mxu0 0
      %2644 = vmatpush1.bf16.xpose.msra.mxu0 %v2464
      %2645 = vmatprep.subr.bf16.mxu0 0
      %2646 = vmatpush1.bf16.xpose.msra.mxu0 %v2468
      %2647 = vmatprep.subr.bf16.mxu0 0
      %2648 = vmatpush1.bf16.xpose.msra.mxu0 0
      %2649 = vmatprep.subr.bf16.mxu0 0
      %2650 = vmatpush1.bf16.xpose.msra.mxu0 0
      %2651 = vmatprep.subr.bf16.mxu0 0
      %2652 = vmatpush1.bf16.xpose.msra.mxu0 0
      %2653 = vmatprep.subr.bf16.mxu0 0
      %2654 = vmatpush1.bf16.xpose.msra.mxu0 0
      %2655 = vmatprep.subr.bf16.mxu0 0
      %2656 = vmatpush1.bf16.xpose.msra.mxu0 0
      %2657 = vmatprep.subr.bf16.mxu0 0
      %2658 = vmatpush1.bf16.xpose.msra.mxu0 0
      %2659 = vmatprep.subr.bf16.mxu0 0
      %2660 = vmatpush1.bf16.xpose.msra.mxu0 0
      %2661 = vmatprep.subr.bf16.mxu0 0
      %2662 = vmatpush1.bf16.xpose.msra.mxu0 0
      %2663 = vmatprep.subr.bf16.mxu0 0
      %2664 = vmatpush1.bf16.xpose.msra.mxu0 0
      %2665 = vmatprep.subr.bf16.mxu0 0
      %2666 = vmatpush1.bf16.xpose.msra.mxu0 0
      %2667 = vmatprep.subr.bf16.mxu0 0
      %2668 = vmatpush1.bf16.xpose.msra.mxu0 0
      %2669 = vmatprep.subr.bf16.mxu0 0
      %2670 = vmatpush1.bf16.xpose.msra.mxu0 0
      %2671 = vmatprep.subr.bf16.mxu0 0
      %2672 = vmatpush1.bf16.xpose.msra.mxu0 0
      %2673 = vmatprep.mubr.bf16.mxu0 0
      %2674 = vmatmul.mubr.bf16.gmra.mrb[0].mxu0 %v2458
      %v2675 = vpop.f32.mrb[0].mxu0
      %v2676 = vadd.f32 %v2635, %v2675
      %v2677 = vpop.f32.mrb[0].mxu0
      %v2678 = vpop.f32.mrb[0].mxu0
      %v2679 = vadd.f32 %v2636, %v2678
      %v2680 = vpop.f32.mrb[0].mxu0
      %2681 = vmatprep.mubr.bf16.mxu0 0
      %2682 = vmatmul.mubr.bf16.gmra.mrb[0].mxu0 %v2462
      %v2683 = vpop.f32.mrb[0].mxu0
      %v2684 = vadd.f32 %v2637, %v2683
      %v2685 = vpop.f32.mrb[0].mxu0
      %v2686 = vpop.f32.mrb[0].mxu0
      %v2687 = vadd.f32 %v2638, %v2686
      %v2688 = vpop.f32.mrb[0].mxu0
      %2689 = vmatprep.mubr.bf16.mxu0 0
      %2690 = vmatmul.mubr.bf16.gmra.mrb[0].mxu0 %v2466
      %v2691 = vpop.f32.mrb[0].mxu0
      %v2692 = vadd.f32 %v2639, %v2691
      %v2693 = vpop.f32.mrb[0].mxu0
      %v2694 = vpop.f32.mrb[0].mxu0
      %v2695 = vadd.f32 %v2640, %v2694
      %v2696 = vpop.f32.mrb[0].mxu0
      %2697 = vdwg.mxu0
      %vm2698 = vcmask 392192
      %v2699 = vsel %vm2698, %v2676, -inf
      %2700 = vmax.xlane.f32.xlu0 %v2699
      %v2701 = vpop.xlane.xlu0 %2700
      %v2702 = vsel %vm2698, %v2679, -inf
      %2703 = vmax.xlane.f32.xlu0 %v2702
      %v2704 = vpop.xlane.xlu0 %2703
      %v2705 = vsel %vm2698, %v2684, -inf
      %2706 = vmax.xlane.f32.xlu0 %v2705
      %v2707 = vpop.xlane.xlu0 %2706
      %v2708 = vsel %vm2698, %v2687, -inf
      %2709 = vmax.xlane.f32.xlu0 %v2708
      %v2710 = vpop.xlane.xlu0 %2709
      %v2711 = vsel %vm2698, %v2692, -inf
      %2712 = vmax.xlane.f32.xlu0 %v2711
      %v2713 = vpop.xlane.xlu0 %2712
      %v2714 = vsel %vm2698, %v2695, -inf
      %2715 = vmax.xlane.f32.xlu0 %v2714
      %v2716 = vpop.xlane.xlu0 %2715
      %v2717 = vsub.f32 %v2676, %v2701
      %v2718 = vsub.f32 %v2679, %v2704
      %v2719 = vsub.f32 %v2684, %v2707
      %v2720 = vsub.f32 %v2687, %v2710
      %v2721 = vsub.f32 %v2692, %v2713
      %v2722 = vsub.f32 %v2695, %v2716
      %v2723 = vmul.f32 %v2717, 1.442695
      %v2724 = vpow.pop %v2723
      %v2725 = vmul.f32 %v2718, 1.442695
      %v2726 = vpow.pop %v2725
      %v2727 = vmul.f32 %v2719, 1.442695
      %v2728 = vpow.pop %v2727
      %v2729 = vmul.f32 %v2720, 1.442695
      %v2730 = vpow.pop %v2729
      %v2731 = vmul.f32 %v2721, 1.442695
      %v2732 = vpow.pop %v2731
      %v2733 = vmul.f32 %v2722, 1.442695
      %v2734 = vpow.pop %v2733
      %v2735 = vsel %vm2698, %v2724, 0.0
      %2736 = vadd.xlane.f32.xlu0 %v2735
      %v2737 = vpop.xlane.xlu0 %2736
      %v2738 = vsel %vm2698, %v2726, 0.0
      %2739 = vadd.xlane.f32.xlu0 %v2738
      %v2740 = vpop.xlane.xlu0 %2739
      %v2741 = vsel %vm2698, %v2728, 0.0
      %2742 = vadd.xlane.f32.xlu0 %v2741
      %v2743 = vpop.xlane.xlu0 %2742
      %v2744 = vsel %vm2698, %v2730, 0.0
      %2745 = vadd.xlane.f32.xlu0 %v2744
      %v2746 = vpop.xlane.xlu0 %2745
      %v2747 = vsel %vm2698, %v2732, 0.0
      %2748 = vadd.xlane.f32.xlu0 %v2747
      %v2749 = vpop.xlane.xlu0 %2748
      %v2750 = vsel %vm2698, %v2734, 0.0
      %2751 = vadd.xlane.f32.xlu0 %v2750
      %v2752 = vpop.xlane.xlu0 %2751
      %v2753 = vrcp.pop %v2737
      %v2754 = vrcp.pop %v2740
      %v2755 = vrcp.pop %v2743
      %v2756 = vrcp.pop %v2746
      %v2757 = vrcp.pop %v2749
      %v2758 = vrcp.pop %v2752
      %v2759 = vmul.f32 %v2724, %v2753
      %v2760 = vmul.f32 %v2726, %v2754
      %v2761 = vmul.f32 %v2728, %v2755
      %v2762 = vmul.f32 %v2730, %v2756
      %v2763 = vmul.f32 %v2732, %v2757
      %v2764 = vmul.f32 %v2734, %v2758
      %v2765 = vpack.c.bf16 %v2760, %v2759
      %v2766 = vpack.c.bf16 %v2762, %v2761
      %v2767 = vpack.c.bf16 %v2764, %v2763
      %2768 = vmatprep.subr.bf16.mxu0 0
      %2769 = vmatpush1.bf16.xpose.msra.mxu0 %v2461
      %2770 = vmatprep.subr.bf16.mxu0 0
      %2771 = vmatpush1.bf16.xpose.msra.mxu0 %v2465
      %2772 = vmatprep.subr.bf16.mxu0 0
      %2773 = vmatpush1.bf16.xpose.msra.mxu0 %v2469
      %2774 = vmatprep.subr.bf16.mxu0 0
      %2775 = vmatpush1.bf16.xpose.msra.mxu0 0
      %2776 = vmatprep.subr.bf16.mxu0 0
      %2777 = vmatpush1.bf16.xpose.msra.mxu0 0
      %2778 = vmatprep.subr.bf16.mxu0 0
      %2779 = vmatpush1.bf16.xpose.msra.mxu0 0
      %2780 = vmatprep.subr.bf16.mxu0 0
      %2781 = vmatpush1.bf16.xpose.msra.mxu0 0
      %2782 = vmatprep.subr.bf16.mxu0 0
      %2783 = vmatpush1.bf16.xpose.msra.mxu0 0
      %2784 = vmatprep.subr.bf16.mxu0 0
      %2785 = vmatpush1.bf16.xpose.msra.mxu0 0
      %2786 = vmatprep.subr.bf16.mxu0 0
      %2787 = vmatpush1.bf16.xpose.msra.mxu0 0
      %2788 = vmatprep.subr.bf16.mxu0 0
      %2789 = vmatpush1.bf16.xpose.msra.mxu0 0
      %2790 = vmatprep.subr.bf16.mxu0 0
      %2791 = vmatpush1.bf16.xpose.msra.mxu0 0
      %2792 = vmatprep.subr.bf16.mxu0 0
      %2793 = vmatpush1.bf16.xpose.msra.mxu0 0
      %2794 = vmatprep.subr.bf16.mxu0 0
      %2795 = vmatpush1.bf16.xpose.msra.mxu0 0
      %2796 = vmatprep.subr.bf16.mxu0 0
      %2797 = vmatpush1.bf16.xpose.msra.mxu0 0
      %2798 = vmatprep.subr.bf16.mxu0 0
      %2799 = vmatpush1.bf16.xpose.msra.mxu0 0
      %2800 = vmatprep.mubr.bf16.mxu0 0
      %2801 = vmatmul.mubr.bf16.gmra.mrb[0].mxu0 %v2459
      %v2802 = vpop.f32.mrb[0].mxu0
      %v2803 = vadd.f32 %v2635, %v2802
      %v2804 = vpop.f32.mrb[0].mxu0
      %v2805 = vpop.f32.mrb[0].mxu0
      %v2806 = vadd.f32 %v2636, %v2805
      %v2807 = vpop.f32.mrb[0].mxu0
      %2808 = vmatprep.mubr.bf16.mxu0 0
      %2809 = vmatmul.mubr.bf16.gmra.mrb[0].mxu0 %v2463
      %v2810 = vpop.f32.mrb[0].mxu0
      %v2811 = vadd.f32 %v2637, %v2810
      %v2812 = vpop.f32.mrb[0].mxu0
      %v2813 = vpop.f32.mrb[0].mxu0
      %v2814 = vadd.f32 %v2638, %v2813
      %v2815 = vpop.f32.mrb[0].mxu0
      %2816 = vmatprep.mubr.bf16.mxu0 0
      %2817 = vmatmul.mubr.bf16.gmra.mrb[0].mxu0 %v2467
      %v2818 = vpop.f32.mrb[0].mxu0
      %v2819 = vadd.f32 %v2639, %v2818
      %v2820 = vpop.f32.mrb[0].mxu0
      %v2821 = vpop.f32.mrb[0].mxu0
      %v2822 = vadd.f32 %v2640, %v2821
      %v2823 = vpop.f32.mrb[0].mxu0
      %2824 = vdwg.mxu0
      %v2825 = vsel %vm2698, %v2803, -inf
      %2826 = vmax.xlane.f32.xlu0 %v2825
      %v2827 = vpop.xlane.xlu0 %2826
      %v2828 = vsel %vm2698, %v2806, -inf
      %2829 = vmax.xlane.f32.xlu0 %v2828
      %v2830 = vpop.xlane.xlu0 %2829
      %v2831 = vsel %vm2698, %v2811, -inf
      %2832 = vmax.xlane.f32.xlu0 %v2831
      %v2833 = vpop.xlane.xlu0 %2832
      %v2834 = vsel %vm2698, %v2814, -inf
      %2835 = vmax.xlane.f32.xlu0 %v2834
      %v2836 = vpop.xlane.xlu0 %2835
      %v2837 = vsel %vm2698, %v2819, -inf
      %2838 = vmax.xlane.f32.xlu0 %v2837
      %v2839 = vpop.xlane.xlu0 %2838
      %v2840 = vsel %vm2698, %v2822, -inf
      %2841 = vmax.xlane.f32.xlu0 %v2840
      %v2842 = vpop.xlane.xlu0 %2841
      %v2843 = vsub.f32 %v2803, %v2827
      %v2844 = vsub.f32 %v2806, %v2830
      %v2845 = vsub.f32 %v2811, %v2833
      %v2846 = vsub.f32 %v2814, %v2836
      %v2847 = vsub.f32 %v2819, %v2839
      %v2848 = vsub.f32 %v2822, %v2842
      %v2849 = vmul.f32 %v2843, 1.442695
      %v2850 = vpow.pop %v2849
      %v2851 = vmul.f32 %v2844, 1.442695
      %v2852 = vpow.pop %v2851
      %v2853 = vmul.f32 %v2845, 1.442695
      %v2854 = vpow.pop %v2853
      %v2855 = vmul.f32 %v2846, 1.442695
      %v2856 = vpow.pop %v2855
      %v2857 = vmul.f32 %v2847, 1.442695
      %v2858 = vpow.pop %v2857
      %v2859 = vmul.f32 %v2848, 1.442695
      %v2860 = vpow.pop %v2859
      %v2861 = vsel %vm2698, %v2850, 0.0
      %2862 = vadd.xlane.f32.xlu0 %v2861
      %v2863 = vpop.xlane.xlu0 %2862
      %v2864 = vsel %vm2698, %v2852, 0.0
      %2865 = vadd.xlane.f32.xlu0 %v2864
      %v2866 = vpop.xlane.xlu0 %2865
      %v2867 = vsel %vm2698, %v2854, 0.0
      %2868 = vadd.xlane.f32.xlu0 %v2867
      %v2869 = vpop.xlane.xlu0 %2868
      %v2870 = vsel %vm2698, %v2856, 0.0
      %2871 = vadd.xlane.f32.xlu0 %v2870
      %v2872 = vpop.xlane.xlu0 %2871
      %v2873 = vsel %vm2698, %v2858, 0.0
      %2874 = vadd.xlane.f32.xlu0 %v2873
      %v2875 = vpop.xlane.xlu0 %2874
      %v2876 = vsel %vm2698, %v2860, 0.0
      %2877 = vadd.xlane.f32.xlu0 %v2876
      %v2878 = vpop.xlane.xlu0 %2877
      %v2879 = vrcp.pop %v2863
      %v2880 = vrcp.pop %v2866
      %v2881 = vrcp.pop %v2869
      %v2882 = vrcp.pop %v2872
      %v2883 = vrcp.pop %v2875
      %v2884 = vrcp.pop %v2878
      %v2885 = vmul.f32 %v2850, %v2879
      %v2886 = vmul.f32 %v2852, %v2880
      %v2887 = vmul.f32 %v2854, %v2881
      %v2888 = vmul.f32 %v2856, %v2882
      %v2889 = vmul.f32 %v2858, %v2883
      %v2890 = vmul.f32 %v2860, %v2884
      %v2891 = vpack.c.bf16 %v2886, %v2885
      %v2892 = vpack.c.bf16 %v2888, %v2887
      %v2893 = vpack.c.bf16 %v2890, %v2889
      %v2895 = vsel %vm2698, %v2891, 0
      %v2898 = vsel %vm2698, %v2892, 0
      %v2901 = vsel %vm2698, %v2893, 0
      %2903 = vmatprep.subr.bf16.mxu0 0
      %2904 = vmatpush1.bf16.msra.mxu0 %v2630
      %2905 = vmatprep.subr.bf16.mxu0 0
      %2906 = vmatpush1.bf16.msra.mxu0 %v2632
      %2907 = vmatprep.subr.bf16.mxu0 0
      %2908 = vmatpush1.bf16.msra.mxu0 %v2634
      %2909 = vmatprep.subr.bf16.mxu0 0
      %2910 = vmatpush1.bf16.msra.mxu0 0
      %2911 = vmatprep.subr.bf16.mxu0 0
      %2912 = vmatpush1.bf16.msra.mxu0 0
      %2913 = vmatprep.subr.bf16.mxu0 0
      %2914 = vmatpush1.bf16.msra.mxu0 0
      %2915 = vmatprep.subr.bf16.mxu0 0
      %2916 = vmatpush1.bf16.msra.mxu0 0
      %2917 = vmatprep.subr.bf16.mxu0 0
      %2918 = vmatpush1.bf16.msra.mxu0 0
      %2919 = vmatprep.subr.bf16.mxu0 0
      %2920 = vmatpush1.bf16.msra.mxu0 0
      %2921 = vmatprep.subr.bf16.mxu0 0
      %2922 = vmatpush1.bf16.msra.mxu0 0
      %2923 = vmatprep.subr.bf16.mxu0 0
      %2924 = vmatpush1.bf16.msra.mxu0 0
      %2925 = vmatprep.subr.bf16.mxu0 0
      %2926 = vmatpush1.bf16.msra.mxu0 0
      %2927 = vmatprep.subr.bf16.mxu0 0
      %2928 = vmatpush1.bf16.msra.mxu0 0
      %2929 = vmatprep.subr.bf16.mxu0 0
      %2930 = vmatpush1.bf16.msra.mxu0 0
      %2931 = vmatprep.subr.bf16.mxu0 0
      %2932 = vmatpush1.bf16.msra.mxu0 0
      %2933 = vmatprep.subr.bf16.mxu0 0
      %2934 = vmatpush1.bf16.msra.mxu0 0
      %2935 = vmatprep.mubr.bf16.mxu0 0
      %2936 = vmatmul.mubr.bf16.gmra.mrb[0].mxu0 %v2895
      %v2937 = vpop.f32.mrb[0].mxu0
      %v2938 = vadd.f32 0.0, %v2937
      %v2939 = vpop.f32.mrb[0].mxu0
      %v2940 = vpop.f32.mrb[0].mxu0
      %v2941 = vadd.f32 0.0, %v2940
      %v2942 = vpop.f32.mrb[0].mxu0
      %2943 = vmatprep.mubr.bf16.mxu0 0
      %2944 = vmatmul.mubr.bf16.gmra.mrb[0].mxu0 %v2898
      %v2945 = vpop.f32.mrb[0].mxu0
      %v2946 = vadd.f32 0.0, %v2945
      %v2947 = vpop.f32.mrb[0].mxu0
      %v2948 = vpop.f32.mrb[0].mxu0
      %v2949 = vadd.f32 0.0, %v2948
      %v2950 = vpop.f32.mrb[0].mxu0
      %2951 = vmatprep.mubr.bf16.mxu0 0
      %2952 = vmatmul.mubr.bf16.gmra.mrb[0].mxu0 %v2901
      %v2953 = vpop.f32.mrb[0].mxu0
      %v2954 = vadd.f32 0.0, %v2953
      %v2955 = vpop.f32.mrb[0].mxu0
      %v2956 = vpop.f32.mrb[0].mxu0
      %v2957 = vadd.f32 0.0, %v2956
      %v2958 = vpop.f32.mrb[0].mxu0
      %2959 = vdwg.mxu0
      %v2961 = vsel %vm2698, %v2765, 0
      %v2964 = vsel %vm2698, %v2766, 0
      %v2967 = vsel %vm2698, %v2767, 0
      %2969 = vmatprep.subr.bf16.mxu0 0
      %2970 = vmatpush1.bf16.msra.mxu0 %v2629
      %2971 = vmatprep.subr.bf16.mxu0 0
      %2972 = vmatpush1.bf16.msra.mxu0 %v2631
      %2973 = vmatprep.subr.bf16.mxu0 0
      %2974 = vmatpush1.bf16.msra.mxu0 %v2633
      %2975 = vmatprep.subr.bf16.mxu0 0
      %2976 = vmatpush1.bf16.msra.mxu0 0
      %2977 = vmatprep.subr.bf16.mxu0 0
      %2978 = vmatpush1.bf16.msra.mxu0 0
      %2979 = vmatprep.subr.bf16.mxu0 0
      %2980 = vmatpush1.bf16.msra.mxu0 0
      %2981 = vmatprep.subr.bf16.mxu0 0
      %2982 = vmatpush1.bf16.msra.mxu0 0
      %2983 = vmatprep.subr.bf16.mxu0 0
      %2984 = vmatpush1.bf16.msra.mxu0 0
      %2985 = vmatprep.subr.bf16.mxu0 0
      %2986 = vmatpush1.bf16.msra.mxu0 0
      %2987 = vmatprep.subr.bf16.mxu0 0
      %2988 = vmatpush1.bf16.msra.mxu0 0
      %2989 = vmatprep.subr.bf16.mxu0 0
      %2990 = vmatpush1.bf16.msra.mxu0 0
      %2991 = vmatprep.subr.bf16.mxu0 0
      %2992 = vmatpush1.bf16.msra.mxu0 0
      %2993 = vmatprep.subr.bf16.mxu0 0
      %2994 = vmatpush1.bf16.msra.mxu0 0
      %2995 = vmatprep.subr.bf16.mxu0 0
      %2996 = vmatpush1.bf16.msra.mxu0 0
      %2997 = vmatprep.subr.bf16.mxu0 0
      %2998 = vmatpush1.bf16.msra.mxu0 0
      %2999 = vmatprep.subr.bf16.mxu0 0
      %3000 = vmatpush1.bf16.msra.mxu0 0
      %3001 = vmatprep.mubr.bf16.mxu0 0
      %3002 = vmatmul.mubr.bf16.gmra.mrb[0].mxu0 %v2961
      %v3003 = vpop.f32.mrb[0].mxu0
      %v3004 = vadd.f32 %v2938, %v3003
      %v3005 = vpop.f32.mrb[0].mxu0
      %v3006 = vpop.f32.mrb[0].mxu0
      %v3007 = vadd.f32 %v2941, %v3006
      %v3008 = vpop.f32.mrb[0].mxu0
      %3009 = vmatprep.mubr.bf16.mxu0 0
      %3010 = vmatmul.mubr.bf16.gmra.mrb[0].mxu0 %v2964
      %v3011 = vpop.f32.mrb[0].mxu0
      %v3012 = vadd.f32 %v2946, %v3011
      %v3013 = vpop.f32.mrb[0].mxu0
      %v3014 = vpop.f32.mrb[0].mxu0
      %v3015 = vadd.f32 %v2949, %v3014
      %v3016 = vpop.f32.mrb[0].mxu0
      %3017 = vmatprep.mubr.bf16.mxu0 0
      %3018 = vmatmul.mubr.bf16.gmra.mrb[0].mxu0 %v2967
      %v3019 = vpop.f32.mrb[0].mxu0
      %v3020 = vadd.f32 %v2954, %v3019
      %v3021 = vpop.f32.mrb[0].mxu0
      %v3022 = vpop.f32.mrb[0].mxu0
      %v3023 = vadd.f32 %v2957, %v3022
      %v3024 = vpop.f32.mrb[0].mxu0
      %3025 = vdwg.mxu0
      %v3026 = vadd.f32 %v2005, %v3004
      %v3027 = vadd.f32 %v2006, %v3007
      %v3028 = vadd.f32 %v2007, %v3012
      %v3029 = vadd.f32 %v2008, %v3015
      %v3030 = vadd.f32 %v2009, %v3020
      %v3031 = vadd.f32 %v2010, %v3023
      %v3032 = vld [vmem:[%s1404] sm:$0x1]
      %v3034 = vlaneseq
      %v3035 = vshrl.u32 %v3034, 7
      %v3036 = vsub.s32 0, %v3035
      %v3037 = vrot.slane %v3032, %v3036
      %v3039 = vadd.f32 %v3026, %v3037
      %v3040 = vadd.f32 %v3027, %v3037
      %v3041 = vadd.f32 %v3028, %v3037
      %v3042 = vadd.f32 %v3029, %v3037
      %v3043 = vadd.f32 %v3030, %v3037
      %v3044 = vadd.f32 %v3031, %v3037
      %v3045 = vmul.f32 %v3039, %v1444
      %v3046 = vmul.f32 %v3040, %v1444
      %v3047 = vmul.f32 %v3041, %v1444
      %v3048 = vmul.f32 %v3042, %v1444
      %v3049 = vmul.f32 %v3043, %v1444
      %v3050 = vmul.f32 %v3044, %v1444
      %3051 = vadd.xlane.f32.xlu0 %v3045
      %v3052 = vpop.xlane.xlu0 %3051
      %3053 = vadd.xlane.f32.xlu0 %v3046
      %v3054 = vpop.xlane.xlu0 %3053
      %3055 = vadd.xlane.f32.xlu0 %v3047
      %v3056 = vpop.xlane.xlu0 %3055
      %3057 = vadd.xlane.f32.xlu0 %v3048
      %v3058 = vpop.xlane.xlu0 %3057
      %3059 = vadd.xlane.f32.xlu0 %v3049
      %v3060 = vpop.xlane.xlu0 %3059
      %3061 = vadd.xlane.f32.xlu0 %v3050
      %v3062 = vpop.xlane.xlu0 %3061
      %v3063 = vmul.f32 %v3052, 0.03125
      %v3064 = vmul.f32 %v3054, 0.03125
      %v3065 = vmul.f32 %v3056, 0.03125
      %v3066 = vmul.f32 %v3058, 0.03125
      %v3067 = vmul.f32 %v3060, 0.03125
      %v3068 = vmul.f32 %v3062, 0.03125
      %v3069 = vsub.f32 %v3045, %v3063
      %v3070 = vsub.f32 %v3046, %v3064
      %v3071 = vsub.f32 %v3047, %v3065
      %v3072 = vsub.f32 %v3048, %v3066
      %v3073 = vsub.f32 %v3049, %v3067
      %v3074 = vsub.f32 %v3050, %v3068
      %v3075 = vmul.f32 %v3069, %v1444
      %v3076 = vmul.f32 %v3070, %v1444
      %v3077 = vmul.f32 %v3071, %v1444
      %v3078 = vmul.f32 %v3072, %v1444
      %v3079 = vmul.f32 %v3073, %v1444
      %v3080 = vmul.f32 %v3074, %v1444
      %v3081 = vmul.f32 %v3075, %v3075
      %v3082 = vmul.f32 %v3076, %v3076
      %v3083 = vmul.f32 %v3077, %v3077
      %v3084 = vmul.f32 %v3078, %v3078
      %v3085 = vmul.f32 %v3079, %v3079
      %v3086 = vmul.f32 %v3080, %v3080
      %3087 = vadd.xlane.f32.xlu0 %v3081
      %v3088 = vpop.xlane.xlu0 %3087
      %3089 = vadd.xlane.f32.xlu0 %v3082
      %v3090 = vpop.xlane.xlu0 %3089
      %3091 = vadd.xlane.f32.xlu0 %v3083
      %v3092 = vpop.xlane.xlu0 %3091
      %3093 = vadd.xlane.f32.xlu0 %v3084
      %v3094 = vpop.xlane.xlu0 %3093
      %3095 = vadd.xlane.f32.xlu0 %v3085
      %v3096 = vpop.xlane.xlu0 %3095
      %3097 = vadd.xlane.f32.xlu0 %v3086
      %v3098 = vpop.xlane.xlu0 %3097
      %v3099 = vmul.f32 %v3088, 0.03125
      %v3100 = vmul.f32 %v3090, 0.03125
      %v3101 = vmul.f32 %v3092, 0.03125
      %v3102 = vmul.f32 %v3094, 0.03125
      %v3103 = vmul.f32 %v3096, 0.03125
      %v3104 = vmul.f32 %v3098, 0.03125
      %v3105 = vadd.f32 %v3099, 1e-05
      %v3106 = vadd.f32 %v3100, 1e-05
      %v3107 = vadd.f32 %v3101, 1e-05
      %v3108 = vadd.f32 %v3102, 1e-05
      %v3109 = vadd.f32 %v3103, 1e-05
      %v3110 = vadd.f32 %v3104, 1e-05
      %v3111 = vrsqrt.pop %v3105
      %v3112 = vrsqrt.pop %v3106
      %v3113 = vrsqrt.pop %v3107
      %v3114 = vrsqrt.pop %v3108
      %v3115 = vrsqrt.pop %v3109
      %v3116 = vrsqrt.pop %v3110
      %v3117 = vmul.f32 %v3075, %v3111
      %v3118 = vmul.f32 %v3076, %v3112
      %v3119 = vmul.f32 %v3077, %v3113
      %v3120 = vmul.f32 %v3078, %v3114
      %v3121 = vmul.f32 %v3079, %v3115
      %v3122 = vmul.f32 %v3080, %v3116
      %v3123 = vld [vmem:[%s1407] sm:$0x1]
      %v3125 = vlaneseq
      %v3126 = vshrl.u32 %v3125, 7
      %v3127 = vsub.s32 0, %v3126
      %v3128 = vrot.slane %v3123, %v3127
      %v3130 = vmul.f32 %v3117, %v3128
      %v3131 = vmul.f32 %v3118, %v3128
      %v3132 = vmul.f32 %v3119, %v3128
      %v3133 = vmul.f32 %v3120, %v3128
      %v3134 = vmul.f32 %v3121, %v3128
      %v3135 = vmul.f32 %v3122, %v3128
      %v3136 = vld [vmem:[%s1410] sm:$0x1]
      %v3138 = vlaneseq
      %v3139 = vshrl.u32 %v3138, 7
      %v3140 = vsub.s32 0, %v3139
      %v3141 = vrot.slane %v3136, %v3140
      %v3143 = vadd.f32 %v3130, %v3141
      %v3144 = vadd.f32 %v3131, %v3141
      %v3145 = vadd.f32 %v3132, %v3141
      %v3146 = vadd.f32 %v3133, %v3141
      %v3147 = vadd.f32 %v3134, %v3141
      %v3148 = vadd.f32 %v3135, %v3141
      %v3149 = vpack.c.bf16 %v3144, %v3143
      %v3150 = vpack.c.bf16 %v3146, %v3145
      %v3151 = vpack.c.bf16 %v3148, %v3147
      %v3152 = vld [vmem:[%s1415] sm:$0xf]
      %v3153 = vld [vmem:[%s1415 + $0x4] sm:$0xf]
      %v3154 = vld [vmem:[%s1415 + $0x8] sm:$0xf]
      %v3155 = vld [vmem:[%s1415 + $0xc] sm:$0xf]
      %v3156 = vld [vmem:[%s1415 + $0x10] sm:$0xf]
      %v3157 = vld [vmem:[%s1415 + $0x14] sm:$0xf]
      %v3158 = vld [vmem:[%s1415 + $0x18] sm:$0xf]
      %v3159 = vld [vmem:[%s1415 + $0x1c] sm:$0xf]
      %v3160 = vld [vmem:[%s1415 + $0x20] sm:$0xf]
      %v3161 = vld [vmem:[%s1415 + $0x24] sm:$0xf]
      %v3162 = vld [vmem:[%s1415 + $0x28] sm:$0xf]
      %v3163 = vld [vmem:[%s1415 + $0x2c] sm:$0xf]
      %v3164 = vld [vmem:[%s1415 + $0x30] sm:$0xf]
      %v3165 = vld [vmem:[%s1415 + $0x34] sm:$0xf]
      %v3166 = vld [vmem:[%s1415 + $0x38] sm:$0xf]
      %v3167 = vld [vmem:[%s1415 + $0x3c] sm:$0xf]
      %v3168 = vld [vmem:[%s1418] sm:$0x1]
      %v3170 = vlaneseq
      %v3171 = vshrl.u32 %v3170, 7
      %v3172 = vsub.s32 0, %v3171
      %v3173 = vrot.slane %v3168, %v3172
      %v3191 = vunpack.c.l.b16 %v3152
      %v3192 = vunpack.c.l.b16 %v3153
      %v3193 = vunpack.c.l.b16 %v3154
      %v3194 = vunpack.c.l.b16 %v3155
      %v3195 = vunpack.c.l.b16 %v3156
      %v3196 = vunpack.c.l.b16 %v3157
      %v3197 = vunpack.c.l.b16 %v3158
      %v3198 = vunpack.c.l.b16 %v3159
      %v3199 = vunpack.c.l.b16 %v3160
      %v3200 = vunpack.c.l.b16 %v3161
      %v3201 = vunpack.c.l.b16 %v3162
      %v3202 = vunpack.c.l.b16 %v3163
      %v3203 = vunpack.c.l.b16 %v3164
      %v3204 = vunpack.c.l.b16 %v3165
      %v3205 = vunpack.c.l.b16 %v3166
      %v3206 = vunpack.c.l.b16 %v3167
      %v3207 = vpack.c.b16 %v3192, %v3191
      %v3208 = vpack.c.b16 %v3194, %v3193
      %v3209 = vpack.c.b16 %v3196, %v3195
      %v3210 = vpack.c.b16 %v3198, %v3197
      %v3211 = vpack.c.b16 %v3200, %v3199
      %v3212 = vpack.c.b16 %v3202, %v3201
      %v3213 = vpack.c.b16 %v3204, %v3203
      %v3214 = vpack.c.b16 %v3206, %v3205
      %3223 = vmatprep.subr.bf16.mxu0 0
      %3224 = vmatpush1.bf16.msra.mxu0 %v3207
      %3225 = vmatprep.subr.bf16.mxu0 0
      %3226 = vmatpush1.bf16.msra.mxu0 %v3208
      %3227 = vmatprep.subr.bf16.mxu0 0
      %3228 = vmatpush1.bf16.msra.mxu0 %v3209
      %3229 = vmatprep.subr.bf16.mxu0 0
      %3230 = vmatpush1.bf16.msra.mxu0 %v3210
      %3231 = vmatprep.subr.bf16.mxu0 0
      %3232 = vmatpush1.bf16.msra.mxu0 %v3211
      %3233 = vmatprep.subr.bf16.mxu0 0
      %3234 = vmatpush1.bf16.msra.mxu0 %v3212
      %3235 = vmatprep.subr.bf16.mxu0 0
      %3236 = vmatpush1.bf16.msra.mxu0 %v3213
      %3237 = vmatprep.subr.bf16.mxu0 0
      %3238 = vmatpush1.bf16.msra.mxu0 %v3214
      %3239 = vmatprep.subr.bf16.mxu0 0
      %3240 = vmatpush1.bf16.msra.mxu0 0
      %3241 = vmatprep.subr.bf16.mxu0 0
      %3242 = vmatpush1.bf16.msra.mxu0 0
      %3243 = vmatprep.subr.bf16.mxu0 0
      %3244 = vmatpush1.bf16.msra.mxu0 0
      %3245 = vmatprep.subr.bf16.mxu0 0
      %3246 = vmatpush1.bf16.msra.mxu0 0
      %3247 = vmatprep.subr.bf16.mxu0 0
      %3248 = vmatpush1.bf16.msra.mxu0 0
      %3249 = vmatprep.subr.bf16.mxu0 0
      %3250 = vmatpush1.bf16.msra.mxu0 0
      %3251 = vmatprep.subr.bf16.mxu0 0
      %3252 = vmatpush1.bf16.msra.mxu0 0
      %3253 = vmatprep.subr.bf16.mxu0 0
      %3254 = vmatpush1.bf16.msra.mxu0 0
      %3255 = vmatprep.mubr.bf16.mxu0 0
      %3256 = vmatmul.mubr.bf16.gmra.mrb[0].mxu0 %v3149
      %v3257 = vpop.f32.mrb[0].mxu0
      %v3258 = vadd.f32 %v3173, %v3257
      %v3259 = vpop.f32.mrb[0].mxu0
      %v3260 = vpop.f32.mrb[0].mxu0
      %v3261 = vadd.f32 %v3173, %v3260
      %v3262 = vpop.f32.mrb[0].mxu0
      %3263 = vmatprep.mubr.bf16.mxu0 0
      %3264 = vmatmul.mubr.bf16.gmra.mrb[0].mxu0 %v3150
      %v3265 = vpop.f32.mrb[0].mxu0
      %v3266 = vadd.f32 %v3173, %v3265
      %v3267 = vpop.f32.mrb[0].mxu0
      %v3268 = vpop.f32.mrb[0].mxu0
      %v3269 = vadd.f32 %v3173, %v3268
      %v3270 = vpop.f32.mrb[0].mxu0
      %3271 = vmatprep.mubr.bf16.mxu0 0
      %3272 = vmatmul.mubr.bf16.gmra.mrb[0].mxu0 %v3151
      %v3273 = vpop.f32.mrb[0].mxu0
      %v3274 = vadd.f32 %v3173, %v3273
      %v3275 = vpop.f32.mrb[0].mxu0
      %v3276 = vpop.f32.mrb[0].mxu0
      %v3277 = vadd.f32 %v3173, %v3276
      %v3278 = vpop.f32.mrb[0].mxu0
      %3279 = vdwg.mxu0
      %v3280 = vmul.f32 %v3258, 0.5
      %v3281 = vmul.f32 %v3261, 0.5
      %v3282 = vmul.f32 %v3266, 0.5
      %v3283 = vmul.f32 %v3269, 0.5
      %v3284 = vmul.f32 %v3274, 0.5
      %v3285 = vmul.f32 %v3277, 0.5
      %v3286 = vmul.f32 %v3258, 0.044715
      %v3287 = vmul.f32 %v3261, 0.044715
      %v3288 = vmul.f32 %v3266, 0.044715
      %v3289 = vmul.f32 %v3269, 0.044715
      %v3290 = vmul.f32 %v3274, 0.044715
      %v3291 = vmul.f32 %v3277, 0.044715
      %v3292 = vmul.f32 %v3286, %v3258
      %v3293 = vmul.f32 %v3287, %v3261
      %v3294 = vmul.f32 %v3288, %v3266
      %v3295 = vmul.f32 %v3289, %v3269
      %v3296 = vmul.f32 %v3290, %v3274
      %v3297 = vmul.f32 %v3291, %v3277
      %v3298 = vmul.f32 %v3292, %v3258
      %v3299 = vmul.f32 %v3293, %v3261
      %v3300 = vmul.f32 %v3294, %v3266
      %v3301 = vmul.f32 %v3295, %v3269
      %v3302 = vmul.f32 %v3296, %v3274
      %v3303 = vmul.f32 %v3297, %v3277
      %v3304 = vadd.f32 %v3258, %v3298
      %v3305 = vadd.f32 %v3261, %v3299
      %v3306 = vadd.f32 %v3266, %v3300
      %v3307 = vadd.f32 %v3269, %v3301
      %v3308 = vadd.f32 %v3274, %v3302
      %v3309 = vadd.f32 %v3277, %v3303
      %v3310 = vmul.f32 %v3304, 0.7978846
      %v3311 = vmul.f32 %v3305, 0.7978846
      %v3312 = vmul.f32 %v3306, 0.7978846
      %v3313 = vmul.f32 %v3307, 0.7978846
      %v3314 = vmul.f32 %v3308, 0.7978846
      %v3315 = vmul.f32 %v3309, 0.7978846
      %v3316 = vtanh.pop %v3310
      %v3317 = vtanh.pop %v3311
      %v3318 = vtanh.pop %v3312
      %v3319 = vtanh.pop %v3313
      %v3320 = vtanh.pop %v3314
      %v3321 = vtanh.pop %v3315
      %v3322 = vadd.f32 %v3316, 1.0
      %v3323 = vadd.f32 %v3317, 1.0
      %v3324 = vadd.f32 %v3318, 1.0
      %v3325 = vadd.f32 %v3319, 1.0
      %v3326 = vadd.f32 %v3320, 1.0
      %v3327 = vadd.f32 %v3321, 1.0
      %v3328 = vmul.f32 %v3280, %v3322
      %v3329 = vmul.f32 %v3281, %v3323
      %v3330 = vmul.f32 %v3282, %v3324
      %v3331 = vmul.f32 %v3283, %v3325
      %v3332 = vmul.f32 %v3284, %v3326
      %v3333 = vmul.f32 %v3285, %v3327
      %v3334 = vpack.c.bf16 %v3329, %v3328
      %v3335 = vpack.c.bf16 %v3331, %v3330
      %v3336 = vpack.c.bf16 %v3333, %v3332
      %v3337 = vld [vmem:[%s1423] sm:$0xf]
      %v3338 = vld [vmem:[%s1423 + $0x4] sm:$0xf]
      %v3339 = vld [vmem:[%s1423 + $0x8] sm:$0xf]
      %v3340 = vld [vmem:[%s1423 + $0xc] sm:$0xf]
      %v3341 = vld [vmem:[%s1423 + $0x10] sm:$0xf]
      %v3342 = vld [vmem:[%s1423 + $0x14] sm:$0xf]
      %v3343 = vld [vmem:[%s1423 + $0x18] sm:$0xf]
      %v3344 = vld [vmem:[%s1423 + $0x1c] sm:$0xf]
      %v3345 = vld [vmem:[%s1423 + $0x20] sm:$0xf]
      %v3346 = vld [vmem:[%s1423 + $0x24] sm:$0xf]
      %v3347 = vld [vmem:[%s1423 + $0x28] sm:$0xf]
      %v3348 = vld [vmem:[%s1423 + $0x2c] sm:$0xf]
      %v3349 = vld [vmem:[%s1423 + $0x30] sm:$0xf]
      %v3350 = vld [vmem:[%s1423 + $0x34] sm:$0xf]
      %v3351 = vld [vmem:[%s1423 + $0x38] sm:$0xf]
      %v3352 = vld [vmem:[%s1423 + $0x3c] sm:$0xf]
      %v3369 = vunpack.c.l.b16 %v3337
      %v3370 = vunpack.c.l.b16 %v3338
      %v3371 = vunpack.c.l.b16 %v3339
      %v3372 = vunpack.c.l.b16 %v3340
      %v3373 = vunpack.c.l.b16 %v3341
      %v3374 = vunpack.c.l.b16 %v3342
      %v3375 = vunpack.c.l.b16 %v3343
      %v3376 = vunpack.c.l.b16 %v3344
      %v3377 = vunpack.c.l.b16 %v3345
      %v3378 = vunpack.c.l.b16 %v3346
      %v3379 = vunpack.c.l.b16 %v3347
      %v3380 = vunpack.c.l.b16 %v3348
      %v3381 = vunpack.c.l.b16 %v3349
      %v3382 = vunpack.c.l.b16 %v3350
      %v3383 = vunpack.c.l.b16 %v3351
      %v3384 = vunpack.c.l.b16 %v3352
      %v3385 = vpack.c.b16 %v3370, %v3369
      %v3386 = vpack.c.b16 %v3372, %v3371
      %v3387 = vpack.c.b16 %v3374, %v3373
      %v3388 = vpack.c.b16 %v3376, %v3375
      %v3389 = vpack.c.b16 %v3378, %v3377
      %v3390 = vpack.c.b16 %v3380, %v3379
      %v3391 = vpack.c.b16 %v3382, %v3381
      %v3392 = vpack.c.b16 %v3384, %v3383
      %3401 = vmatprep.subr.bf16.mxu0 0
      %3402 = vmatpush1.bf16.msra.mxu0 %v3385
      %3403 = vmatprep.subr.bf16.mxu0 0
      %3404 = vmatpush1.bf16.msra.mxu0 %v3386
      %3405 = vmatprep.subr.bf16.mxu0 0
      %3406 = vmatpush1.bf16.msra.mxu0 %v3387
      %3407 = vmatprep.subr.bf16.mxu0 0
      %3408 = vmatpush1.bf16.msra.mxu0 %v3388
      %3409 = vmatprep.subr.bf16.mxu0 0
      %3410 = vmatpush1.bf16.msra.mxu0 %v3389
      %3411 = vmatprep.subr.bf16.mxu0 0
      %3412 = vmatpush1.bf16.msra.mxu0 %v3390
      %3413 = vmatprep.subr.bf16.mxu0 0
      %3414 = vmatpush1.bf16.msra.mxu0 %v3391
      %3415 = vmatprep.subr.bf16.mxu0 0
      %3416 = vmatpush1.bf16.msra.mxu0 %v3392
      %3417 = vmatprep.subr.bf16.mxu0 0
      %3418 = vmatpush1.bf16.msra.mxu0 0
      %3419 = vmatprep.subr.bf16.mxu0 0
      %3420 = vmatpush1.bf16.msra.mxu0 0
      %3421 = vmatprep.subr.bf16.mxu0 0
      %3422 = vmatpush1.bf16.msra.mxu0 0
      %3423 = vmatprep.subr.bf16.mxu0 0
      %3424 = vmatpush1.bf16.msra.mxu0 0
      %3425 = vmatprep.subr.bf16.mxu0 0
      %3426 = vmatpush1.bf16.msra.mxu0 0
      %3427 = vmatprep.subr.bf16.mxu0 0
      %3428 = vmatpush1.bf16.msra.mxu0 0
      %3429 = vmatprep.subr.bf16.mxu0 0
      %3430 = vmatpush1.bf16.msra.mxu0 0
      %3431 = vmatprep.subr.bf16.mxu0 0
      %3432 = vmatpush1.bf16.msra.mxu0 0
      %3433 = vmatprep.mubr.bf16.mxu0 0
      %3434 = vmatmul.mubr.bf16.gmra.mrb[0].mxu0 %v3334
      %v3435 = vpop.f32.mrb[0].mxu0
      %v3436 = vadd.f32 0.0, %v3435
      %v3437 = vpop.f32.mrb[0].mxu0
      %v3438 = vpop.f32.mrb[0].mxu0
      %v3439 = vadd.f32 0.0, %v3438
      %v3440 = vpop.f32.mrb[0].mxu0
      %3441 = vmatprep.mubr.bf16.mxu0 0
      %3442 = vmatmul.mubr.bf16.gmra.mrb[0].mxu0 %v3335
      %v3443 = vpop.f32.mrb[0].mxu0
      %v3444 = vadd.f32 0.0, %v3443
      %v3445 = vpop.f32.mrb[0].mxu0
      %v3446 = vpop.f32.mrb[0].mxu0
      %v3447 = vadd.f32 0.0, %v3446
      %v3448 = vpop.f32.mrb[0].mxu0
      %3449 = vmatprep.mubr.bf16.mxu0 0
      %3450 = vmatmul.mubr.bf16.gmra.mrb[0].mxu0 %v3336
      %v3451 = vpop.f32.mrb[0].mxu0
      %v3452 = vadd.f32 0.0, %v3451
      %v3453 = vpop.f32.mrb[0].mxu0
      %v3454 = vpop.f32.mrb[0].mxu0
      %v3455 = vadd.f32 0.0, %v3454
      %v3456 = vpop.f32.mrb[0].mxu0
      %3457 = vdwg.mxu0
      %v3458 = vadd.f32 %v3039, %v3436
      %v3459 = vadd.f32 %v3040, %v3439
      %v3460 = vadd.f32 %v3041, %v3444
      %v3461 = vadd.f32 %v3042, %v3447
      %v3462 = vadd.f32 %v3043, %v3452
      %v3463 = vadd.f32 %v3044, %v3455
      %v3464 = vld [vmem:[%s1426] sm:$0x1]
      %v3466 = vlaneseq
      %v3467 = vshrl.u32 %v3466, 7
      %v3468 = vsub.s32 0, %v3467
      %v3469 = vrot.slane %v3464, %v3468
      %v3471 = vadd.f32 %v3458, %v3469
      %v3472 = vadd.f32 %v3459, %v3469
      %v3473 = vadd.f32 %v3460, %v3469
      %v3474 = vadd.f32 %v3461, %v3469
      %v3475 = vadd.f32 %v3462, %v3469
      %v3476 = vadd.f32 %v3463, %v3469
      %3477 = vst [vmem:[#allocation2] sm:$0xff] %v3471
      %3478 = vst [vmem:[#allocation2 + $0x8] sm:$0xff] %v3472
      %3479 = vst [vmem:[#allocation2 + $0x10] sm:$0xff] %v3473
      %3480 = vst [vmem:[#allocation2 + $0x18] sm:$0xff] %v3474
      %3481 = vst [vmem:[#allocation2 + $0x20] sm:$0xff] %v3475
      %3482 = vst [vmem:[#allocation2 + $0x28] sm:$0xff] %v3476
      %p3483 = scmp.eq.s32.totalorder %s92, 1
      // Predicated region
      $region169: #{meta_dt_forward.1} parent=163 // pred_check
        %p3484 = pneg %p3483
      $region170: #{meta_dt_forward.1} parent=163 // pred_check_branch
        %3486 = sbr.rel (%p3484) target = $region172
      $region171: #{meta_dt_forward.1} parent=163 // pred_region
        %v3487 = vmul.f32 %v3475, %v1444
        %v3488 = vmul.f32 %v3476, %v1444
        %3489 = vadd.xlane.f32.xlu0 %v3487
        %v3490 = vpop.xlane.xlu0 %3489
        %3491 = vadd.xlane.f32.xlu0 %v3488
        %v3492 = vpop.xlane.xlu0 %3491
        %v3493 = vmul.f32 %v3490, 0.03125
        %v3494 = vmul.f32 %v3492, 0.03125
        %v3495 = vsub.f32 %v3487, %v3493
        %v3496 = vsub.f32 %v3488, %v3494
        %v3497 = vmul.f32 %v3495, %v1444
        %v3498 = vmul.f32 %v3496, %v1444
        %v3499 = vmul.f32 %v3497, %v3497
        %v3500 = vmul.f32 %v3498, %v3498
        %3501 = vadd.xlane.f32.xlu0 %v3499
        %v3502 = vpop.xlane.xlu0 %3501
        %3503 = vadd.xlane.f32.xlu0 %v3500
        %v3504 = vpop.xlane.xlu0 %3503
        %v3505 = vmul.f32 %v3502, 0.03125
        %v3506 = vmul.f32 %v3504, 0.03125
        %v3507 = vadd.f32 %v3505, 1e-05
        %v3508 = vadd.f32 %v3506, 1e-05
        %v3509 = vrsqrt.pop %v3507
        %v3510 = vrsqrt.pop %v3508
        %v3511 = vmul.f32 %v3497, %v3509
        %v3512 = vmul.f32 %v3498, %v3510
        %v3513 = vld [vmem:[%s61] sm:$0x1]
        %v3515 = vlaneseq
        %v3516 = vshrl.u32 %v3515, 7
        %v3517 = vsub.s32 0, %v3516
        %v3518 = vrot.slane %v3513, %v3517
        %v3520 = vmul.f32 %v3511, %v3518
        %v3521 = vmul.f32 %v3512, %v3518
        %v3522 = vld [vmem:[%s63] sm:$0x1]
        %v3524 = vlaneseq
        %v3525 = vshrl.u32 %v3524, 7
        %v3526 = vsub.s32 0, %v3525
        %v3527 = vrot.slane %v3522, %v3526
        %v3529 = vadd.f32 %v3520, %v3527
        %v3530 = vadd.f32 %v3521, %v3527
        %v3531 = vmul.f32 %v3473, %v1444
        %v3532 = vmul.f32 %v3474, %v1444
        %3533 = vadd.xlane.f32.xlu0 %v3531
        %v3534 = vpop.xlane.xlu0 %3533
        %3535 = vadd.xlane.f32.xlu0 %v3532
        %v3536 = vpop.xlane.xlu0 %3535
        %v3537 = vmul.f32 %v3534, 0.03125
        %v3538 = vmul.f32 %v3536, 0.03125
        %v3539 = vsub.f32 %v3531, %v3537
        %v3540 = vsub.f32 %v3532, %v3538
        %v3541 = vmul.f32 %v3539, %v1444
        %v3542 = vmul.f32 %v3540, %v1444
        %v3543 = vmul.f32 %v3541, %v3541
        %v3544 = vmul.f32 %v3542, %v3542
        %3545 = vadd.xlane.f32.xlu0 %v3543
        %v3546 = vpop.xlane.xlu0 %3545
        %3547 = vadd.xlane.f32.xlu0 %v3544
        %v3548 = vpop.xlane.xlu0 %3547
        %v3549 = vmul.f32 %v3546, 0.03125
        %v3550 = vmul.f32 %v3548, 0.03125
        %v3551 = vadd.f32 %v3549, 1e-05
        %v3552 = vadd.f32 %v3550, 1e-05
        %v3553 = vrsqrt.pop %v3551
        %v3554 = vrsqrt.pop %v3552
        %v3555 = vmul.f32 %v3541, %v3553
        %v3556 = vmul.f32 %v3542, %v3554
        %v3557 = vmul.f32 %v3555, %v3518
        %v3558 = vmul.f32 %v3556, %v3518
        %v3559 = vadd.f32 %v3557, %v3527
        %v3560 = vadd.f32 %v3558, %v3527
        %v3561 = vld [vmem:[%s65] sm:$0xff]
        %v3562 = vld [vmem:[%s65 + $0x8] sm:$0xff]
        %v3563 = vld [vmem:[%s65 + $0x10] sm:$0xff]
        %v3564 = vld [vmem:[%s65 + $0x18] sm:$0xff]
        %v3565 = vld [vmem:[%s65 + $0x20] sm:$0xff]
        %v3566 = vld [vmem:[%s65 + $0x28] sm:$0xff]
        %v3567 = vld [vmem:[%s65 + $0x30] sm:$0xff]
        %v3568 = vld [vmem:[%s65 + $0x38] sm:$0xff]
        %v3569 = vld [vmem:[%s65 + $0x40] sm:$0xff]
        %v3570 = vld [vmem:[%s65 + $0x48] sm:$0xff]
        %v3571 = vld [vmem:[%s65 + $0x50] sm:$0xff]
        %v3572 = vld [vmem:[%s65 + $0x58] sm:$0xff]
        %v3573 = vld [vmem:[%s65 + $0x60] sm:$0xff]
        %v3574 = vld [vmem:[%s65 + $0x68] sm:$0xff]
        %v3575 = vld [vmem:[%s65 + $0x70] sm:$0xff]
        %v3576 = vld [vmem:[%s65 + $0x78] sm:$0xff]
        %v3577 = vld [vmem:[%s67] sm:$0x1]
        %v3579 = vlaneseq
        %v3580 = vshrl.u32 %v3579, 7
        %v3581 = vsub.s32 0, %v3580
        %v3582 = vrot.slane %v3577, %v3581
        %3584 = vmatprep.subr.mxu0 0.0
        %3585 = vmatpush1.msra.mxu0 %v3561
        %3586 = vmatprep.subr.mxu0 0.0
        %3587 = vmatpush1.msra.mxu0 %v3562
        %3588 = vmatprep.subr.mxu0 0.0
        %3589 = vmatpush1.msra.mxu0 %v3563
        %3590 = vmatprep.subr.mxu0 0.0
        %3591 = vmatpush1.msra.mxu0 %v3564
        %3592 = vmatprep.subr.mxu0 0.0
        %3593 = vmatpush1.msra.mxu0 %v3565
        %3594 = vmatprep.subr.mxu0 0.0
        %3595 = vmatpush1.msra.mxu0 %v3566
        %3596 = vmatprep.subr.mxu0 0.0
        %3597 = vmatpush1.msra.mxu0 %v3567
        %3598 = vmatprep.subr.mxu0 0.0
        %3599 = vmatpush1.msra.mxu0 %v3568
        %3600 = vmatprep.subr.mxu0 0.0
        %3601 = vmatpush1.msra.mxu0 %v3569
        %3602 = vmatprep.subr.mxu0 0.0
        %3603 = vmatpush1.msra.mxu0 %v3570
        %3604 = vmatprep.subr.mxu0 0.0
        %3605 = vmatpush1.msra.mxu0 %v3571
        %3606 = vmatprep.subr.mxu0 0.0
        %3607 = vmatpush1.msra.mxu0 %v3572
        %3608 = vmatprep.subr.mxu0 0.0
        %3609 = vmatpush1.msra.mxu0 %v3573
        %3610 = vmatprep.subr.mxu0 0.0
        %3611 = vmatpush1.msra.mxu0 %v3574
        %3612 = vmatprep.subr.mxu0 0.0
        %3613 = vmatpush1.msra.mxu0 %v3575
        %3614 = vmatprep.subr.mxu0 0.0
        %3615 = vmatpush1.msra.mxu0 %v3576
        %3616 = vmatprep.subr.mxu0 0.0
        %3617 = vmatpush1.msra.mxu0 0.0
        %3618 = vmatprep.subr.mxu0 0.0
        %3619 = vmatpush1.msra.mxu0 0.0
        %3620 = vmatprep.subr.mxu0 0.0
        %3621 = vmatpush1.msra.mxu0 0.0
        %3622 = vmatprep.subr.mxu0 0.0
        %3623 = vmatpush1.msra.mxu0 0.0
        %3624 = vmatprep.subr.mxu0 0.0
        %3625 = vmatpush1.msra.mxu0 0.0
        %3626 = vmatprep.subr.mxu0 0.0
        %3627 = vmatpush1.msra.mxu0 0.0
        %3628 = vmatprep.subr.mxu0 0.0
        %3629 = vmatpush1.msra.mxu0 0.0
        %3630 = vmatprep.subr.mxu0 0.0
        %3631 = vmatpush1.msra.mxu0 0.0
        %3632 = vmatprep.subr.mxu0 0.0
        %3633 = vmatpush1.msra.mxu0 0.0
        %3634 = vmatprep.subr.mxu0 0.0
        %3635 = vmatpush1.msra.mxu0 0.0
        %3636 = vmatprep.subr.mxu0 0.0
        %3637 = vmatpush1.msra.mxu0 0.0
        %3638 = vmatprep.subr.mxu0 0.0
        %3639 = vmatpush1.msra.mxu0 0.0
        %3640 = vmatprep.subr.mxu0 0.0
        %3641 = vmatpush1.msra.mxu0 0.0
        %3642 = vmatprep.subr.mxu0 0.0
        %3643 = vmatpush1.msra.mxu0 0.0
        %3644 = vmatprep.subr.mxu0 0.0
        %3645 = vmatpush1.msra.mxu0 0.0
        %3646 = vmatprep.subr.mxu0 0.0
        %3647 = vmatpush1.msra.mxu0 0.0
        %3648 = vmatprep.mubr.f32.mxu0 0.0
        %3649 = vmatmul.mubr.f32.gmra.mrb[0].mxu0 %v3529
        %v3650 = vpop.f32.mrb[0].mxu0
        %v3651 = vadd.f32 %v3582, %v3650
        %v3652 = vpop.f32.mrb[0].mxu0
        %3653 = vmatprep.mubr.f32.mxu0 0.0
        %3654 = vmatmul.mubr.f32.gmra.mrb[0].mxu0 %v3530
        %v3655 = vpop.f32.mrb[0].mxu0
        %v3656 = vadd.f32 %v3582, %v3655
        %v3657 = vpop.f32.mrb[0].mxu0
        %3658 = vdwg.mxu0
        %3659 = vst [vmem:[%s1431] sm:$0xff] %v3651
        %3660 = vst [vmem:[%s1431 + $0x8] sm:$0xff] %v3656
        %v3661 = vld [vmem:[%s69] sm:$0xff]
        %v3662 = vld [vmem:[%s69 + $0x8] sm:$0xff]
        %v3663 = vld [vmem:[%s69 + $0x10] sm:$0xff]
        %v3664 = vld [vmem:[%s69 + $0x18] sm:$0xff]
        %v3665 = vld [vmem:[%s69 + $0x20] sm:$0xff]
        %v3666 = vld [vmem:[%s69 + $0x28] sm:$0xff]
        %v3667 = vld [vmem:[%s69 + $0x30] sm:$0xff]
        %v3668 = vld [vmem:[%s69 + $0x38] sm:$0xff]
        %v3669 = vld [vmem:[%s69 + $0x40] sm:$0xff]
        %v3670 = vld [vmem:[%s69 + $0x48] sm:$0xff]
        %v3671 = vld [vmem:[%s69 + $0x50] sm:$0xff]
        %v3672 = vld [vmem:[%s69 + $0x58] sm:$0xff]
        %v3673 = vld [vmem:[%s69 + $0x60] sm:$0xff]
        %v3674 = vld [vmem:[%s69 + $0x68] sm:$0xff]
        %v3675 = vld [vmem:[%s69 + $0x70] sm:$0xff]
        %v3676 = vld [vmem:[%s69 + $0x78] sm:$0xff]
        %v3677 = vld [vmem:[%s71] sm:$0x1]
        %v3679 = vlaneseq
        %v3680 = vshrl.u32 %v3679, 7
        %v3681 = vsub.s32 0, %v3680
        %v3682 = vrot.slane %v3677, %v3681
        %3684 = vmatprep.subr.mxu0 0.0
        %3685 = vmatpush1.msra.mxu0 %v3661
        %3686 = vmatprep.subr.mxu0 0.0
        %3687 = vmatpush1.msra.mxu0 %v3662
        %3688 = vmatprep.subr.mxu0 0.0
        %3689 = vmatpush1.msra.mxu0 %v3663
        %3690 = vmatprep.subr.mxu0 0.0
        %3691 = vmatpush1.msra.mxu0 %v3664
        %3692 = vmatprep.subr.mxu0 0.0
        %3693 = vmatpush1.msra.mxu0 %v3665
        %3694 = vmatprep.subr.mxu0 0.0
        %3695 = vmatpush1.msra.mxu0 %v3666
        %3696 = vmatprep.subr.mxu0 0.0
        %3697 = vmatpush1.msra.mxu0 %v3667
        %3698 = vmatprep.subr.mxu0 0.0
        %3699 = vmatpush1.msra.mxu0 %v3668
        %3700 = vmatprep.subr.mxu0 0.0
        %3701 = vmatpush1.msra.mxu0 %v3669
        %3702 = vmatprep.subr.mxu0 0.0
        %3703 = vmatpush1.msra.mxu0 %v3670
        %3704 = vmatprep.subr.mxu0 0.0
        %3705 = vmatpush1.msra.mxu0 %v3671
        %3706 = vmatprep.subr.mxu0 0.0
        %3707 = vmatpush1.msra.mxu0 %v3672
        %3708 = vmatprep.subr.mxu0 0.0
        %3709 = vmatpush1.msra.mxu0 %v3673
        %3710 = vmatprep.subr.mxu0 0.0
        %3711 = vmatpush1.msra.mxu0 %v3674
        %3712 = vmatprep.subr.mxu0 0.0
        %3713 = vmatpush1.msra.mxu0 %v3675
        %3714 = vmatprep.subr.mxu0 0.0
        %3715 = vmatpush1.msra.mxu0 %v3676
        %3716 = vmatprep.subr.mxu0 0.0
        %3717 = vmatpush1.msra.mxu0 0.0
        %3718 = vmatprep.subr.mxu0 0.0
        %3719 = vmatpush1.msra.mxu0 0.0
        %3720 = vmatprep.subr.mxu0 0.0
        %3721 = vmatpush1.msra.mxu0 0.0
        %3722 = vmatprep.subr.mxu0 0.0
        %3723 = vmatpush1.msra.mxu0 0.0
        %3724 = vmatprep.subr.mxu0 0.0
        %3725 = vmatpush1.msra.mxu0 0.0
        %3726 = vmatprep.subr.mxu0 0.0
        %3727 = vmatpush1.msra.mxu0 0.0
        %3728 = vmatprep.subr.mxu0 0.0
        %3729 = vmatpush1.msra.mxu0 0.0
        %3730 = vmatprep.subr.mxu0 0.0
        %3731 = vmatpush1.msra.mxu0 0.0
        %3732 = vmatprep.subr.mxu0 0.0
        %3733 = vmatpush1.msra.mxu0 0.0
        %3734 = vmatprep.subr.mxu0 0.0
        %3735 = vmatpush1.msra.mxu0 0.0
        %3736 = vmatprep.subr.mxu0 0.0
        %3737 = vmatpush1.msra.mxu0 0.0
        %3738 = vmatprep.subr.mxu0 0.0
        %3739 = vmatpush1.msra.mxu0 0.0
        %3740 = vmatprep.subr.mxu0 0.0
        %3741 = vmatpush1.msra.mxu0 0.0
        %3742 = vmatprep.subr.mxu0 0.0
        %3743 = vmatpush1.msra.mxu0 0.0
        %3744 = vmatprep.subr.mxu0 0.0
        %3745 = vmatpush1.msra.mxu0 0.0
        %3746 = vmatprep.subr.mxu0 0.0
        %3747 = vmatpush1.msra.mxu0 0.0
        %3748 = vmatprep.mubr.f32.mxu0 0.0
        %3749 = vmatmul.mubr.f32.gmra.mrb[0].mxu0 %v3559
        %v3750 = vpop.f32.mrb[0].mxu0
        %v3751 = vadd.f32 %v3682, %v3750
        %v3752 = vpop.f32.mrb[0].mxu0
        %3753 = vmatprep.mubr.f32.mxu0 0.0
        %3754 = vmatmul.mubr.f32.gmra.mrb[0].mxu0 %v3560
        %v3755 = vpop.f32.mrb[0].mxu0
        %v3756 = vadd.f32 %v3682, %v3755
        %v3757 = vpop.f32.mrb[0].mxu0
        %3758 = vdwg.mxu0
        %v3759 = vtanh.pop %v3751
        %v3760 = vtanh.pop %v3756
        %3761 = vst [vmem:[%s1437] sm:$0xff] %v3759
        %3762 = vst [vmem:[%s1437 + $0x8] sm:$0xff] %v3760
      $region172: #{meta_dt_forward.1} parent=163 // pred_fallthru
        _
      %s3763 = smul.u32 2, %s91
      %p3764 = scmp.lt.s32.totalorder %s3763, 1
      %s3765 = scalar_select %p3764, %s3763, 1
      %s3766 = smul.addr %s3765, 8
      %s3767 = scalar_lea.vmem %s73, %s3766
      %s3768 = smul.u32 2, %s91
      %p3769 = scmp.lt.s32.totalorder %s3768, 1
      %s3770 = scalar_select %p3769, %s3768, 1
      %s3771 = smul.addr %s3770, 8
      %s3772 = scalar_lea.vmem %s75, %s3771
      // Predicated region
      $region173: #{meta_dt_forward.1} parent=163 // pred_check
        %p3773 = pneg %p958
      $region174: #{meta_dt_forward.1} parent=163 // pred_check_branch
        %3775 = sbr.rel (%p3773) target = $region176
      $region175: #{meta_dt_forward.1} parent=163 // pred_region
        %s3776 = smul.u32 2, %s91
      $region176: #{meta_dt_forward.1} parent=163 // pred_fallthru
        _
      // Predicated region
      $region177: #{meta_dt_forward.1} parent=163 // pred_check
        %p3777 = pneg %p984
      $region178: #{meta_dt_forward.1} parent=163 // pred_check_branch
        %3779 = sbr.rel (%p3777) target = $region180
      $region179: #{meta_dt_forward.1} parent=163 // pred_region
        %s3780 = smul.u32 2, %s91
      $region180: #{meta_dt_forward.1} parent=163 // pred_fallthru
        _
      // Predicated region
      $region181: #{meta_dt_forward.1} parent=163 // pred_check
        %p3781 = pneg %p958
      $region182: #{meta_dt_forward.1} parent=163 // pred_check_branch
        %3783 = sbr.rel (%p3781) target = $region184
      $region183: #{meta_dt_forward.1} parent=163 // pred_region
        %s3784 = smul.u32 2, %s91
        %p3785 = scmp.lt.s32.totalorder %s3784, 1
        %s3786 = scalar_select %p3785, %s3784, 1
        %s3787 = smul.addr %s3786, 8
        %s3788 = scalar_lea.vmem %s73, %s3787
      $region184: #{meta_dt_forward.1} parent=163 // pred_fallthru
        _
      // Predicated region
      $region185: #{meta_dt_forward.1} parent=163 // pred_check
        %p3789 = pneg %p984
      $region186: #{meta_dt_forward.1} parent=163 // pred_check_branch
        %3791 = sbr.rel (%p3789) target = $region188
      $region187: #{meta_dt_forward.1} parent=163 // pred_region
        %s3792 = smul.u32 2, %s91
        %p3793 = scmp.lt.s32.totalorder %s3792, 1
        %s3794 = scalar_select %p3793, %s3792, 1
        %s3795 = smul.addr %s3794, 8
        %s3796 = scalar_lea.vmem %s75, %s3795
      $region188: #{meta_dt_forward.1} parent=163 // pred_fallthru
        _
    $region164: #{meta_dt_forward.1} parent=5 // pred_fallthru
      _
    %p3797 = scmp.le.s32.totalorder 2, %s82
    // Predicated region
    $region189: #{meta_dt_forward.1} parent=5 // pred_check
      %p3798 = pneg %p3797
    $region190: #{meta_dt_forward.1} parent=5 // pred_check_branch
      %3800 = sbr.rel (%p3798) target = $region192
    $region191: #{meta_dt_forward.1} parent=5 // pred_region
      %s3801 = ssub.s32 %s82, 2
    $region192: #{meta_dt_forward.1} parent=5 // pred_fallthru
      _
  $region6: #{meta_dt_forward.1} parent=0 // loop_footer
    %s86 = sadd.s32 1, %s82
  $region7: #{meta_dt_forward.1} parent=0 // loop_footer_branch
    %81 = sbr.rel target = $region3
  $region8: #{meta_dt_forward.1} parent=0 // loop_exit
    _

</llo_original>
